<compile_context>
chip_gen: v5e
topology: v5e:2x2
jax: 0.10.0
libtpu: 0.0.40
codegen_flags: <defaults>
</compile_context>

<pallas_src>
import jax
import jax.numpy as jnp
import numpy as np
from jax.experimental import pallas as pl
from jax.experimental.pallas import tpu as pltpu

EPS = 1e-5
# MXU operand dtype.  float32 keeps parity with the fp32 PyTorch reference; set
# to jnp.bfloat16 on v6e/v7x for the fast MXU path (accumulation stays fp32 via
# preferred_element_type).
MXU_DTYPE = jnp.float32
VMEM_LIMIT_BYTES = 32 * 1024 * 1024      # explicit scoped-VMEM budget (safe v5e..v7x)
TILE_VMEM_BUDGET = 8 * 1024 * 1024       # target footprint for pipelined row tiles


# ------------------------------ helpers -------------------------------------

def _round_up(x, m):
    return (x + m - 1) // m * m


def _pick_tm(M, row_bytes):
    """Largest multiple-of-8 divisor of M whose pipelined tiles fit the budget."""
    if M % 8 != 0:
        return M                                   # degenerate: one full block
    cap = min(M, max(8, (TILE_VMEM_BUDGET // max(row_bytes, 1)) // 8 * 8))
    best, t = 8, 8
    while t <= cap:
        if M % t == 0:
            best = t
        t += 8
    return best


def _shift_rows(f, k):
    """y[q] = f[(q + k) mod n] for static k (cyclic row shift along sublanes).

    Wrapped rows only land on positions that read zero padding or on output
    columns that are discarded, so the wrap-around is harmless."""
    if k == 0:
        return f
    return jnp.concatenate([f[k:], f[:k]], axis=0)


# --------------------------- Pallas kernels ---------------------------------

def _conv1x1_stats_kernel(x_ref, w_ref, o_ref, sum_ref, sq_ref):
    """1x1 conv (= matmul over channels) + fused per-channel sum / sum-of-squares."""
    @pl.when(pl.program_id(0) == 0)
    def _():
        sum_ref[...] = jnp.zeros_like(sum_ref)
        sq_ref[...] = jnp.zeros_like(sq_ref)

    y = jnp.dot(x_ref[...].astype(MXU_DTYPE), w_ref[...].astype(MXU_DTYPE),
                preferred_element_type=jnp.float32)
    o_ref[...] = y
    sum_ref[...] += jnp.sum(y, axis=0, keepdims=True)
    sq_ref[...] += jnp.sum(y * y, axis=0, keepdims=True)


def _bn_relu_conv1x1_stats_kernel(x_ref, scale_ref, shift_ref, w_ref,
                                  o_ref, sum_ref, sq_ref):
    """Previous BN (scale/shift) + ReLU fused on the input tile, then 1x1 conv,
    emitting the next BN's per-channel stats as extra outputs."""
    @pl.when(pl.program_id(0) == 0)
    def _():
        sum_ref[...] = jnp.zeros_like(sum_ref)
        sq_ref[...] = jnp.zeros_like(sq_ref)

    xn = jnp.maximum(x_ref[...] * scale_ref[...] + shift_ref[...], 0.0)
    y = jnp.dot(xn.astype(MXU_DTYPE), w_ref[...].astype(MXU_DTYPE),
                preferred_element_type=jnp.float32)
    o_ref[...] = y
    sum_ref[...] += jnp.sum(y, axis=0, keepdims=True)
    sq_ref[...] += jnp.sum(y * y, axis=0, keepdims=True)


def _bn_relu_conv3x3_stats_kernel(x_ref, scale_ref, shift_ref, w_ref,
                                  o_ref, sum_ref, sq_ref, xp_ref):
    """3x3 'same' conv, stride 1, with:
       * previous BN + ReLU fused on the input tile,
       * zero padding built in a VMEM scratch (no HBM-side jnp.pad round trip),
       * only 3 MXU matmuls per tile: the weight's three dx tap columns are
         pre-stacked along the output axis (Cin, 3*Cout) in the wrapper, so for
         each dy we do one wide matmul over the 8-aligned flattened row band,
         then combine the three column-slices with two cyclic row shifts
         (better MXU N-dim utilisation than 9 narrow matmuls, fewer issues),
       * the next BN's per-channel stats emitted as extra (1, C) outputs.

    Scratch layout: xp_ref is (H+2, Wp, Cin) with Wp = round_up(W+1, 8); the
    bn+relu'd interior lives at rows [1, H], columns [0, W); everything else is
    zero, so flattened-band reads see the left pad as the previous row's right
    pad and the top/bottom pads as whole zero rows."""
    _, H, W, Cout = o_ref.shape
    Cin = x_ref.shape[-1]
    _, Wp, _ = xp_ref.shape
    nrows = H * Wp

    @pl.when(pl.program_id(0) == 0)
    def _():
        sum_ref[...] = jnp.zeros_like(sum_ref)
        sq_ref[...] = jnp.zeros_like(sq_ref)
        xp_ref[...] = jnp.zeros_like(xp_ref)       # halo stays zero afterwards

    # fused bn + ReLU on this batch element's tile -> interior of the scratch
    xn = jnp.maximum(x_ref[0] * scale_ref[...] + shift_ref[...], 0.0)
    xp_ref[1:H + 1, 0:W, :] = xn

    # One matmul per dy over the flattened band; output columns hold the three
    # dx tap results side by side: [left | center | right].
    acc3 = jnp.zeros((nrows, 3 * Cout), jnp.float32)
    for dy in range(3):
        band = xp_ref[dy:dy + H].reshape(nrows, Cin).astype(MXU_DTYPE)
        acc3 += jnp.dot(band, w_ref[dy].astype(MXU_DTYPE),
                        preferred_element_type=jnp.float32)

    # dx=0 (left tap) needs y[q] += f[q-1]; dx=1 is in place; dx=2 needs f[q+1].
    acc_l = acc3[:, 0:Cout]
    acc_c = acc3[:, Cout:2 * Cout]
    acc_r = acc3[:, 2 * Cout:3 * Cout]
    acc = acc_c + _shift_rows(acc_l, -1) + _shift_rows(acc_r, 1)

    out = acc.reshape(H, Wp, Cout)[:, 0:W, :]       # drop the padded columns
    o_ref[0] = out
    sum_ref[...] += jnp.sum(jnp.sum(out, axis=0), axis=0, keepdims=True)
    sq_ref[...] += jnp.sum(jnp.sum(out * out, axis=0), axis=0, keepdims=True)


def _bn_add_relu_kernel(x_ref, scale_ref, shift_ref, res_ref, o_ref):
    o_ref[...] = jnp.maximum(
        x_ref[...] * scale_ref[...] + shift_ref[...] + res_ref[...], 0.0)


# ------------------------------ wrappers -------------------------------------

def conv1x1_stats(x2d, w, fuse_bn=None):
    """y = (bn_relu(x) if fuse_bn else x) @ w, plus per-channel sum / sumsq of y.

    x2d: (M, Cin); w: (Cin, Cout); fuse_bn: optional (scale, shift), each (1, Cin)."""
    M, Cin = x2d.shape
    Cout = w.shape[1]
    tm = _pick_tm(M, row_bytes=2 * 4 * (Cin + Cout))   # double-buffered in+out rows
    grid = (M // tm,)

    act_spec = pl.BlockSpec((tm, Cin), lambda i: (i, 0))
    w_spec = pl.BlockSpec((Cin, Cout), lambda i: (0, 0))

    def chan_spec(c):
        return pl.BlockSpec((1, c), lambda i: (0, 0))

    if fuse_bn is None:
        kernel = _conv1x1_stats_kernel
        in_specs = [act_spec, w_spec]
        args = (x2d, w)
    else:
        scale, shift = fuse_bn
        kernel = _bn_relu_conv1x1_stats_kernel
        in_specs = [act_spec, chan_spec(Cin), chan_spec(Cin), w_spec]
        args = (x2d, scale, shift, w)

    return pl.pallas_call(
        kernel,
        out_shape=(jax.ShapeDtypeStruct((M, Cout), jnp.float32),
                   jax.ShapeDtypeStruct((1, Cout), jnp.float32),
                   jax.ShapeDtypeStruct((1, Cout), jnp.float32)),
        grid_spec=pltpu.PrefetchScalarGridSpec(
            num_scalar_prefetch=0, grid=grid,
            in_specs=in_specs,
            out_specs=[pl.BlockSpec((tm, Cout), lambda i: (i, 0)),
                       chan_spec(Cout), chan_spec(Cout)]),
        compiler_params=pltpu.CompilerParams(
            # the (1, C) stats outputs accumulate across the grid -> sequential
            dimension_semantics=("arbitrary",),
            vmem_limit_bytes=VMEM_LIMIT_BYTES),
    )(*args)


def bn_relu_conv3x3_stats(x_nhwc, scale, shift, w_hwio):
    """Fused bn+ReLU -> 3x3 'same' conv (stride 1), plus per-channel stats of
    the conv output.  x: (N,H,W,Cin); scale/shift: (1,Cin); w: (3,3,Cin,Cout)."""
    N, H, W, Cin = x_nhwc.shape
    Cout = w_hwio.shape[-1]
    Wp = _round_up(W + 1, 8)
    # Stack the three dx tap columns along the output axis once (XLA side):
    # w_stk[dy] = [w[dy,0] | w[dy,1] | w[dy,2]]  -> (3, Cin, 3*Cout)
    w_stk = jnp.concatenate([w_hwio[:, 0], w_hwio[:, 1], w_hwio[:, 2]], axis=-1)
    # TODO(synk): tile over H (with a 1-row halo) for large images so the grid
    # pipelines DMA behind compute and can shard across both v7x TensorCores.
    return pl.pallas_call(
        _bn_relu_conv3x3_stats_kernel,
        out_shape=(jax.ShapeDtypeStruct((N, H, W, Cout), jnp.float32),
                   jax.ShapeDtypeStruct((1, Cout), jnp.float32),
                   jax.ShapeDtypeStruct((1, Cout), jnp.float32)),
        grid_spec=pltpu.PrefetchScalarGridSpec(
            num_scalar_prefetch=0, grid=(N,),
            in_specs=[pl.BlockSpec((1, H, W, Cin), lambda n: (n, 0, 0, 0)),
                      pl.BlockSpec((1, Cin), lambda n: (0, 0)),
                      pl.BlockSpec((1, Cin), lambda n: (0, 0)),
                      pl.BlockSpec((3, Cin, 3 * Cout), lambda n: (0, 0, 0))],
            out_specs=[pl.BlockSpec((1, H, W, Cout), lambda n: (n, 0, 0, 0)),
                       pl.BlockSpec((1, Cout), lambda n: (0, 0)),
                       pl.BlockSpec((1, Cout), lambda n: (0, 0))],
            scratch_shapes=[pltpu.VMEM((H + 2, Wp, Cin), jnp.float32)]),
        compiler_params=pltpu.CompilerParams(
            dimension_semantics=("arbitrary",),
            vmem_limit_bytes=VMEM_LIMIT_BYTES),
    )(x_nhwc, scale, shift, w_stk)


def bn_add_relu(x2d, scale, shift, residual):
    """Final bn3 normalize + residual add + ReLU."""
    M, C = x2d.shape
    tm = _pick_tm(M, row_bytes=2 * 4 * 3 * C)      # x + residual + out rows
    return pl.pallas_call(
        _bn_add_relu_kernel,
        out_shape=jax.ShapeDtypeStruct((M, C), jnp.float32),
        grid_spec=pltpu.PrefetchScalarGridSpec(
            num_scalar_prefetch=0, grid=(M // tm,),
            in_specs=[pl.BlockSpec((tm, C), lambda i: (i, 0)),
                      pl.BlockSpec((1, C), lambda i: (0, 0)),
                      pl.BlockSpec((1, C), lambda i: (0, 0)),
                      pl.BlockSpec((tm, C), lambda i: (i, 0))],
            out_specs=pl.BlockSpec((tm, C), lambda i: (i, 0))),
        compiler_params=pltpu.CompilerParams(
            dimension_semantics=("parallel",),
            vmem_limit_bytes=VMEM_LIMIT_BYTES),
    )(x2d, scale, shift, residual)


def _scale_shift(s, sq, gamma, beta, count):
    """Per-channel scale/shift from accumulated sum / sum-of-squares
    (training-mode BatchNorm: biased variance, eps=1e-5)."""
    mean = s / count
    # TODO(synk): E[x^2]-E[x]^2 in f32 can cancel for very large, shifted
    # activations; a Welford/two-pass reduction would be more robust at scale.
    var = sq / count - mean * mean
    scale = gamma / jnp.sqrt(var + EPS)
    shift = beta - mean * scale
    return scale, shift


# ------------------------------ block forward -------------------------------

def block_forward(x_nchw, p):
    """ResNet-50 bottleneck block forward (identity_downsample=None, stride=1)."""
    N, Cin, H, W = x_nchw.shape
    x = jnp.transpose(x_nchw, (0, 2, 3, 1)).astype(jnp.float32)     # NCHW -> NHWC
    M = N * H * W
    identity = x.reshape(M, Cin)

    cmid = p["w1"].shape[1]
    cout = p["w3"].shape[1]

    # conv1 (1x1) + bn1 stats
    y1, s1, q1 = conv1x1_stats(identity, p["w1"])
    sc1, sh1 = _scale_shift(s1, q1, p["g1"], p["b1"], M)

    # bn1+ReLU fused into conv2 (3x3, pad=1) + bn2 stats
    y2, s2, q2 = bn_relu_conv3x3_stats(y1.reshape(N, H, W, cmid), sc1, sh1, p["w2"])
    sc2, sh2 = _scale_shift(s2, q2, p["g2"], p["b2"], M)

    # bn2+ReLU fused into conv3 (1x1) + bn3 stats
    y3, s3, q3 = conv1x1_stats(y2.reshape(M, cmid), p["w3"], fuse_bn=(sc2, sh2))
    sc3, sh3 = _scale_shift(s3, q3, p["g3"], p["b3"], M)

    # bn3 + residual add + ReLU
    # TODO(synk): stride>1 / identity_downsample path not implemented; this
    # block config (None, stride=1) requires Cin == 4*Cmid.
    y = bn_add_relu(y3, sc3, sh3, identity)

    return jnp.transpose(y.reshape(N, H, W, cout), (0, 3, 1, 2))    # NHWC -> NCHW


def init_params(key, in_channels, intermediate_channels):
    expansion = 4
    cmid = intermediate_channels
    cout = cmid * expansion
    assert in_channels == cout, "identity_downsample=None needs Cin == 4*Cmid"
    ks = jax.random.split(key, 9)

    def nrm(k, shape, fan_in):
        return jax.random.normal(k, shape, jnp.float32) / np.sqrt(fan_in)

    return {
        "w1": nrm(ks[0], (in_channels, cmid), in_channels),   # 1x1: (Cin, Cmid)
        "w2": nrm(ks[1], (3, 3, cmid, cmid), 9 * cmid),       # 3x3: HWIO
        "w3": nrm(ks[2], (cmid, cout), cmid),                 # 1x1: (Cmid, Cout)
        "g1": 1.0 + 0.1 * jax.random.normal(ks[3], (1, cmid), jnp.float32),
        "b1": 0.1 * jax.random.normal(ks[4], (1, cmid), jnp.float32),
        "g2": 1.0 + 0.1 * jax.random.normal(ks[5], (1, cmid), jnp.float32),
        "b2": 0.1 * jax.random.normal(ks[6], (1, cmid), jnp.float32),
        "g3": 1.0 + 0.1 * jax.random.normal(ks[7], (1, cout), jnp.float32),
        "b3": 0.1 * jax.random.normal(ks[8], (1, cout), jnp.float32),
    }


# pure-JAX reference for correctness check
def ref_forward(x_nchw, p):
    x = jnp.transpose(x_nchw, (0, 2, 3, 1)).astype(jnp.float32)

    def bn_relu(y, g, b, res=None):
        m = y.mean(axis=(0, 1, 2))
        v = y.var(axis=(0, 1, 2))
        y = (y - m) / jnp.sqrt(v + EPS) * g.reshape(-1) + b.reshape(-1)
        if res is not None:
            y = y + res
        return jnp.maximum(y, 0.0)

    y = jnp.einsum("nhwc,cd->nhwd", x, p["w1"])
    y = bn_relu(y, p["g1"], p["b1"])
    y = jax.lax.conv_general_dilated(y, p["w2"], (1, 1), "SAME",
                                     dimension_numbers=("NHWC", "HWIO", "NHWC"))
    y = bn_relu(y, p["g2"], p["b2"])
    y = jnp.einsum("nhwc,cd->nhwd", y, p["w3"])
    y = bn_relu(y, p["g3"], p["b3"], res=x)
    return jnp.transpose(y, (0, 3, 1, 2))


if __name__ == "__main__":
    key = jax.random.PRNGKey(0)
    k_x, k_p = jax.random.split(key)

    # intermediate_channels=4 => in/out channels = 4*4 = 16 (residual add valid)
    N, Cin, H, W = 2, 16, 16, 16
    intermediate_channels = 4

    x = jax.random.normal(k_x, (N, Cin, H, W), jnp.float32)
    params = init_params(k_p, Cin, intermediate_channels)

    out = jax.jit(block_forward)(x, params)
    out = jax.block_until_ready(out)

    ref = ref_forward(x, params)
    np.testing.assert_allclose(np.asarray(out), np.asarray(ref),
                               rtol=2e-3, atol=2e-3)
    assert out.shape == (N, Cin, H, W)
    print("KERNEL_OK")
</pallas_src>

<mosaic_0001>
module attributes {stable_mosaic.version = 11 : i64} {
  func.func @_bn_relu_conv1x1_stats_kernel(%arg0: i32, %arg1: memref<512x4xf32, #tpu.memory_space<vmem>>, %arg2: memref<1x4xf32, #tpu.memory_space<vmem>>, %arg3: memref<1x4xf32, #tpu.memory_space<vmem>>, %arg4: memref<4x16xf32, #tpu.memory_space<vmem>>, %arg5: memref<512x16xf32, #tpu.memory_space<vmem>>, %arg6: memref<1x16xf32, #tpu.memory_space<vmem>>, %arg7: memref<1x16xf32, #tpu.memory_space<vmem>>) attributes {dimension_semantics = [#tpu.dimension_semantics<arbitrary>], iteration_bounds = array<i64: 1>, scalar_prefetch = 0 : i64, scratch_operands = 0 : i64, tpu.core_type = #tpu.core_type<tc>, window_params = [{transform_indices = @transform_0, window_bounds = array<i64: 512, 4>}, {pipeline_mode = #tpu.pipeline_mode<synchronous>, transform_indices = @transform_1, window_bounds = array<i64: 1, 4>}, {pipeline_mode = #tpu.pipeline_mode<synchronous>, transform_indices = @transform_2, window_bounds = array<i64: 1, 4>}, {pipeline_mode = #tpu.pipeline_mode<synchronous>, transform_indices = @transform_3, window_bounds = array<i64: 4, 16>}, {transform_indices = @transform_4, window_bounds = array<i64: 512, 16>}, {pipeline_mode = #tpu.pipeline_mode<synchronous>, transform_indices = @transform_5, window_bounds = array<i64: 1, 16>}, {pipeline_mode = #tpu.pipeline_mode<synchronous>, transform_indices = @transform_6, window_bounds = array<i64: 1, 16>}]} {
    %c0_i32 = arith.constant 0 : i32
    %0 = arith.cmpi eq, %arg0, %c0_i32 : i32
    %1 = arith.extui %0 : i1 to i32
    %c0_i32_0 = arith.constant 0 : i32
    %2 = arith.cmpi ne, %1, %c0_i32_0 : i32
    scf.if %2 {
      %cst_21 = arith.constant 0.000000e+00 : f32
      %26 = vector.broadcast %cst_21 : f32 to vector<1x16xf32>
      %c0_22 = arith.constant 0 : index
      %c0_23 = arith.constant 0 : index
      %27 = vector.load %arg6[%c0_22, %c0_23] : memref<1x16xf32, #tpu.memory_space<vmem>>, vector<1x16xf32>
      tpu.vector_store %arg6[%c0_22, %c0_23], %26 {strides = array<i32>} : memref<1x16xf32, #tpu.memory_space<vmem>>, vector<1x16xf32>,
      %cst_24 = arith.constant 0.000000e+00 : f32
      %28 = vector.broadcast %cst_24 : f32 to vector<1x16xf32>
      %c0_25 = arith.constant 0 : index
      %c0_26 = arith.constant 0 : index
      %29 = vector.load %arg7[%c0_25, %c0_26] : memref<1x16xf32, #tpu.memory_space<vmem>>, vector<1x16xf32>
      tpu.vector_store %arg7[%c0_25, %c0_26], %28 {strides = array<i32>} : memref<1x16xf32, #tpu.memory_space<vmem>>, vector<1x16xf32>,
    } else {
    }
    %c0 = arith.constant 0 : index
    %c0_1 = arith.constant 0 : index
    %3 = vector.load %arg1[%c0, %c0_1] : memref<512x4xf32, #tpu.memory_space<vmem>>, vector<512x4xf32>
    %c0_2 = arith.constant 0 : index
    %c0_3 = arith.constant 0 : index
    %4 = vector.load %arg2[%c0_2, %c0_3] : memref<1x4xf32, #tpu.memory_space<vmem>>, vector<1x4xf32>
    %5 = vector.broadcast %4 : vector<1x4xf32> to vector<512x4xf32>
    %6 = arith.mulf %3, %5 : vector<512x4xf32>
    %c0_4 = arith.constant 0 : index
    %c0_5 = arith.constant 0 : index
    %7 = vector.load %arg3[%c0_4, %c0_5] : memref<1x4xf32, #tpu.memory_space<vmem>>, vector<1x4xf32>
    %8 = vector.broadcast %7 : vector<1x4xf32> to vector<512x4xf32>
    %9 = arith.addf %6, %8 : vector<512x4xf32>
    %cst = arith.constant 0.000000e+00 : f32
    %10 = vector.broadcast %cst : f32 to vector<512x4xf32>
    %11 = arith.maximumf %9, %10 : vector<512x4xf32>
    %c0_6 = arith.constant 0 : index
    %c0_7 = arith.constant 0 : index
    %12 = vector.load %arg4[%c0_6, %c0_7] : memref<4x16xf32, #tpu.memory_space<vmem>>, vector<4x16xf32>
    %cst_8 = arith.constant dense<0.000000e+00> : vector<512x16xf32>
    %13 = tpu.matmul %11, %12, %cst_8 {dimension_numbers = #tpu.dot_dimension_numbers<[1], [0], [0], [1], [0, 0, 1, 1], [], []>} : vector<512x4xf32>, vector<4x16xf32>, vector<512x16xf32> -> vector<512x16xf32>
    %c0_9 = arith.constant 0 : index
    %c0_10 = arith.constant 0 : index
    %14 = vector.load %arg5[%c0_9, %c0_10] : memref<512x16xf32, #tpu.memory_space<vmem>>, vector<512x16xf32>
    tpu.vector_store %arg5[%c0_9, %c0_10], %13 {strides = array<i32>} : memref<512x16xf32, #tpu.memory_space<vmem>>, vector<512x16xf32>,
    %c0_11 = arith.constant 0 : index
    %c0_12 = arith.constant 0 : index
    %15 = vector.load %arg6[%c0_11, %c0_12] : memref<1x16xf32, #tpu.memory_space<vmem>>, vector<1x16xf32>
    %cst_13 = arith.constant dense<0.000000e+00> : vector<16xf32>
    %16 = vector.multi_reduction <add>, %13, %cst_13 [0] : vector<512x16xf32> to vector<16xf32>
    %17 = vector.shape_cast %16 : vector<16xf32> to vector<1x16xf32>
    %18 = arith.addf %15, %17 : vector<1x16xf32>
    %c0_14 = arith.constant 0 : index
    %c0_15 = arith.constant 0 : index
    %19 = vector.load %arg6[%c0_14, %c0_15] : memref<1x16xf32, #tpu.memory_space<vmem>>, vector<1x16xf32>
    tpu.vector_store %arg6[%c0_14, %c0_15], %18 {strides = array<i32>} : memref<1x16xf32, #tpu.memory_space<vmem>>, vector<1x16xf32>,
    %c0_16 = arith.constant 0 : index
    %c0_17 = arith.constant 0 : index
    %20 = vector.load %arg7[%c0_16, %c0_17] : memref<1x16xf32, #tpu.memory_space<vmem>>, vector<1x16xf32>
    %21 = arith.mulf %13, %13 : vector<512x16xf32>
    %cst_18 = arith.constant dense<0.000000e+00> : vector<16xf32>
    %22 = vector.multi_reduction <add>, %21, %cst_18 [0] : vector<512x16xf32> to vector<16xf32>
    %23 = vector.shape_cast %22 : vector<16xf32> to vector<1x16xf32>
    %24 = arith.addf %20, %23 : vector<1x16xf32>
    %c0_19 = arith.constant 0 : index
    %c0_20 = arith.constant 0 : index
    %25 = vector.load %arg7[%c0_19, %c0_20] : memref<1x16xf32, #tpu.memory_space<vmem>>, vector<1x16xf32>
    tpu.vector_store %arg7[%c0_19, %c0_20], %24 {strides = array<i32>} : memref<1x16xf32, #tpu.memory_space<vmem>>, vector<1x16xf32>,
    return
  }
  func.func @transform_0(%arg0: i32) -> (i32, i32) {
    %c0_i32 = arith.constant 0 : i32
    %c0_i32_0 = arith.constant 0 : i32
    return %arg0, %c0_i32 : i32, i32
  }
  func.func @transform_1(%arg0: i32) -> (i32, i32) {
    %c0_i32 = arith.constant 0 : i32
    %c0_i32_0 = arith.constant 0 : i32
    %c0_i32_1 = arith.constant 0 : i32
    return %c0_i32, %c0_i32_0 : i32, i32
  }
  func.func @transform_2(%arg0: i32) -> (i32, i32) {
    %c0_i32 = arith.constant 0 : i32
    %c0_i32_0 = arith.constant 0 : i32
    %c0_i32_1 = arith.constant 0 : i32
    return %c0_i32, %c0_i32_0 : i32, i32
  }
  func.func @transform_3(%arg0: i32) -> (i32, i32) {
    %c0_i32 = arith.constant 0 : i32
    %c0_i32_0 = arith.constant 0 : i32
    %c0_i32_1 = arith.constant 0 : i32
    return %c0_i32, %c0_i32_0 : i32, i32
  }
  func.func @transform_4(%arg0: i32) -> (i32, i32) {
    %c0_i32 = arith.constant 0 : i32
    %c0_i32_0 = arith.constant 0 : i32
    return %arg0, %c0_i32 : i32, i32
  }
  func.func @transform_5(%arg0: i32) -> (i32, i32) {
    %c0_i32 = arith.constant 0 : i32
    %c0_i32_0 = arith.constant 0 : i32
    %c0_i32_1 = arith.constant 0 : i32
    return %c0_i32, %c0_i32_0 : i32, i32
  }
  func.func @transform_6(%arg0: i32) -> (i32, i32) {
    %c0_i32 = arith.constant 0 : i32
    %c0_i32_0 = arith.constant 0 : i32
    %c0_i32_1 = arith.constant 0 : i32
    return %c0_i32, %c0_i32_0 : i32, i32
  }
}

module attributes {stable_mosaic.version = 11 : i64} {
  func.func @_bn_relu_conv3x3_stats_kernel(%arg0: i32, %arg1: memref<1x16x16x4xf32, #tpu.memory_space<vmem>>, %arg2: memref<1x4xf32, #tpu.memory_space<vmem>>, %arg3: memref<1x4xf32, #tpu.memory_space<vmem>>, %arg4: memref<3x4x12xf32, #tpu.memory_space<vmem>>, %arg5: memref<1x16x16x4xf32, #tpu.memory_space<vmem>>, %arg6: memref<1x4xf32, #tpu.memory_space<vmem>>, %arg7: memref<1x4xf32, #tpu.memory_space<vmem>>, %arg8: memref<18x24x4xf32, #tpu.memory_space<vmem>>) attributes {dimension_semantics = [#tpu.dimension_semantics<arbitrary>], iteration_bounds = array<i64: 2>, scalar_prefetch = 0 : i64, scratch_operands = 1 : i64, tpu.core_type = #tpu.core_type<tc>, window_params = [{transform_indices = @transform_0, window_bounds = array<i64: 1, 16, 16, 4>}, {pipeline_mode = #tpu.pipeline_mode<synchronous>, transform_indices = @transform_1, window_bounds = array<i64: 1, 4>}, {pipeline_mode = #tpu.pipeline_mode<synchronous>, transform_indices = @transform_2, window_bounds = array<i64: 1, 4>}, {pipeline_mode = #tpu.pipeline_mode<synchronous>, transform_indices = @transform_3, window_bounds = array<i64: 3, 4, 12>}, {transform_indices = @transform_4, window_bounds = array<i64: 1, 16, 16, 4>}, {pipeline_mode = #tpu.pipeline_mode<synchronous>, transform_indices = @transform_5, window_bounds = array<i64: 1, 4>}, {pipeline_mode = #tpu.pipeline_mode<synchronous>, transform_indices = @transform_6, window_bounds = array<i64: 1, 4>}]} {
    %c0_i32 = arith.constant 0 : i32
    %0 = arith.cmpi eq, %arg0, %c0_i32 : i32
    %1 = arith.extui %0 : i1 to i32
    %c0_i32_0 = arith.constant 0 : i32
    %2 = arith.cmpi ne, %1, %c0_i32_0 : i32
    scf.if %2 {
      %cst_47 = arith.constant 0.000000e+00 : f32
      %64 = vector.broadcast %cst_47 : f32 to vector<1x4xf32>
      %c0_48 = arith.constant 0 : index
      %c0_49 = arith.constant 0 : index
      %65 = vector.load %arg6[%c0_48, %c0_49] : memref<1x4xf32, #tpu.memory_space<vmem>>, vector<1x4xf32>
      tpu.vector_store %arg6[%c0_48, %c0_49], %64 {strides = array<i32>} : memref<1x4xf32, #tpu.memory_space<vmem>>, vector<1x4xf32>,
      %cst_50 = arith.constant 0.000000e+00 : f32
      %66 = vector.broadcast %cst_50 : f32 to vector<1x4xf32>
      %c0_51 = arith.constant 0 : index
      %c0_52 = arith.constant 0 : index
      %67 = vector.load %arg7[%c0_51, %c0_52] : memref<1x4xf32, #tpu.memory_space<vmem>>, vector<1x4xf32>
      tpu.vector_store %arg7[%c0_51, %c0_52], %66 {strides = array<i32>} : memref<1x4xf32, #tpu.memory_space<vmem>>, vector<1x4xf32>,
      %cst_53 = arith.constant 0.000000e+00 : f32
      %68 = vector.broadcast %cst_53 : f32 to vector<18x24x4xf32>
      %c0_54 = arith.constant 0 : index
      %c0_55 = arith.constant 0 : index
      %c0_56 = arith.constant 0 : index
      %69 = vector.load %arg8[%c0_54, %c0_55, %c0_56] : memref<18x24x4xf32, #tpu.memory_space<vmem>>, vector<18x24x4xf32>
      tpu.vector_store %arg8[%c0_54, %c0_55, %c0_56], %68 {strides = array<i32>} : memref<18x24x4xf32, #tpu.memory_space<vmem>>, vector<18x24x4xf32>,
    } else {
    }
    %c0 = arith.constant 0 : index
    %c0_1 = arith.constant 0 : index
    %c0_2 = arith.constant 0 : index
    %c0_3 = arith.constant 0 : index
    %3 = vector.load %arg1[%c0, %c0_1, %c0_2, %c0_3] : memref<1x16x16x4xf32, #tpu.memory_space<vmem>>, vector<1x16x16x4xf32>
    %4 = vector.shape_cast %3 : vector<1x16x16x4xf32> to vector<16x16x4xf32>
    %c0_4 = arith.constant 0 : index
    %c0_5 = arith.constant 0 : index
    %5 = vector.load %arg2[%c0_4, %c0_5] : memref<1x4xf32, #tpu.memory_space<vmem>>, vector<1x4xf32>
    %6 = vector.shape_cast %5 : vector<1x4xf32> to vector<1x1x4xf32>
    %7 = vector.broadcast %6 : vector<1x1x4xf32> to vector<16x16x4xf32>
    %8 = arith.mulf %4, %7 : vector<16x16x4xf32>
    %c0_6 = arith.constant 0 : index
    %c0_7 = arith.constant 0 : index
    %9 = vector.load %arg3[%c0_6, %c0_7] : memref<1x4xf32, #tpu.memory_space<vmem>>, vector<1x4xf32>
    %10 = vector.shape_cast %9 : vector<1x4xf32> to vector<1x1x4xf32>
    %11 = vector.broadcast %10 : vector<1x1x4xf32> to vector<16x16x4xf32>
    %12 = arith.addf %8, %11 : vector<16x16x4xf32>
    %cst = arith.constant 0.000000e+00 : f32
    %13 = vector.broadcast %cst : f32 to vector<16x16x4xf32>
    %14 = arith.maximumf %12, %13 : vector<16x16x4xf32>
    %c1 = arith.constant 1 : index
    %c0_8 = arith.constant 0 : index
    %c0_9 = arith.constant 0 : index
    %15 = vector.load %arg8[%c1, %c0_8, %c0_9] : memref<18x24x4xf32, #tpu.memory_space<vmem>>, vector<16x16x4xf32>
    tpu.vector_store %arg8[%c1, %c0_8, %c0_9], %14 {strides = array<i32>} : memref<18x24x4xf32, #tpu.memory_space<vmem>>, vector<16x16x4xf32>,
    %cst_10 = arith.constant 0.000000e+00 : f32
    %16 = vector.broadcast %cst_10 : f32 to vector<384x12xf32>
    %c0_11 = arith.constant 0 : index
    %c0_12 = arith.constant 0 : index
    %c0_13 = arith.constant 0 : index
    %17 = vector.load %arg8[%c0_11, %c0_12, %c0_13] : memref<18x24x4xf32, #tpu.memory_space<vmem>>, vector<16x24x4xf32>
    %18 = vector.shape_cast %17 : vector<16x24x4xf32> to vector<384x4xf32>
    %c0_14 = arith.constant 0 : index
    %c0_15 = arith.constant 0 : index
    %c0_16 = arith.constant 0 : index
    %19 = vector.load %arg4[%c0_14, %c0_15, %c0_16] : memref<3x4x12xf32, #tpu.memory_space<vmem>>, vector<1x4x12xf32>
    %20 = vector.shape_cast %19 : vector<1x4x12xf32> to vector<4x12xf32>
    %cst_17 = arith.constant dense<0.000000e+00> : vector<384x12xf32>
    %21 = tpu.matmul %18, %20, %cst_17 {dimension_numbers = #tpu.dot_dimension_numbers<[1], [0], [0], [1], [0, 0, 1, 1], [], []>} : vector<384x4xf32>, vector<4x12xf32>, vector<384x12xf32> -> vector<384x12xf32>
    %22 = arith.addf %16, %21 : vector<384x12xf32>
    %c1_18 = arith.constant 1 : index
    %c0_19 = arith.constant 0 : index
    %c0_20 = arith.constant 0 : index
    %23 = vector.load %arg8[%c1_18, %c0_19, %c0_20] : memref<18x24x4xf32, #tpu.memory_space<vmem>>, vector<16x24x4xf32>
    %24 = vector.shape_cast %23 : vector<16x24x4xf32> to vector<384x4xf32>
    %c1_21 = arith.constant 1 : index
    %c0_22 = arith.constant 0 : index
    %c0_23 = arith.constant 0 : index
    %25 = vector.load %arg4[%c1_21, %c0_22, %c0_23] : memref<3x4x12xf32, #tpu.memory_space<vmem>>, vector<1x4x12xf32>
    %26 = vector.shape_cast %25 : vector<1x4x12xf32> to vector<4x12xf32>
    %cst_24 = arith.constant dense<0.000000e+00> : vector<384x12xf32>
    %27 = tpu.matmul %24, %26, %cst_24 {dimension_numbers = #tpu.dot_dimension_numbers<[1], [0], [0], [1], [0, 0, 1, 1], [], []>} : vector<384x4xf32>, vector<4x12xf32>, vector<384x12xf32> -> vector<384x12xf32>
    %28 = arith.addf %22, %27 : vector<384x12xf32>
    %c2 = arith.constant 2 : index
    %c0_25 = arith.constant 0 : index
    %c0_26 = arith.constant 0 : index
    %29 = vector.load %arg8[%c2, %c0_25, %c0_26] : memref<18x24x4xf32, #tpu.memory_space<vmem>>, vector<16x24x4xf32>
    %30 = vector.shape_cast %29 : vector<16x24x4xf32> to vector<384x4xf32>
    %c2_27 = arith.constant 2 : index
    %c0_28 = arith.constant 0 : index
    %c0_29 = arith.constant 0 : index
    %31 = vector.load %arg4[%c2_27, %c0_28, %c0_29] : memref<3x4x12xf32, #tpu.memory_space<vmem>>, vector<1x4x12xf32>
    %32 = vector.shape_cast %31 : vector<1x4x12xf32> to vector<4x12xf32>
    %cst_30 = arith.constant dense<0.000000e+00> : vector<384x12xf32>
    %33 = tpu.matmul %30, %32, %cst_30 {dimension_numbers = #tpu.dot_dimension_numbers<[1], [0], [0], [1], [0, 0, 1, 1], [], []>} : vector<384x4xf32>, vector<4x12xf32>, vector<384x12xf32> -> vector<384x12xf32>
    %34 = arith.addf %28, %33 : vector<384x12xf32>
    %35 = vector.extract_strided_slice %34 {offsets = [0, 0], sizes = [384, 4], strides = [1, 1]} : vector<384x12xf32> to vector<384x4xf32>
    %36 = vector.extract_strided_slice %34 {offsets = [0, 4], sizes = [384, 4], strides = [1, 1]} : vector<384x12xf32> to vector<384x4xf32>
    %37 = vector.extract_strided_slice %34 {offsets = [0, 8], sizes = [384, 4], strides = [1, 1]} : vector<384x12xf32> to vector<384x4xf32>
    %38 = vector.extract_strided_slice %35 {offsets = [383, 0], sizes = [1, 4], strides = [1, 1]} : vector<384x4xf32> to vector<1x4xf32>
    %39 = vector.extract_strided_slice %35 {offsets = [0, 0], sizes = [383, 4], strides = [1, 1]} : vector<384x4xf32> to vector<383x4xf32>
    %40 = tpu.concatenate %38, %39 in 0 : vector<1x4xf32>, vector<383x4xf32> -> vector<384x4xf32>
    %41 = arith.addf %36, %40 : vector<384x4xf32>
    %42 = vector.extract_strided_slice %37 {offsets = [1, 0], sizes = [383, 4], strides = [1, 1]} : vector<384x4xf32> to vector<383x4xf32>
    %43 = vector.extract_strided_slice %37 {offsets = [0, 0], sizes = [1, 4], strides = [1, 1]} : vector<384x4xf32> to vector<1x4xf32>
    %44 = tpu.concatenate %42, %43 in 0 : vector<383x4xf32>, vector<1x4xf32> -> vector<384x4xf32>
    %45 = arith.addf %41, %44 : vector<384x4xf32>
    %46 = vector.shape_cast %45 : vector<384x4xf32> to vector<16x24x4xf32>
    %47 = vector.extract_strided_slice %46 {offsets = [0, 0, 0], sizes = [16, 16, 4], strides = [1, 1, 1]} : vector<16x24x4xf32> to vector<16x16x4xf32>
    %c0_31 = arith.constant 0 : index
    %c0_32 = arith.constant 0 : index
    %c0_33 = arith.constant 0 : index
    %c0_34 = arith.constant 0 : index
    %48 = vector.load %arg5[%c0_31, %c0_32, %c0_33, %c0_34] : memref<1x16x16x4xf32, #tpu.memory_space<vmem>>, vector<1x16x16x4xf32>
    %49 = vector.shape_cast %48 : vector<1x16x16x4xf32> to vector<16x16x4xf32>
    %50 = vector.shape_cast %47 : vector<16x16x4xf32> to vector<1x16x16x4xf32>
    tpu.vector_store %arg5[%c0_31, %c0_32, %c0_33, %c0_34], %50 {strides = array<i32>} : memref<1x16x16x4xf32, #tpu.memory_space<vmem>>, vector<1x16x16x4xf32>,
    %c0_35 = arith.constant 0 : index
    %c0_36 = arith.constant 0 : index
    %51 = vector.load %arg6[%c0_35, %c0_36] : memref<1x4xf32, #tpu.memory_space<vmem>>, vector<1x4xf32>
    %cst_37 = arith.constant dense<0.000000e+00> : vector<16x4xf32>
    %52 = vector.multi_reduction <add>, %47, %cst_37 [0] : vector<16x16x4xf32> to vector<16x4xf32>
    %cst_38 = arith.constant dense<0.000000e+00> : vector<4xf32>
    %53 = vector.multi_reduction <add>, %52, %cst_38 [0] : vector<16x4xf32> to vector<4xf32>
    %54 = vector.shape_cast %53 : vector<4xf32> to vector<1x4xf32>
    %55 = arith.addf %51, %54 : vector<1x4xf32>
    %c0_39 = arith.constant 0 : index
    %c0_40 = arith.constant 0 : index
    %56 = vector.load %arg6[%c0_39, %c0_40] : memref<1x4xf32, #tpu.memory_space<vmem>>, vector<1x4xf32>
    tpu.vector_store %arg6[%c0_39, %c0_40], %55 {strides = array<i32>} : memref<1x4xf32, #tpu.memory_space<vmem>>, vector<1x4xf32>,
    %c0_41 = arith.constant 0 : index
    %c0_42 = arith.constant 0 : index
    %57 = vector.load %arg7[%c0_41, %c0_42] : memref<1x4xf32, #tpu.memory_space<vmem>>, vector<1x4xf32>
    %58 = arith.mulf %47, %47 : vector<16x16x4xf32>
    %cst_43 = arith.constant dense<0.000000e+00> : vector<16x4xf32>
    %59 = vector.multi_reduction <add>, %58, %cst_43 [0] : vector<16x16x4xf32> to vector<16x4xf32>
    %cst_44 = arith.constant dense<0.000000e+00> : vector<4xf32>
    %60 = vector.multi_reduction <add>, %59, %cst_44 [0] : vector<16x4xf32> to vector<4xf32>
    %61 = vector.shape_cast %60 : vector<4xf32> to vector<1x4xf32>
    %62 = arith.addf %57, %61 : vector<1x4xf32>
    %c0_45 = arith.constant 0 : index
    %c0_46 = arith.constant 0 : index
    %63 = vector.load %arg7[%c0_45, %c0_46] : memref<1x4xf32, #tpu.memory_space<vmem>>, vector<1x4xf32>
    tpu.vector_store %arg7[%c0_45, %c0_46], %62 {strides = array<i32>} : memref<1x4xf32, #tpu.memory_space<vmem>>, vector<1x4xf32>,
    return
  }
  func.func @transform_0(%arg0: i32) -> (i32, i32, i32, i32) {
    %c0_i32 = arith.constant 0 : i32
    %c0_i32_0 = arith.constant 0 : i32
    %c0_i32_1 = arith.constant 0 : i32
    %c0_i32_2 = arith.constant 0 : i32
    return %arg0, %c0_i32, %c0_i32_0, %c0_i32_1 : i32, i32, i32, i32
  }
  func.func @transform_1(%arg0: i32) -> (i32, i32) {
    %c0_i32 = arith.constant 0 : i32
    %c0_i32_0 = arith.constant 0 : i32
    %c0_i32_1 = arith.constant 0 : i32
    return %c0_i32, %c0_i32_0 : i32, i32
  }
  func.func @transform_2(%arg0: i32) -> (i32, i32) {
    %c0_i32 = arith.constant 0 : i32
    %c0_i32_0 = arith.constant 0 : i32
    %c0_i32_1 = arith.constant 0 : i32
    return %c0_i32, %c0_i32_0 : i32, i32
  }
  func.func @transform_3(%arg0: i32) -> (i32, i32, i32) {
    %c0_i32 = arith.constant 0 : i32
    %c0_i32_0 = arith.constant 0 : i32
    %c0_i32_1 = arith.constant 0 : i32
    %c0_i32_2 = arith.constant 0 : i32
    return %c0_i32, %c0_i32_0, %c0_i32_1 : i32, i32, i32
  }
  func.func @transform_4(%arg0: i32) -> (i32, i32, i32, i32) {
    %c0_i32 = arith.constant 0 : i32
    %c0_i32_0 = arith.constant 0 : i32
    %c0_i32_1 = arith.constant 0 : i32
    %c0_i32_2 = arith.constant 0 : i32
    return %arg0, %c0_i32, %c0_i32_0, %c0_i32_1 : i32, i32, i32, i32
  }
  func.func @transform_5(%arg0: i32) -> (i32, i32) {
    %c0_i32 = arith.constant 0 : i32
    %c0_i32_0 = arith.constant 0 : i32
    %c0_i32_1 = arith.constant 0 : i32
    return %c0_i32, %c0_i32_0 : i32, i32
  }
  func.func @transform_6(%arg0: i32) -> (i32, i32) {
    %c0_i32 = arith.constant 0 : i32
    %c0_i32_0 = arith.constant 0 : i32
    %c0_i32_1 = arith.constant 0 : i32
    return %c0_i32, %c0_i32_0 : i32, i32
  }
}

module attributes {stable_mosaic.version = 11 : i64} {
  func.func @_conv1x1_stats_kernel(%arg0: i32, %arg1: memref<512x16xf32, #tpu.memory_space<vmem>>, %arg2: memref<16x4xf32, #tpu.memory_space<vmem>>, %arg3: memref<512x4xf32, #tpu.memory_space<vmem>>, %arg4: memref<1x4xf32, #tpu.memory_space<vmem>>, %arg5: memref<1x4xf32, #tpu.memory_space<vmem>>) attributes {dimension_semantics = [#tpu.dimension_semantics<arbitrary>], iteration_bounds = array<i64: 1>, scalar_prefetch = 0 : i64, scratch_operands = 0 : i64, tpu.core_type = #tpu.core_type<tc>, window_params = [{transform_indices = @transform_0, window_bounds = array<i64: 512, 16>}, {pipeline_mode = #tpu.pipeline_mode<synchronous>, transform_indices = @transform_1, window_bounds = array<i64: 16, 4>}, {transform_indices = @transform_2, window_bounds = array<i64: 512, 4>}, {pipeline_mode = #tpu.pipeline_mode<synchronous>, transform_indices = @transform_3, window_bounds = array<i64: 1, 4>}, {pipeline_mode = #tpu.pipeline_mode<synchronous>, transform_indices = @transform_4, window_bounds = array<i64: 1, 4>}]} {
    %c0_i32 = arith.constant 0 : i32
    %0 = arith.cmpi eq, %arg0, %c0_i32 : i32
    %1 = arith.extui %0 : i1 to i32
    %c0_i32_0 = arith.constant 0 : i32
    %2 = arith.cmpi ne, %1, %c0_i32_0 : i32
    scf.if %2 {
      %cst_16 = arith.constant 0.000000e+00 : f32
      %18 = vector.broadcast %cst_16 : f32 to vector<1x4xf32>
      %c0_17 = arith.constant 0 : index
      %c0_18 = arith.constant 0 : index
      %19 = vector.load %arg4[%c0_17, %c0_18] : memref<1x4xf32, #tpu.memory_space<vmem>>, vector<1x4xf32>
      tpu.vector_store %arg4[%c0_17, %c0_18], %18 {strides = array<i32>} : memref<1x4xf32, #tpu.memory_space<vmem>>, vector<1x4xf32>,
      %cst_19 = arith.constant 0.000000e+00 : f32
      %20 = vector.broadcast %cst_19 : f32 to vector<1x4xf32>
      %c0_20 = arith.constant 0 : index
      %c0_21 = arith.constant 0 : index
      %21 = vector.load %arg5[%c0_20, %c0_21] : memref<1x4xf32, #tpu.memory_space<vmem>>, vector<1x4xf32>
      tpu.vector_store %arg5[%c0_20, %c0_21], %20 {strides = array<i32>} : memref<1x4xf32, #tpu.memory_space<vmem>>, vector<1x4xf32>,
    } else {
    }
    %c0 = arith.constant 0 : index
    %c0_1 = arith.constant 0 : index
    %3 = vector.load %arg1[%c0, %c0_1] : memref<512x16xf32, #tpu.memory_space<vmem>>, vector<512x16xf32>
    %c0_2 = arith.constant 0 : index
    %c0_3 = arith.constant 0 : index
    %4 = vector.load %arg2[%c0_2, %c0_3] : memref<16x4xf32, #tpu.memory_space<vmem>>, vector<16x4xf32>
    %cst = arith.constant dense<0.000000e+00> : vector<512x4xf32>
    %5 = tpu.matmul %3, %4, %cst {dimension_numbers = #tpu.dot_dimension_numbers<[1], [0], [0], [1], [0, 0, 1, 1], [], []>} : vector<512x16xf32>, vector<16x4xf32>, vector<512x4xf32> -> vector<512x4xf32>
    %c0_4 = arith.constant 0 : index
    %c0_5 = arith.constant 0 : index
    %6 = vector.load %arg3[%c0_4, %c0_5] : memref<512x4xf32, #tpu.memory_space<vmem>>, vector<512x4xf32>
    tpu.vector_store %arg3[%c0_4, %c0_5], %5 {strides = array<i32>} : memref<512x4xf32, #tpu.memory_space<vmem>>, vector<512x4xf32>,
    %c0_6 = arith.constant 0 : index
    %c0_7 = arith.constant 0 : index
    %7 = vector.load %arg4[%c0_6, %c0_7] : memref<1x4xf32, #tpu.memory_space<vmem>>, vector<1x4xf32>
    %cst_8 = arith.constant dense<0.000000e+00> : vector<4xf32>
    %8 = vector.multi_reduction <add>, %5, %cst_8 [0] : vector<512x4xf32> to vector<4xf32>
    %9 = vector.shape_cast %8 : vector<4xf32> to vector<1x4xf32>
    %10 = arith.addf %7, %9 : vector<1x4xf32>
    %c0_9 = arith.constant 0 : index
    %c0_10 = arith.constant 0 : index
    %11 = vector.load %arg4[%c0_9, %c0_10] : memref<1x4xf32, #tpu.memory_space<vmem>>, vector<1x4xf32>
    tpu.vector_store %arg4[%c0_9, %c0_10], %10 {strides = array<i32>} : memref<1x4xf32, #tpu.memory_space<vmem>>, vector<1x4xf32>,
    %c0_11 = arith.constant 0 : index
    %c0_12 = arith.constant 0 : index
    %12 = vector.load %arg5[%c0_11, %c0_12] : memref<1x4xf32, #tpu.memory_space<vmem>>, vector<1x4xf32>
    %13 = arith.mulf %5, %5 : vector<512x4xf32>
    %cst_13 = arith.constant dense<0.000000e+00> : vector<4xf32>
    %14 = vector.multi_reduction <add>, %13, %cst_13 [0] : vector<512x4xf32> to vector<4xf32>
    %15 = vector.shape_cast %14 : vector<4xf32> to vector<1x4xf32>
    %16 = arith.addf %12, %15 : vector<1x4xf32>
    %c0_14 = arith.constant 0 : index
    %c0_15 = arith.constant 0 : index
    %17 = vector.load %arg5[%c0_14, %c0_15] : memref<1x4xf32, #tpu.memory_space<vmem>>, vector<1x4xf32>
    tpu.vector_store %arg5[%c0_14, %c0_15], %16 {strides = array<i32>} : memref<1x4xf32, #tpu.memory_space<vmem>>, vector<1x4xf32>,
    return
  }
  func.func @transform_0(%arg0: i32) -> (i32, i32) {
    %c0_i32 = arith.constant 0 : i32
    %c0_i32_0 = arith.constant 0 : i32
    return %arg0, %c0_i32 : i32, i32
  }
  func.func @transform_1(%arg0: i32) -> (i32, i32) {
    %c0_i32 = arith.constant 0 : i32
    %c0_i32_0 = arith.constant 0 : i32
    %c0_i32_1 = arith.constant 0 : i32
    return %c0_i32, %c0_i32_0 : i32, i32
  }
  func.func @transform_2(%arg0: i32) -> (i32, i32) {
    %c0_i32 = arith.constant 0 : i32
    %c0_i32_0 = arith.constant 0 : i32
    return %arg0, %c0_i32 : i32, i32
  }
  func.func @transform_3(%arg0: i32) -> (i32, i32) {
    %c0_i32 = arith.constant 0 : i32
    %c0_i32_0 = arith.constant 0 : i32
    %c0_i32_1 = arith.constant 0 : i32
    return %c0_i32, %c0_i32_0 : i32, i32
  }
  func.func @transform_4(%arg0: i32) -> (i32, i32) {
    %c0_i32 = arith.constant 0 : i32
    %c0_i32_0 = arith.constant 0 : i32
    %c0_i32_1 = arith.constant 0 : i32
    return %c0_i32, %c0_i32_0 : i32, i32
  }
}

module attributes {stable_mosaic.version = 11 : i64} {
  func.func @_bn_add_relu_kernel(%arg0: i32, %arg1: memref<512x16xf32, #tpu.memory_space<vmem>>, %arg2: memref<1x16xf32, #tpu.memory_space<vmem>>, %arg3: memref<1x16xf32, #tpu.memory_space<vmem>>, %arg4: memref<512x16xf32, #tpu.memory_space<vmem>>, %arg5: memref<512x16xf32, #tpu.memory_space<vmem>>) attributes {dimension_semantics = [#tpu.dimension_semantics<parallel>], iteration_bounds = array<i64: 1>, scalar_prefetch = 0 : i64, scratch_operands = 0 : i64, tpu.core_type = #tpu.core_type<tc>, window_params = [{transform_indices = @transform_0, window_bounds = array<i64: 512, 16>}, {pipeline_mode = #tpu.pipeline_mode<synchronous>, transform_indices = @transform_1, window_bounds = array<i64: 1, 16>}, {pipeline_mode = #tpu.pipeline_mode<synchronous>, transform_indices = @transform_2, window_bounds = array<i64: 1, 16>}, {transform_indices = @transform_3, window_bounds = array<i64: 512, 16>}, {transform_indices = @transform_4, window_bounds = array<i64: 512, 16>}]} {
    %c0 = arith.constant 0 : index
    %c0_0 = arith.constant 0 : index
    %0 = vector.load %arg1[%c0, %c0_0] : memref<512x16xf32, #tpu.memory_space<vmem>>, vector<512x16xf32>
    %c0_1 = arith.constant 0 : index
    %c0_2 = arith.constant 0 : index
    %1 = vector.load %arg2[%c0_1, %c0_2] : memref<1x16xf32, #tpu.memory_space<vmem>>, vector<1x16xf32>
    %2 = vector.broadcast %1 : vector<1x16xf32> to vector<512x16xf32>
    %3 = arith.mulf %0, %2 : vector<512x16xf32>
    %c0_3 = arith.constant 0 : index
    %c0_4 = arith.constant 0 : index
    %4 = vector.load %arg3[%c0_3, %c0_4] : memref<1x16xf32, #tpu.memory_space<vmem>>, vector<1x16xf32>
    %5 = vector.broadcast %4 : vector<1x16xf32> to vector<512x16xf32>
    %6 = arith.addf %3, %5 : vector<512x16xf32>
    %c0_5 = arith.constant 0 : index
    %c0_6 = arith.constant 0 : index
    %7 = vector.load %arg4[%c0_5, %c0_6] : memref<512x16xf32, #tpu.memory_space<vmem>>, vector<512x16xf32>
    %8 = arith.addf %6, %7 : vector<512x16xf32>
    %cst = arith.constant 0.000000e+00 : f32
    %9 = vector.broadcast %cst : f32 to vector<512x16xf32>
    %10 = arith.maximumf %8, %9 : vector<512x16xf32>
    %c0_7 = arith.constant 0 : index
    %c0_8 = arith.constant 0 : index
    %11 = vector.load %arg5[%c0_7, %c0_8] : memref<512x16xf32, #tpu.memory_space<vmem>>, vector<512x16xf32>
    tpu.vector_store %arg5[%c0_7, %c0_8], %10 {strides = array<i32>} : memref<512x16xf32, #tpu.memory_space<vmem>>, vector<512x16xf32>,
    return
  }
  func.func @transform_0(%arg0: i32) -> (i32, i32) {
    %c0_i32 = arith.constant 0 : i32
    %c0_i32_0 = arith.constant 0 : i32
    return %arg0, %c0_i32 : i32, i32
  }
  func.func @transform_1(%arg0: i32) -> (i32, i32) {
    %c0_i32 = arith.constant 0 : i32
    %c0_i32_0 = arith.constant 0 : i32
    %c0_i32_1 = arith.constant 0 : i32
    return %c0_i32, %c0_i32_0 : i32, i32
  }
  func.func @transform_2(%arg0: i32) -> (i32, i32) {
    %c0_i32 = arith.constant 0 : i32
    %c0_i32_0 = arith.constant 0 : i32
    %c0_i32_1 = arith.constant 0 : i32
    return %c0_i32, %c0_i32_0 : i32, i32
  }
  func.func @transform_3(%arg0: i32) -> (i32, i32) {
    %c0_i32 = arith.constant 0 : i32
    %c0_i32_0 = arith.constant 0 : i32
    return %arg0, %c0_i32 : i32, i32
  }
  func.func @transform_4(%arg0: i32) -> (i32, i32) {
    %c0_i32 = arith.constant 0 : i32
    %c0_i32_0 = arith.constant 0 : i32
    return %arg0, %c0_i32 : i32, i32
  }
}

</mosaic_0001>

<llo_original>
// kernel: block_forward.7
$region0: #{block_forward.7}
  #allocation0 [shape = 'u32[]', space=smem, size = 0x4, offset = 0x4, fixed_abs, tag = 'smem constant byte address 0x4 - core index']
  #allocation1 [shape = 'u32[72,128]{1,0:T(1,128)}', space=vmem, size = 0x9000, scoped, tag = 'internal scratch']
  %s0 = inlined_call_operand.vmem [shape: f32[512,16], index: 0, kind: input, shape index: {}]
  %s1 = inlined_call_operand.vmem [shape: f32[1,16], index: 1, kind: input, shape index: {}]
  %s2 = inlined_call_operand.vmem [shape: f32[1,16], index: 2, kind: input, shape index: {}]
  %s3 = inlined_call_operand.vmem [shape: f32[512,16], index: 3, kind: input, shape index: {}]
  %s4 = inlined_call_operand.vmem [shape: f32[512,16], index: 4, kind: output, shape index: {}]
  %s5 = sld [smem:[#allocation0]]
  $region26: #{block_forward.7} parent=0
    _
  %s7 = ssub.s32 1, %s5
  %s8 = scalar_select 0, %s7, %s5
  // Predicated region
  $region2: #{block_forward.7} parent=0 // pred_check
    _
  $region3: #{block_forward.7} parent=0 // pred_check_branch
    %10 = sbr.rel (0) target = $region5
  $region4: #{block_forward.7} parent=0 // pred_region
    _
  $region5: #{block_forward.7} parent=0 // pred_fallthru
    _
  // Predicated region
  $region6: #{block_forward.7} parent=0 // pred_check
    _
  $region7: #{block_forward.7} parent=0 // pred_check_branch
    %12 = sbr.rel (0) target = $region9
  $region8: #{block_forward.7} parent=0 // pred_region
    _
  $region9: #{block_forward.7} parent=0 // pred_fallthru
    _
  // Predicated region
  $region10: #{block_forward.7} parent=0 // pred_check
    _
  $region11: #{block_forward.7} parent=0 // pred_check_branch
    %14 = sbr.rel (0) target = $region13
  $region12: #{block_forward.7} parent=0 // pred_region
    _
  $region13: #{block_forward.7} parent=0 // pred_fallthru
    _
  // Predicated region
  $region14: #{block_forward.7} parent=0 // pred_check
    _
  $region15: #{block_forward.7} parent=0 // pred_check_branch
    %16 = sbr.rel (0) target = $region17
  $region16: #{block_forward.7} parent=0 // pred_region
    _
  $region17: #{block_forward.7} parent=0 // pred_fallthru
    _
  %v17 = vld [vmem:[%s0] sm:$0xff]
  %v18 = vld [vmem:[%s0 + $0x8] sm:$0xff]
  %v19 = vld [vmem:[%s0 + $0x10] sm:$0xff]
  %v20 = vld [vmem:[%s0 + $0x18] sm:$0xff]
  %v21 = vld [vmem:[%s0 + $0x20] sm:$0xff]
  %v22 = vld [vmem:[%s0 + $0x28] sm:$0xff]
  %v23 = vld [vmem:[%s0 + $0x30] sm:$0xff]
  %v24 = vld [vmem:[%s0 + $0x38] sm:$0xff]
  %v25 = vld [vmem:[%s0 + $0x40] sm:$0xff]
  %v26 = vld [vmem:[%s0 + $0x48] sm:$0xff]
  %v27 = vld [vmem:[%s0 + $0x50] sm:$0xff]
  %v28 = vld [vmem:[%s0 + $0x58] sm:$0xff]
  %v29 = vld [vmem:[%s0 + $0x60] sm:$0xff]
  %v30 = vld [vmem:[%s0 + $0x68] sm:$0xff]
  %v31 = vld [vmem:[%s0 + $0x70] sm:$0xff]
  %v32 = vld [vmem:[%s0 + $0x78] sm:$0xff]
  %v33 = vld [vmem:[%s0 + $0x80] sm:$0xff]
  %v34 = vld [vmem:[%s0 + $0x88] sm:$0xff]
  %v35 = vld [vmem:[%s0 + $0x90] sm:$0xff]
  %v36 = vld [vmem:[%s0 + $0x98] sm:$0xff]
  %v37 = vld [vmem:[%s0 + $0xa0] sm:$0xff]
  %v38 = vld [vmem:[%s0 + $0xa8] sm:$0xff]
  %v39 = vld [vmem:[%s0 + $0xb0] sm:$0xff]
  %v40 = vld [vmem:[%s0 + $0xb8] sm:$0xff]
  %v41 = vld [vmem:[%s0 + $0xc0] sm:$0xff]
  %v42 = vld [vmem:[%s0 + $0xc8] sm:$0xff]
  %v43 = vld [vmem:[%s0 + $0xd0] sm:$0xff]
  %v44 = vld [vmem:[%s0 + $0xd8] sm:$0xff]
  %v45 = vld [vmem:[%s0 + $0xe0] sm:$0xff]
  %v46 = vld [vmem:[%s0 + $0xe8] sm:$0xff]
  %v47 = vld [vmem:[%s0 + $0xf0] sm:$0xff]
  %v48 = vld [vmem:[%s0 + $0xf8] sm:$0xff]
  %v49 = vld [vmem:[%s0 + $0x100] sm:$0xff]
  %v50 = vld [vmem:[%s0 + $0x108] sm:$0xff]
  %v51 = vld [vmem:[%s0 + $0x110] sm:$0xff]
  %v52 = vld [vmem:[%s0 + $0x118] sm:$0xff]
  %v53 = vld [vmem:[%s0 + $0x120] sm:$0xff]
  %v54 = vld [vmem:[%s0 + $0x128] sm:$0xff]
  %v55 = vld [vmem:[%s0 + $0x130] sm:$0xff]
  %v56 = vld [vmem:[%s0 + $0x138] sm:$0xff]
  %v57 = vld [vmem:[%s0 + $0x140] sm:$0xff]
  %v58 = vld [vmem:[%s0 + $0x148] sm:$0xff]
  %v59 = vld [vmem:[%s0 + $0x150] sm:$0xff]
  %v60 = vld [vmem:[%s0 + $0x158] sm:$0xff]
  %v61 = vld [vmem:[%s0 + $0x160] sm:$0xff]
  %v62 = vld [vmem:[%s0 + $0x168] sm:$0xff]
  %v63 = vld [vmem:[%s0 + $0x170] sm:$0xff]
  %v64 = vld [vmem:[%s0 + $0x178] sm:$0xff]
  %v65 = vld [vmem:[%s0 + $0x180] sm:$0xff]
  %v66 = vld [vmem:[%s0 + $0x188] sm:$0xff]
  %v67 = vld [vmem:[%s0 + $0x190] sm:$0xff]
  %v68 = vld [vmem:[%s0 + $0x198] sm:$0xff]
  %v69 = vld [vmem:[%s0 + $0x1a0] sm:$0xff]
  %v70 = vld [vmem:[%s0 + $0x1a8] sm:$0xff]
  %v71 = vld [vmem:[%s0 + $0x1b0] sm:$0xff]
  %v72 = vld [vmem:[%s0 + $0x1b8] sm:$0xff]
  %v73 = vld [vmem:[%s0 + $0x1c0] sm:$0xff]
  %v74 = vld [vmem:[%s0 + $0x1c8] sm:$0xff]
  %v75 = vld [vmem:[%s0 + $0x1d0] sm:$0xff]
  %v76 = vld [vmem:[%s0 + $0x1d8] sm:$0xff]
  %v77 = vld [vmem:[%s0 + $0x1e0] sm:$0xff]
  %v78 = vld [vmem:[%s0 + $0x1e8] sm:$0xff]
  %v79 = vld [vmem:[%s0 + $0x1f0] sm:$0xff]
  %v80 = vld [vmem:[%s0 + $0x1f8] sm:$0xff]
  %v81 = vld [vmem:[%s1] sm:$0x1]
  %v83 = vperm.slane %v81, 0
  %v85 = vmul.f32 %v17, %v83
  %v86 = vmul.f32 %v18, %v83
  %v87 = vmul.f32 %v19, %v83
  %v88 = vmul.f32 %v20, %v83
  %v89 = vmul.f32 %v21, %v83
  %v90 = vmul.f32 %v22, %v83
  %v91 = vmul.f32 %v23, %v83
  %v92 = vmul.f32 %v24, %v83
  %v93 = vmul.f32 %v25, %v83
  %v94 = vmul.f32 %v26, %v83
  %v95 = vmul.f32 %v27, %v83
  %v96 = vmul.f32 %v28, %v83
  %v97 = vmul.f32 %v29, %v83
  %v98 = vmul.f32 %v30, %v83
  %v99 = vmul.f32 %v31, %v83
  %v100 = vmul.f32 %v32, %v83
  %v101 = vmul.f32 %v33, %v83
  %v102 = vmul.f32 %v34, %v83
  %v103 = vmul.f32 %v35, %v83
  %v104 = vmul.f32 %v36, %v83
  %v105 = vmul.f32 %v37, %v83
  %v106 = vmul.f32 %v38, %v83
  %v107 = vmul.f32 %v39, %v83
  %v108 = vmul.f32 %v40, %v83
  %v109 = vmul.f32 %v41, %v83
  %v110 = vmul.f32 %v42, %v83
  %v111 = vmul.f32 %v43, %v83
  %v112 = vmul.f32 %v44, %v83
  %v113 = vmul.f32 %v45, %v83
  %v114 = vmul.f32 %v46, %v83
  %v115 = vmul.f32 %v47, %v83
  %v116 = vmul.f32 %v48, %v83
  %v117 = vmul.f32 %v49, %v83
  %v118 = vmul.f32 %v50, %v83
  %v119 = vmul.f32 %v51, %v83
  %v120 = vmul.f32 %v52, %v83
  %v121 = vmul.f32 %v53, %v83
  %v122 = vmul.f32 %v54, %v83
  %v123 = vmul.f32 %v55, %v83
  %v124 = vmul.f32 %v56, %v83
  %v125 = vmul.f32 %v57, %v83
  %v126 = vmul.f32 %v58, %v83
  %v127 = vmul.f32 %v59, %v83
  %v128 = vmul.f32 %v60, %v83
  %v129 = vmul.f32 %v61, %v83
  %v130 = vmul.f32 %v62, %v83
  %v131 = vmul.f32 %v63, %v83
  %v132 = vmul.f32 %v64, %v83
  %v133 = vmul.f32 %v65, %v83
  %v134 = vmul.f32 %v66, %v83
  %v135 = vmul.f32 %v67, %v83
  %v136 = vmul.f32 %v68, %v83
  %v137 = vmul.f32 %v69, %v83
  %v138 = vmul.f32 %v70, %v83
  %v139 = vmul.f32 %v71, %v83
  %v140 = vmul.f32 %v72, %v83
  %v141 = vmul.f32 %v73, %v83
  %v142 = vmul.f32 %v74, %v83
  %v143 = vmul.f32 %v75, %v83
  %v144 = vmul.f32 %v76, %v83
  %v145 = vmul.f32 %v77, %v83
  %v146 = vmul.f32 %v78, %v83
  %v147 = vmul.f32 %v79, %v83
  %v148 = vmul.f32 %v80, %v83
  %v149 = vld [vmem:[%s2] sm:$0x1]
  %v151 = vperm.slane %v149, 0
  %v153 = vadd.f32 %v85, %v151
  %v154 = vadd.f32 %v86, %v151
  %v155 = vadd.f32 %v87, %v151
  %v156 = vadd.f32 %v88, %v151
  %v157 = vadd.f32 %v89, %v151
  %v158 = vadd.f32 %v90, %v151
  %v159 = vadd.f32 %v91, %v151
  %v160 = vadd.f32 %v92, %v151
  %v161 = vadd.f32 %v93, %v151
  %v162 = vadd.f32 %v94, %v151
  %v163 = vadd.f32 %v95, %v151
  %v164 = vadd.f32 %v96, %v151
  %v165 = vadd.f32 %v97, %v151
  %v166 = vadd.f32 %v98, %v151
  %v167 = vadd.f32 %v99, %v151
  %v168 = vadd.f32 %v100, %v151
  %v169 = vadd.f32 %v101, %v151
  %v170 = vadd.f32 %v102, %v151
  %v171 = vadd.f32 %v103, %v151
  %v172 = vadd.f32 %v104, %v151
  %v173 = vadd.f32 %v105, %v151
  %v174 = vadd.f32 %v106, %v151
  %v175 = vadd.f32 %v107, %v151
  %v176 = vadd.f32 %v108, %v151
  %v177 = vadd.f32 %v109, %v151
  %v178 = vadd.f32 %v110, %v151
  %v179 = vadd.f32 %v111, %v151
  %v180 = vadd.f32 %v112, %v151
  %v181 = vadd.f32 %v113, %v151
  %v182 = vadd.f32 %v114, %v151
  %v183 = vadd.f32 %v115, %v151
  %v184 = vadd.f32 %v116, %v151
  %v185 = vadd.f32 %v117, %v151
  %v186 = vadd.f32 %v118, %v151
  %v187 = vadd.f32 %v119, %v151
  %v188 = vadd.f32 %v120, %v151
  %v189 = vadd.f32 %v121, %v151
  %v190 = vadd.f32 %v122, %v151
  %v191 = vadd.f32 %v123, %v151
  %v192 = vadd.f32 %v124, %v151
  %v193 = vadd.f32 %v125, %v151
  %v194 = vadd.f32 %v126, %v151
  %v195 = vadd.f32 %v127, %v151
  %v196 = vadd.f32 %v128, %v151
  %v197 = vadd.f32 %v129, %v151
  %v198 = vadd.f32 %v130, %v151
  %v199 = vadd.f32 %v131, %v151
  %v200 = vadd.f32 %v132, %v151
  %v201 = vadd.f32 %v133, %v151
  %v202 = vadd.f32 %v134, %v151
  %v203 = vadd.f32 %v135, %v151
  %v204 = vadd.f32 %v136, %v151
  %v205 = vadd.f32 %v137, %v151
  %v206 = vadd.f32 %v138, %v151
  %v207 = vadd.f32 %v139, %v151
  %v208 = vadd.f32 %v140, %v151
  %v209 = vadd.f32 %v141, %v151
  %v210 = vadd.f32 %v142, %v151
  %v211 = vadd.f32 %v143, %v151
  %v212 = vadd.f32 %v144, %v151
  %v213 = vadd.f32 %v145, %v151
  %v214 = vadd.f32 %v146, %v151
  %v215 = vadd.f32 %v147, %v151
  %v216 = vadd.f32 %v148, %v151
  %v217 = vld [vmem:[%s3] sm:$0xff]
  %v218 = vld [vmem:[%s3 + $0x8] sm:$0xff]
  %v219 = vld [vmem:[%s3 + $0x10] sm:$0xff]
  %v220 = vld [vmem:[%s3 + $0x18] sm:$0xff]
  %v221 = vld [vmem:[%s3 + $0x20] sm:$0xff]
  %v222 = vld [vmem:[%s3 + $0x28] sm:$0xff]
  %v223 = vld [vmem:[%s3 + $0x30] sm:$0xff]
  %v224 = vld [vmem:[%s3 + $0x38] sm:$0xff]
  %v225 = vld [vmem:[%s3 + $0x40] sm:$0xff]
  %v226 = vld [vmem:[%s3 + $0x48] sm:$0xff]
  %v227 = vld [vmem:[%s3 + $0x50] sm:$0xff]
  %v228 = vld [vmem:[%s3 + $0x58] sm:$0xff]
  %v229 = vld [vmem:[%s3 + $0x60] sm:$0xff]
  %v230 = vld [vmem:[%s3 + $0x68] sm:$0xff]
  %v231 = vld [vmem:[%s3 + $0x70] sm:$0xff]
  %v232 = vld [vmem:[%s3 + $0x78] sm:$0xff]
  %v233 = vld [vmem:[%s3 + $0x80] sm:$0xff]
  %v234 = vld [vmem:[%s3 + $0x88] sm:$0xff]
  %v235 = vld [vmem:[%s3 + $0x90] sm:$0xff]
  %v236 = vld [vmem:[%s3 + $0x98] sm:$0xff]
  %v237 = vld [vmem:[%s3 + $0xa0] sm:$0xff]
  %v238 = vld [vmem:[%s3 + $0xa8] sm:$0xff]
  %v239 = vld [vmem:[%s3 + $0xb0] sm:$0xff]
  %v240 = vld [vmem:[%s3 + $0xb8] sm:$0xff]
  %v241 = vld [vmem:[%s3 + $0xc0] sm:$0xff]
  %v242 = vld [vmem:[%s3 + $0xc8] sm:$0xff]
  %v243 = vld [vmem:[%s3 + $0xd0] sm:$0xff]
  %v244 = vld [vmem:[%s3 + $0xd8] sm:$0xff]
  %v245 = vld [vmem:[%s3 + $0xe0] sm:$0xff]
  %v246 = vld [vmem:[%s3 + $0xe8] sm:$0xff]
  %v247 = vld [vmem:[%s3 + $0xf0] sm:$0xff]
  %v248 = vld [vmem:[%s3 + $0xf8] sm:$0xff]
  %v249 = vld [vmem:[%s3 + $0x100] sm:$0xff]
  %v250 = vld [vmem:[%s3 + $0x108] sm:$0xff]
  %v251 = vld [vmem:[%s3 + $0x110] sm:$0xff]
  %v252 = vld [vmem:[%s3 + $0x118] sm:$0xff]
  %v253 = vld [vmem:[%s3 + $0x120] sm:$0xff]
  %v254 = vld [vmem:[%s3 + $0x128] sm:$0xff]
  %v255 = vld [vmem:[%s3 + $0x130] sm:$0xff]
  %v256 = vld [vmem:[%s3 + $0x138] sm:$0xff]
  %v257 = vld [vmem:[%s3 + $0x140] sm:$0xff]
  %v258 = vld [vmem:[%s3 + $0x148] sm:$0xff]
  %v259 = vld [vmem:[%s3 + $0x150] sm:$0xff]
  %v260 = vld [vmem:[%s3 + $0x158] sm:$0xff]
  %v261 = vld [vmem:[%s3 + $0x160] sm:$0xff]
  %v262 = vld [vmem:[%s3 + $0x168] sm:$0xff]
  %v263 = vld [vmem:[%s3 + $0x170] sm:$0xff]
  %v264 = vld [vmem:[%s3 + $0x178] sm:$0xff]
  %v265 = vld [vmem:[%s3 + $0x180] sm:$0xff]
  %v266 = vld [vmem:[%s3 + $0x188] sm:$0xff]
  %v267 = vld [vmem:[%s3 + $0x190] sm:$0xff]
  %v268 = vld [vmem:[%s3 + $0x198] sm:$0xff]
  %v269 = vld [vmem:[%s3 + $0x1a0] sm:$0xff]
  %v270 = vld [vmem:[%s3 + $0x1a8] sm:$0xff]
  %v271 = vld [vmem:[%s3 + $0x1b0] sm:$0xff]
  %v272 = vld [vmem:[%s3 + $0x1b8] sm:$0xff]
  %v273 = vld [vmem:[%s3 + $0x1c0] sm:$0xff]
  %v274 = vld [vmem:[%s3 + $0x1c8] sm:$0xff]
  %v275 = vld [vmem:[%s3 + $0x1d0] sm:$0xff]
  %v276 = vld [vmem:[%s3 + $0x1d8] sm:$0xff]
  %v277 = vld [vmem:[%s3 + $0x1e0] sm:$0xff]
  %v278 = vld [vmem:[%s3 + $0x1e8] sm:$0xff]
  %v279 = vld [vmem:[%s3 + $0x1f0] sm:$0xff]
  %v280 = vld [vmem:[%s3 + $0x1f8] sm:$0xff]
  %v281 = vadd.f32 %v153, %v217
  %v282 = vadd.f32 %v154, %v218
  %v283 = vadd.f32 %v155, %v219
  %v284 = vadd.f32 %v156, %v220
  %v285 = vadd.f32 %v157, %v221
  %v286 = vadd.f32 %v158, %v222
  %v287 = vadd.f32 %v159, %v223
  %v288 = vadd.f32 %v160, %v224
  %v289 = vadd.f32 %v161, %v225
  %v290 = vadd.f32 %v162, %v226
  %v291 = vadd.f32 %v163, %v227
  %v292 = vadd.f32 %v164, %v228
  %v293 = vadd.f32 %v165, %v229
  %v294 = vadd.f32 %v166, %v230
  %v295 = vadd.f32 %v167, %v231
  %v296 = vadd.f32 %v168, %v232
  %v297 = vadd.f32 %v169, %v233
  %v298 = vadd.f32 %v170, %v234
  %v299 = vadd.f32 %v171, %v235
  %v300 = vadd.f32 %v172, %v236
  %v301 = vadd.f32 %v173, %v237
  %v302 = vadd.f32 %v174, %v238
  %v303 = vadd.f32 %v175, %v239
  %v304 = vadd.f32 %v176, %v240
  %v305 = vadd.f32 %v177, %v241
  %v306 = vadd.f32 %v178, %v242
  %v307 = vadd.f32 %v179, %v243
  %v308 = vadd.f32 %v180, %v244
  %v309 = vadd.f32 %v181, %v245
  %v310 = vadd.f32 %v182, %v246
  %v311 = vadd.f32 %v183, %v247
  %v312 = vadd.f32 %v184, %v248
  %v313 = vadd.f32 %v185, %v249
  %v314 = vadd.f32 %v186, %v250
  %v315 = vadd.f32 %v187, %v251
  %v316 = vadd.f32 %v188, %v252
  %v317 = vadd.f32 %v189, %v253
  %v318 = vadd.f32 %v190, %v254
  %v319 = vadd.f32 %v191, %v255
  %v320 = vadd.f32 %v192, %v256
  %v321 = vadd.f32 %v193, %v257
  %v322 = vadd.f32 %v194, %v258
  %v323 = vadd.f32 %v195, %v259
  %v324 = vadd.f32 %v196, %v260
  %v325 = vadd.f32 %v197, %v261
  %v326 = vadd.f32 %v198, %v262
  %v327 = vadd.f32 %v199, %v263
  %v328 = vadd.f32 %v200, %v264
  %v329 = vadd.f32 %v201, %v265
  %v330 = vadd.f32 %v202, %v266
  %v331 = vadd.f32 %v203, %v267
  %v332 = vadd.f32 %v204, %v268
  %v333 = vadd.f32 %v205, %v269
  %v334 = vadd.f32 %v206, %v270
  %v335 = vadd.f32 %v207, %v271
  %v336 = vadd.f32 %v208, %v272
  %v337 = vadd.f32 %v209, %v273
  %v338 = vadd.f32 %v210, %v274
  %v339 = vadd.f32 %v211, %v275
  %v340 = vadd.f32 %v212, %v276
  %v341 = vadd.f32 %v213, %v277
  %v342 = vadd.f32 %v214, %v278
  %v343 = vadd.f32 %v215, %v279
  %v344 = vadd.f32 %v216, %v280
  %v345 = vmax.f32 %v281, 0.0
  %v346 = vmax.f32 %v282, 0.0
  %v347 = vmax.f32 %v283, 0.0
  %v348 = vmax.f32 %v284, 0.0
  %v349 = vmax.f32 %v285, 0.0
  %v350 = vmax.f32 %v286, 0.0
  %v351 = vmax.f32 %v287, 0.0
  %v352 = vmax.f32 %v288, 0.0
  %v353 = vmax.f32 %v289, 0.0
  %v354 = vmax.f32 %v290, 0.0
  %v355 = vmax.f32 %v291, 0.0
  %v356 = vmax.f32 %v292, 0.0
  %v357 = vmax.f32 %v293, 0.0
  %v358 = vmax.f32 %v294, 0.0
  %v359 = vmax.f32 %v295, 0.0
  %v360 = vmax.f32 %v296, 0.0
  %v361 = vmax.f32 %v297, 0.0
  %v362 = vmax.f32 %v298, 0.0
  %v363 = vmax.f32 %v299, 0.0
  %v364 = vmax.f32 %v300, 0.0
  %v365 = vmax.f32 %v301, 0.0
  %v366 = vmax.f32 %v302, 0.0
  %v367 = vmax.f32 %v303, 0.0
  %v368 = vmax.f32 %v304, 0.0
  %v369 = vmax.f32 %v305, 0.0
  %v370 = vmax.f32 %v306, 0.0
  %v371 = vmax.f32 %v307, 0.0
  %v372 = vmax.f32 %v308, 0.0
  %v373 = vmax.f32 %v309, 0.0
  %v374 = vmax.f32 %v310, 0.0
  %v375 = vmax.f32 %v311, 0.0
  %v376 = vmax.f32 %v312, 0.0
  %v377 = vmax.f32 %v313, 0.0
  %v378 = vmax.f32 %v314, 0.0
  %v379 = vmax.f32 %v315, 0.0
  %v380 = vmax.f32 %v316, 0.0
  %v381 = vmax.f32 %v317, 0.0
  %v382 = vmax.f32 %v318, 0.0
  %v383 = vmax.f32 %v319, 0.0
  %v384 = vmax.f32 %v320, 0.0
  %v385 = vmax.f32 %v321, 0.0
  %v386 = vmax.f32 %v322, 0.0
  %v387 = vmax.f32 %v323, 0.0
  %v388 = vmax.f32 %v324, 0.0
  %v389 = vmax.f32 %v325, 0.0
  %v390 = vmax.f32 %v326, 0.0
  %v391 = vmax.f32 %v327, 0.0
  %v392 = vmax.f32 %v328, 0.0
  %v393 = vmax.f32 %v329, 0.0
  %v394 = vmax.f32 %v330, 0.0
  %v395 = vmax.f32 %v331, 0.0
  %v396 = vmax.f32 %v332, 0.0
  %v397 = vmax.f32 %v333, 0.0
  %v398 = vmax.f32 %v334, 0.0
  %v399 = vmax.f32 %v335, 0.0
  %v400 = vmax.f32 %v336, 0.0
  %v401 = vmax.f32 %v337, 0.0
  %v402 = vmax.f32 %v338, 0.0
  %v403 = vmax.f32 %v339, 0.0
  %v404 = vmax.f32 %v340, 0.0
  %v405 = vmax.f32 %v341, 0.0
  %v406 = vmax.f32 %v342, 0.0
  %v407 = vmax.f32 %v343, 0.0
  %v408 = vmax.f32 %v344, 0.0
  %vm409 = vcmask 130048
  %410 = vst.msk [vmem:[%s4] sm:$0xff] %vm409, %v345
  %411 = vst.msk [vmem:[%s4 + $0x8] sm:$0xff] %vm409, %v346
  %412 = vst.msk [vmem:[%s4 + $0x10] sm:$0xff] %vm409, %v347
  %413 = vst.msk [vmem:[%s4 + $0x18] sm:$0xff] %vm409, %v348
  %414 = vst.msk [vmem:[%s4 + $0x20] sm:$0xff] %vm409, %v349
  %415 = vst.msk [vmem:[%s4 + $0x28] sm:$0xff] %vm409, %v350
  %416 = vst.msk [vmem:[%s4 + $0x30] sm:$0xff] %vm409, %v351
  %417 = vst.msk [vmem:[%s4 + $0x38] sm:$0xff] %vm409, %v352
  %418 = vst.msk [vmem:[%s4 + $0x40] sm:$0xff] %vm409, %v353
  %419 = vst.msk [vmem:[%s4 + $0x48] sm:$0xff] %vm409, %v354
  %420 = vst.msk [vmem:[%s4 + $0x50] sm:$0xff] %vm409, %v355
  %421 = vst.msk [vmem:[%s4 + $0x58] sm:$0xff] %vm409, %v356
  %422 = vst.msk [vmem:[%s4 + $0x60] sm:$0xff] %vm409, %v357
  %423 = vst.msk [vmem:[%s4 + $0x68] sm:$0xff] %vm409, %v358
  %424 = vst.msk [vmem:[%s4 + $0x70] sm:$0xff] %vm409, %v359
  %425 = vst.msk [vmem:[%s4 + $0x78] sm:$0xff] %vm409, %v360
  %426 = vst.msk [vmem:[%s4 + $0x80] sm:$0xff] %vm409, %v361
  %427 = vst.msk [vmem:[%s4 + $0x88] sm:$0xff] %vm409, %v362
  %428 = vst.msk [vmem:[%s4 + $0x90] sm:$0xff] %vm409, %v363
  %429 = vst.msk [vmem:[%s4 + $0x98] sm:$0xff] %vm409, %v364
  %430 = vst.msk [vmem:[%s4 + $0xa0] sm:$0xff] %vm409, %v365
  %431 = vst.msk [vmem:[%s4 + $0xa8] sm:$0xff] %vm409, %v366
  %432 = vst.msk [vmem:[%s4 + $0xb0] sm:$0xff] %vm409, %v367
  %433 = vst.msk [vmem:[%s4 + $0xb8] sm:$0xff] %vm409, %v368
  %434 = vst.msk [vmem:[%s4 + $0xc0] sm:$0xff] %vm409, %v369
  %435 = vst.msk [vmem:[%s4 + $0xc8] sm:$0xff] %vm409, %v370
  %436 = vst.msk [vmem:[%s4 + $0xd0] sm:$0xff] %vm409, %v371
  %437 = vst.msk [vmem:[%s4 + $0xd8] sm:$0xff] %vm409, %v372
  %438 = vst.msk [vmem:[%s4 + $0xe0] sm:$0xff] %vm409, %v373
  %439 = vst.msk [vmem:[%s4 + $0xe8] sm:$0xff] %vm409, %v374
  %440 = vst.msk [vmem:[%s4 + $0xf0] sm:$0xff] %vm409, %v375
  %441 = vst.msk [vmem:[%s4 + $0xf8] sm:$0xff] %vm409, %v376
  %442 = vst.msk [vmem:[%s4 + $0x100] sm:$0xff] %vm409, %v377
  %443 = vst.msk [vmem:[%s4 + $0x108] sm:$0xff] %vm409, %v378
  %444 = vst.msk [vmem:[%s4 + $0x110] sm:$0xff] %vm409, %v379
  %445 = vst.msk [vmem:[%s4 + $0x118] sm:$0xff] %vm409, %v380
  %446 = vst.msk [vmem:[%s4 + $0x120] sm:$0xff] %vm409, %v381
  %447 = vst.msk [vmem:[%s4 + $0x128] sm:$0xff] %vm409, %v382
  %448 = vst.msk [vmem:[%s4 + $0x130] sm:$0xff] %vm409, %v383
  %449 = vst.msk [vmem:[%s4 + $0x138] sm:$0xff] %vm409, %v384
  %450 = vst.msk [vmem:[%s4 + $0x140] sm:$0xff] %vm409, %v385
  %451 = vst.msk [vmem:[%s4 + $0x148] sm:$0xff] %vm409, %v386
  %452 = vst.msk [vmem:[%s4 + $0x150] sm:$0xff] %vm409, %v387
  %453 = vst.msk [vmem:[%s4 + $0x158] sm:$0xff] %vm409, %v388
  %454 = vst.msk [vmem:[%s4 + $0x160] sm:$0xff] %vm409, %v389
  %455 = vst.msk [vmem:[%s4 + $0x168] sm:$0xff] %vm409, %v390
  %456 = vst.msk [vmem:[%s4 + $0x170] sm:$0xff] %vm409, %v391
  %457 = vst.msk [vmem:[%s4 + $0x178] sm:$0xff] %vm409, %v392
  %458 = vst.msk [vmem:[%s4 + $0x180] sm:$0xff] %vm409, %v393
  %459 = vst.msk [vmem:[%s4 + $0x188] sm:$0xff] %vm409, %v394
  %460 = vst.msk [vmem:[%s4 + $0x190] sm:$0xff] %vm409, %v395
  %461 = vst.msk [vmem:[%s4 + $0x198] sm:$0xff] %vm409, %v396
  %462 = vst.msk [vmem:[%s4 + $0x1a0] sm:$0xff] %vm409, %v397
  %463 = vst.msk [vmem:[%s4 + $0x1a8] sm:$0xff] %vm409, %v398
  %464 = vst.msk [vmem:[%s4 + $0x1b0] sm:$0xff] %vm409, %v399
  %465 = vst.msk [vmem:[%s4 + $0x1b8] sm:$0xff] %vm409, %v400
  %466 = vst.msk [vmem:[%s4 + $0x1c0] sm:$0xff] %vm409, %v401
  %467 = vst.msk [vmem:[%s4 + $0x1c8] sm:$0xff] %vm409, %v402
  %468 = vst.msk [vmem:[%s4 + $0x1d0] sm:$0xff] %vm409, %v403
  %469 = vst.msk [vmem:[%s4 + $0x1d8] sm:$0xff] %vm409, %v404
  %470 = vst.msk [vmem:[%s4 + $0x1e0] sm:$0xff] %vm409, %v405
  %471 = vst.msk [vmem:[%s4 + $0x1e8] sm:$0xff] %vm409, %v406
  %472 = vst.msk [vmem:[%s4 + $0x1f0] sm:$0xff] %vm409, %v407
  %473 = vst.msk [vmem:[%s4 + $0x1f8] sm:$0xff] %vm409, %v408
  // Predicated region
  $region18: #{block_forward.7} parent=0 // pred_check
    _
  $region19: #{block_forward.7} parent=0 // pred_check_branch
    %475 = sbr.rel (0) target = $region21
  $region20: #{block_forward.7} parent=0 // pred_region
    _
  $region21: #{block_forward.7} parent=0 // pred_fallthru
    _
  // Predicated region
  $region22: #{block_forward.7} parent=0 // pred_check
    _
  $region23: #{block_forward.7} parent=0 // pred_check_branch
    %477 = sbr.rel (0) target = $region25
  $region24: #{block_forward.7} parent=0 // pred_region
    _
  $region25: #{block_forward.7} parent=0 // pred_fallthru
    _

// kernel: block_forward.4
$region0: #{block_forward.4}
  #allocation0 [shape = 'u32[]', space=smem, size = 0x4, offset = 0x4, fixed_abs, tag = 'smem constant byte address 0x4 - core index']
  #allocation1 [shape = 'u32[72,128]{1,0:T(1,128)}', space=vmem, size = 0x9000, scoped, tag = 'internal scratch']
  %s0 = inlined_call_operand.vmem [shape: f32[512,16], index: 0, kind: input, shape index: {}]
  %s1 = inlined_call_operand.vmem [shape: f32[16,4], index: 1, kind: input, shape index: {}]
  %s2 = inlined_call_operand.vmem [shape: f32[512,4], index: 2, kind: output, shape index: {0}]
  %s3 = inlined_call_operand.vmem [shape: f32[1,4], index: 3, kind: output, shape index: {1}]
  %s4 = inlined_call_operand.vmem [shape: f32[1,4], index: 4, kind: output, shape index: {2}]
  %5 = xla_tuple %s2, %s3, %s4
  %s6 = sld [smem:[#allocation0]]
  $region38: #{block_forward.4} parent=0
    _
  %s8 = ssub.s32 1, %s6
  %s9 = scalar_select 0, %s8, %s6
  // Predicated region
  $region2: #{block_forward.4} parent=0 // pred_check
    _
  $region3: #{block_forward.4} parent=0 // pred_check_branch
    %11 = sbr.rel (0) target = $region5
  $region4: #{block_forward.4} parent=0 // pred_region
    _
  $region5: #{block_forward.4} parent=0 // pred_fallthru
    _
  // Predicated region
  $region6: #{block_forward.4} parent=0 // pred_check
    _
  $region7: #{block_forward.4} parent=0 // pred_check_branch
    %13 = sbr.rel (0) target = $region9
  $region8: #{block_forward.4} parent=0 // pred_region
    _
  $region9: #{block_forward.4} parent=0 // pred_fallthru
    _
  %p14 = scmp.eq.s32.totalorder 0, 0
  // Predicated region
  $region10: #{block_forward.4} parent=0 // pred_check
    %p15 = pneg %p14
  $region11: #{block_forward.4} parent=0 // pred_check_branch
    %17 = sbr.rel (%p15) target = $region13
  $region12: #{block_forward.4} parent=0 // pred_region
    %vm18 = vcmask 24576
    %19 = vst.msk [vmem:[%s3] sm:$0x1] %vm18, 0.0
    %20 = vst.msk [vmem:[%s4] sm:$0x1] %vm18, 0.0
  $region13: #{block_forward.4} parent=0 // pred_fallthru
    _
  %v21 = vld [vmem:[%s0] sm:$0xff]
  %v22 = vld [vmem:[%s0 + $0x8] sm:$0xff]
  %v23 = vld [vmem:[%s0 + $0x10] sm:$0xff]
  %v24 = vld [vmem:[%s0 + $0x18] sm:$0xff]
  %v25 = vld [vmem:[%s0 + $0x20] sm:$0xff]
  %v26 = vld [vmem:[%s0 + $0x28] sm:$0xff]
  %v27 = vld [vmem:[%s0 + $0x30] sm:$0xff]
  %v28 = vld [vmem:[%s0 + $0x38] sm:$0xff]
  %v29 = vld [vmem:[%s0 + $0x40] sm:$0xff]
  %v30 = vld [vmem:[%s0 + $0x48] sm:$0xff]
  %v31 = vld [vmem:[%s0 + $0x50] sm:$0xff]
  %v32 = vld [vmem:[%s0 + $0x58] sm:$0xff]
  %v33 = vld [vmem:[%s0 + $0x60] sm:$0xff]
  %v34 = vld [vmem:[%s0 + $0x68] sm:$0xff]
  %v35 = vld [vmem:[%s0 + $0x70] sm:$0xff]
  %v36 = vld [vmem:[%s0 + $0x78] sm:$0xff]
  %v37 = vld [vmem:[%s0 + $0x80] sm:$0xff]
  %v38 = vld [vmem:[%s0 + $0x88] sm:$0xff]
  %v39 = vld [vmem:[%s0 + $0x90] sm:$0xff]
  %v40 = vld [vmem:[%s0 + $0x98] sm:$0xff]
  %v41 = vld [vmem:[%s0 + $0xa0] sm:$0xff]
  %v42 = vld [vmem:[%s0 + $0xa8] sm:$0xff]
  %v43 = vld [vmem:[%s0 + $0xb0] sm:$0xff]
  %v44 = vld [vmem:[%s0 + $0xb8] sm:$0xff]
  %v45 = vld [vmem:[%s0 + $0xc0] sm:$0xff]
  %v46 = vld [vmem:[%s0 + $0xc8] sm:$0xff]
  %v47 = vld [vmem:[%s0 + $0xd0] sm:$0xff]
  %v48 = vld [vmem:[%s0 + $0xd8] sm:$0xff]
  %v49 = vld [vmem:[%s0 + $0xe0] sm:$0xff]
  %v50 = vld [vmem:[%s0 + $0xe8] sm:$0xff]
  %v51 = vld [vmem:[%s0 + $0xf0] sm:$0xff]
  %v52 = vld [vmem:[%s0 + $0xf8] sm:$0xff]
  %v53 = vld [vmem:[%s0 + $0x100] sm:$0xff]
  %v54 = vld [vmem:[%s0 + $0x108] sm:$0xff]
  %v55 = vld [vmem:[%s0 + $0x110] sm:$0xff]
  %v56 = vld [vmem:[%s0 + $0x118] sm:$0xff]
  %v57 = vld [vmem:[%s0 + $0x120] sm:$0xff]
  %v58 = vld [vmem:[%s0 + $0x128] sm:$0xff]
  %v59 = vld [vmem:[%s0 + $0x130] sm:$0xff]
  %v60 = vld [vmem:[%s0 + $0x138] sm:$0xff]
  %v61 = vld [vmem:[%s0 + $0x140] sm:$0xff]
  %v62 = vld [vmem:[%s0 + $0x148] sm:$0xff]
  %v63 = vld [vmem:[%s0 + $0x150] sm:$0xff]
  %v64 = vld [vmem:[%s0 + $0x158] sm:$0xff]
  %v65 = vld [vmem:[%s0 + $0x160] sm:$0xff]
  %v66 = vld [vmem:[%s0 + $0x168] sm:$0xff]
  %v67 = vld [vmem:[%s0 + $0x170] sm:$0xff]
  %v68 = vld [vmem:[%s0 + $0x178] sm:$0xff]
  %v69 = vld [vmem:[%s0 + $0x180] sm:$0xff]
  %v70 = vld [vmem:[%s0 + $0x188] sm:$0xff]
  %v71 = vld [vmem:[%s0 + $0x190] sm:$0xff]
  %v72 = vld [vmem:[%s0 + $0x198] sm:$0xff]
  %v73 = vld [vmem:[%s0 + $0x1a0] sm:$0xff]
  %v74 = vld [vmem:[%s0 + $0x1a8] sm:$0xff]
  %v75 = vld [vmem:[%s0 + $0x1b0] sm:$0xff]
  %v76 = vld [vmem:[%s0 + $0x1b8] sm:$0xff]
  %v77 = vld [vmem:[%s0 + $0x1c0] sm:$0xff]
  %v78 = vld [vmem:[%s0 + $0x1c8] sm:$0xff]
  %v79 = vld [vmem:[%s0 + $0x1d0] sm:$0xff]
  %v80 = vld [vmem:[%s0 + $0x1d8] sm:$0xff]
  %v81 = vld [vmem:[%s0 + $0x1e0] sm:$0xff]
  %v82 = vld [vmem:[%s0 + $0x1e8] sm:$0xff]
  %v83 = vld [vmem:[%s0 + $0x1f0] sm:$0xff]
  %v84 = vld [vmem:[%s0 + $0x1f8] sm:$0xff]
  %v85 = vld [vmem:[%s1] sm:$0xff]
  %v86 = vld [vmem:[%s1 + $0x8] sm:$0xff]
  %vm87 = vcmask 130048
  %v89 = vsel %vm87, %v21, 0
  %v92 = vsel %vm87, %v22, 0
  %v95 = vsel %vm87, %v23, 0
  %v98 = vsel %vm87, %v24, 0
  %v101 = vsel %vm87, %v25, 0
  %v104 = vsel %vm87, %v26, 0
  %v107 = vsel %vm87, %v27, 0
  %v110 = vsel %vm87, %v28, 0
  %v113 = vsel %vm87, %v29, 0
  %v116 = vsel %vm87, %v30, 0
  %v119 = vsel %vm87, %v31, 0
  %v122 = vsel %vm87, %v32, 0
  %v125 = vsel %vm87, %v33, 0
  %v128 = vsel %vm87, %v34, 0
  %v131 = vsel %vm87, %v35, 0
  %v134 = vsel %vm87, %v36, 0
  %v137 = vsel %vm87, %v37, 0
  %v140 = vsel %vm87, %v38, 0
  %v143 = vsel %vm87, %v39, 0
  %v146 = vsel %vm87, %v40, 0
  %v149 = vsel %vm87, %v41, 0
  %v152 = vsel %vm87, %v42, 0
  %v155 = vsel %vm87, %v43, 0
  %v158 = vsel %vm87, %v44, 0
  %v161 = vsel %vm87, %v45, 0
  %v164 = vsel %vm87, %v46, 0
  %v167 = vsel %vm87, %v47, 0
  %v170 = vsel %vm87, %v48, 0
  %v173 = vsel %vm87, %v49, 0
  %v176 = vsel %vm87, %v50, 0
  %v179 = vsel %vm87, %v51, 0
  %v182 = vsel %vm87, %v52, 0
  %v185 = vsel %vm87, %v53, 0
  %v188 = vsel %vm87, %v54, 0
  %v191 = vsel %vm87, %v55, 0
  %v194 = vsel %vm87, %v56, 0
  %v197 = vsel %vm87, %v57, 0
  %v200 = vsel %vm87, %v58, 0
  %v203 = vsel %vm87, %v59, 0
  %v206 = vsel %vm87, %v60, 0
  %v209 = vsel %vm87, %v61, 0
  %v212 = vsel %vm87, %v62, 0
  %v215 = vsel %vm87, %v63, 0
  %v218 = vsel %vm87, %v64, 0
  %v221 = vsel %vm87, %v65, 0
  %v224 = vsel %vm87, %v66, 0
  %v227 = vsel %vm87, %v67, 0
  %v230 = vsel %vm87, %v68, 0
  %v233 = vsel %vm87, %v69, 0
  %v236 = vsel %vm87, %v70, 0
  %v239 = vsel %vm87, %v71, 0
  %v242 = vsel %vm87, %v72, 0
  %v245 = vsel %vm87, %v73, 0
  %v248 = vsel %vm87, %v74, 0
  %v251 = vsel %vm87, %v75, 0
  %v254 = vsel %vm87, %v76, 0
  %v257 = vsel %vm87, %v77, 0
  %v260 = vsel %vm87, %v78, 0
  %v263 = vsel %vm87, %v79, 0
  %v266 = vsel %vm87, %v80, 0
  %v269 = vsel %vm87, %v81, 0
  %v272 = vsel %vm87, %v82, 0
  %v275 = vsel %vm87, %v83, 0
  %v278 = vsel %vm87, %v84, 0
  %280 = vmatpush.msra.mxu0 0.0
  %281 = vmatpush.msra.mxu0 0.0
  %282 = vmatpush.msra.mxu0 0.0
  %283 = vmatpush.msra.mxu0 0.0
  %284 = vmatpush.msra.mxu0 0.0
  %285 = vmatpush.msra.mxu0 0.0
  %286 = vmatpush.msra.mxu0 0.0
  %287 = vmatpush.msra.mxu0 0.0
  %288 = vmatpush.msra.mxu0 0.0
  %289 = vmatpush.msra.mxu0 0.0
  %290 = vmatpush.msra.mxu0 0.0
  %291 = vmatpush.msra.mxu0 0.0
  %292 = vmatpush.msra.mxu0 0.0
  %293 = vmatpush.msra.mxu0 0.0
  %294 = vmatpush.msra.mxu0 %v86
  %295 = vmatpush.msra.mxu0 %v85
  %296 = vmatmul.f32.gmra.mxu0 %v89
  %v297 = vpop.f32.mrf.mxu0
  %v298 = vadd.f32 0.0, %v297
  %299 = vmatmul.f32.gmra.mxu0 %v92
  %v300 = vpop.f32.mrf.mxu0
  %v301 = vadd.f32 0.0, %v300
  %302 = vmatmul.f32.gmra.mxu0 %v95
  %v303 = vpop.f32.mrf.mxu0
  %v304 = vadd.f32 0.0, %v303
  %305 = vmatmul.f32.gmra.mxu0 %v98
  %v306 = vpop.f32.mrf.mxu0
  %v307 = vadd.f32 0.0, %v306
  %308 = vmatmul.f32.gmra.mxu0 %v101
  %v309 = vpop.f32.mrf.mxu0
  %v310 = vadd.f32 0.0, %v309
  %311 = vmatmul.f32.gmra.mxu0 %v104
  %v312 = vpop.f32.mrf.mxu0
  %v313 = vadd.f32 0.0, %v312
  %314 = vmatmul.f32.gmra.mxu0 %v107
  %v315 = vpop.f32.mrf.mxu0
  %v316 = vadd.f32 0.0, %v315
  %317 = vmatmul.f32.gmra.mxu0 %v110
  %v318 = vpop.f32.mrf.mxu0
  %v319 = vadd.f32 0.0, %v318
  %320 = vmatmul.f32.gmra.mxu0 %v113
  %v321 = vpop.f32.mrf.mxu0
  %v322 = vadd.f32 0.0, %v321
  %323 = vmatmul.f32.gmra.mxu0 %v116
  %v324 = vpop.f32.mrf.mxu0
  %v325 = vadd.f32 0.0, %v324
  %326 = vmatmul.f32.gmra.mxu0 %v119
  %v327 = vpop.f32.mrf.mxu0
  %v328 = vadd.f32 0.0, %v327
  %329 = vmatmul.f32.gmra.mxu0 %v122
  %v330 = vpop.f32.mrf.mxu0
  %v331 = vadd.f32 0.0, %v330
  %332 = vmatmul.f32.gmra.mxu0 %v125
  %v333 = vpop.f32.mrf.mxu0
  %v334 = vadd.f32 0.0, %v333
  %335 = vmatmul.f32.gmra.mxu0 %v128
  %v336 = vpop.f32.mrf.mxu0
  %v337 = vadd.f32 0.0, %v336
  %338 = vmatmul.f32.gmra.mxu0 %v131
  %v339 = vpop.f32.mrf.mxu0
  %v340 = vadd.f32 0.0, %v339
  %341 = vmatmul.f32.gmra.mxu0 %v134
  %v342 = vpop.f32.mrf.mxu0
  %v343 = vadd.f32 0.0, %v342
  %344 = vmatmul.f32.gmra.mxu0 %v137
  %v345 = vpop.f32.mrf.mxu0
  %v346 = vadd.f32 0.0, %v345
  %347 = vmatmul.f32.gmra.mxu0 %v140
  %v348 = vpop.f32.mrf.mxu0
  %v349 = vadd.f32 0.0, %v348
  %350 = vmatmul.f32.gmra.mxu0 %v143
  %v351 = vpop.f32.mrf.mxu0
  %v352 = vadd.f32 0.0, %v351
  %353 = vmatmul.f32.gmra.mxu0 %v146
  %v354 = vpop.f32.mrf.mxu0
  %v355 = vadd.f32 0.0, %v354
  %356 = vmatmul.f32.gmra.mxu0 %v149
  %v357 = vpop.f32.mrf.mxu0
  %v358 = vadd.f32 0.0, %v357
  %359 = vmatmul.f32.gmra.mxu0 %v152
  %v360 = vpop.f32.mrf.mxu0
  %v361 = vadd.f32 0.0, %v360
  %362 = vmatmul.f32.gmra.mxu0 %v155
  %v363 = vpop.f32.mrf.mxu0
  %v364 = vadd.f32 0.0, %v363
  %365 = vmatmul.f32.gmra.mxu0 %v158
  %v366 = vpop.f32.mrf.mxu0
  %v367 = vadd.f32 0.0, %v366
  %368 = vmatmul.f32.gmra.mxu0 %v161
  %v369 = vpop.f32.mrf.mxu0
  %v370 = vadd.f32 0.0, %v369
  %371 = vmatmul.f32.gmra.mxu0 %v164
  %v372 = vpop.f32.mrf.mxu0
  %v373 = vadd.f32 0.0, %v372
  %374 = vmatmul.f32.gmra.mxu0 %v167
  %v375 = vpop.f32.mrf.mxu0
  %v376 = vadd.f32 0.0, %v375
  %377 = vmatmul.f32.gmra.mxu0 %v170
  %v378 = vpop.f32.mrf.mxu0
  %v379 = vadd.f32 0.0, %v378
  %380 = vmatmul.f32.gmra.mxu0 %v173
  %v381 = vpop.f32.mrf.mxu0
  %v382 = vadd.f32 0.0, %v381
  %383 = vmatmul.f32.gmra.mxu0 %v176
  %v384 = vpop.f32.mrf.mxu0
  %v385 = vadd.f32 0.0, %v384
  %386 = vmatmul.f32.gmra.mxu0 %v179
  %v387 = vpop.f32.mrf.mxu0
  %v388 = vadd.f32 0.0, %v387
  %389 = vmatmul.f32.gmra.mxu0 %v182
  %v390 = vpop.f32.mrf.mxu0
  %v391 = vadd.f32 0.0, %v390
  %392 = vmatmul.f32.gmra.mxu0 %v185
  %v393 = vpop.f32.mrf.mxu0
  %v394 = vadd.f32 0.0, %v393
  %395 = vmatmul.f32.gmra.mxu0 %v188
  %v396 = vpop.f32.mrf.mxu0
  %v397 = vadd.f32 0.0, %v396
  %398 = vmatmul.f32.gmra.mxu0 %v191
  %v399 = vpop.f32.mrf.mxu0
  %v400 = vadd.f32 0.0, %v399
  %401 = vmatmul.f32.gmra.mxu0 %v194
  %v402 = vpop.f32.mrf.mxu0
  %v403 = vadd.f32 0.0, %v402
  %404 = vmatmul.f32.gmra.mxu0 %v197
  %v405 = vpop.f32.mrf.mxu0
  %v406 = vadd.f32 0.0, %v405
  %407 = vmatmul.f32.gmra.mxu0 %v200
  %v408 = vpop.f32.mrf.mxu0
  %v409 = vadd.f32 0.0, %v408
  %410 = vmatmul.f32.gmra.mxu0 %v203
  %v411 = vpop.f32.mrf.mxu0
  %v412 = vadd.f32 0.0, %v411
  %413 = vmatmul.f32.gmra.mxu0 %v206
  %v414 = vpop.f32.mrf.mxu0
  %v415 = vadd.f32 0.0, %v414
  %416 = vmatmul.f32.gmra.mxu0 %v209
  %v417 = vpop.f32.mrf.mxu0
  %v418 = vadd.f32 0.0, %v417
  %419 = vmatmul.f32.gmra.mxu0 %v212
  %v420 = vpop.f32.mrf.mxu0
  %v421 = vadd.f32 0.0, %v420
  %422 = vmatmul.f32.gmra.mxu0 %v215
  %v423 = vpop.f32.mrf.mxu0
  %v424 = vadd.f32 0.0, %v423
  %425 = vmatmul.f32.gmra.mxu0 %v218
  %v426 = vpop.f32.mrf.mxu0
  %v427 = vadd.f32 0.0, %v426
  %428 = vmatmul.f32.gmra.mxu0 %v221
  %v429 = vpop.f32.mrf.mxu0
  %v430 = vadd.f32 0.0, %v429
  %431 = vmatmul.f32.gmra.mxu0 %v224
  %v432 = vpop.f32.mrf.mxu0
  %v433 = vadd.f32 0.0, %v432
  %434 = vmatmul.f32.gmra.mxu0 %v227
  %v435 = vpop.f32.mrf.mxu0
  %v436 = vadd.f32 0.0, %v435
  %437 = vmatmul.f32.gmra.mxu0 %v230
  %v438 = vpop.f32.mrf.mxu0
  %v439 = vadd.f32 0.0, %v438
  %440 = vmatmul.f32.gmra.mxu0 %v233
  %v441 = vpop.f32.mrf.mxu0
  %v442 = vadd.f32 0.0, %v441
  %443 = vmatmul.f32.gmra.mxu0 %v236
  %v444 = vpop.f32.mrf.mxu0
  %v445 = vadd.f32 0.0, %v444
  %446 = vmatmul.f32.gmra.mxu0 %v239
  %v447 = vpop.f32.mrf.mxu0
  %v448 = vadd.f32 0.0, %v447
  %449 = vmatmul.f32.gmra.mxu0 %v242
  %v450 = vpop.f32.mrf.mxu0
  %v451 = vadd.f32 0.0, %v450
  %452 = vmatmul.f32.gmra.mxu0 %v245
  %v453 = vpop.f32.mrf.mxu0
  %v454 = vadd.f32 0.0, %v453
  %455 = vmatmul.f32.gmra.mxu0 %v248
  %v456 = vpop.f32.mrf.mxu0
  %v457 = vadd.f32 0.0, %v456
  %458 = vmatmul.f32.gmra.mxu0 %v251
  %v459 = vpop.f32.mrf.mxu0
  %v460 = vadd.f32 0.0, %v459
  %461 = vmatmul.f32.gmra.mxu0 %v254
  %v462 = vpop.f32.mrf.mxu0
  %v463 = vadd.f32 0.0, %v462
  %464 = vmatmul.f32.gmra.mxu0 %v257
  %v465 = vpop.f32.mrf.mxu0
  %v466 = vadd.f32 0.0, %v465
  %467 = vmatmul.f32.gmra.mxu0 %v260
  %v468 = vpop.f32.mrf.mxu0
  %v469 = vadd.f32 0.0, %v468
  %470 = vmatmul.f32.gmra.mxu0 %v263
  %v471 = vpop.f32.mrf.mxu0
  %v472 = vadd.f32 0.0, %v471
  %473 = vmatmul.f32.gmra.mxu0 %v266
  %v474 = vpop.f32.mrf.mxu0
  %v475 = vadd.f32 0.0, %v474
  %476 = vmatmul.f32.gmra.mxu0 %v269
  %v477 = vpop.f32.mrf.mxu0
  %v478 = vadd.f32 0.0, %v477
  %479 = vmatmul.f32.gmra.mxu0 %v272
  %v480 = vpop.f32.mrf.mxu0
  %v481 = vadd.f32 0.0, %v480
  %482 = vmatmul.f32.gmra.mxu0 %v275
  %v483 = vpop.f32.mrf.mxu0
  %v484 = vadd.f32 0.0, %v483
  %485 = vmatmul.f32.gmra.mxu0 %v278
  %v486 = vpop.f32.mrf.mxu0
  %v487 = vadd.f32 0.0, %v486
  %488 = vdwg.mxu0
  %vm489 = vcmask 31744
  %490 = vst.msk [vmem:[%s2] sm:$0xff] %vm489, %v298
  %491 = vst.msk [vmem:[%s2 + $0x8] sm:$0xff] %vm489, %v301
  %492 = vst.msk [vmem:[%s2 + $0x10] sm:$0xff] %vm489, %v304
  %493 = vst.msk [vmem:[%s2 + $0x18] sm:$0xff] %vm489, %v307
  %494 = vst.msk [vmem:[%s2 + $0x20] sm:$0xff] %vm489, %v310
  %495 = vst.msk [vmem:[%s2 + $0x28] sm:$0xff] %vm489, %v313
  %496 = vst.msk [vmem:[%s2 + $0x30] sm:$0xff] %vm489, %v316
  %497 = vst.msk [vmem:[%s2 + $0x38] sm:$0xff] %vm489, %v319
  %498 = vst.msk [vmem:[%s2 + $0x40] sm:$0xff] %vm489, %v322
  %499 = vst.msk [vmem:[%s2 + $0x48] sm:$0xff] %vm489, %v325
  %500 = vst.msk [vmem:[%s2 + $0x50] sm:$0xff] %vm489, %v328
  %501 = vst.msk [vmem:[%s2 + $0x58] sm:$0xff] %vm489, %v331
  %502 = vst.msk [vmem:[%s2 + $0x60] sm:$0xff] %vm489, %v334
  %503 = vst.msk [vmem:[%s2 + $0x68] sm:$0xff] %vm489, %v337
  %504 = vst.msk [vmem:[%s2 + $0x70] sm:$0xff] %vm489, %v340
  %505 = vst.msk [vmem:[%s2 + $0x78] sm:$0xff] %vm489, %v343
  %506 = vst.msk [vmem:[%s2 + $0x80] sm:$0xff] %vm489, %v346
  %507 = vst.msk [vmem:[%s2 + $0x88] sm:$0xff] %vm489, %v349
  %508 = vst.msk [vmem:[%s2 + $0x90] sm:$0xff] %vm489, %v352
  %509 = vst.msk [vmem:[%s2 + $0x98] sm:$0xff] %vm489, %v355
  %510 = vst.msk [vmem:[%s2 + $0xa0] sm:$0xff] %vm489, %v358
  %511 = vst.msk [vmem:[%s2 + $0xa8] sm:$0xff] %vm489, %v361
  %512 = vst.msk [vmem:[%s2 + $0xb0] sm:$0xff] %vm489, %v364
  %513 = vst.msk [vmem:[%s2 + $0xb8] sm:$0xff] %vm489, %v367
  %514 = vst.msk [vmem:[%s2 + $0xc0] sm:$0xff] %vm489, %v370
  %515 = vst.msk [vmem:[%s2 + $0xc8] sm:$0xff] %vm489, %v373
  %516 = vst.msk [vmem:[%s2 + $0xd0] sm:$0xff] %vm489, %v376
  %517 = vst.msk [vmem:[%s2 + $0xd8] sm:$0xff] %vm489, %v379
  %518 = vst.msk [vmem:[%s2 + $0xe0] sm:$0xff] %vm489, %v382
  %519 = vst.msk [vmem:[%s2 + $0xe8] sm:$0xff] %vm489, %v385
  %520 = vst.msk [vmem:[%s2 + $0xf0] sm:$0xff] %vm489, %v388
  %521 = vst.msk [vmem:[%s2 + $0xf8] sm:$0xff] %vm489, %v391
  %522 = vst.msk [vmem:[%s2 + $0x100] sm:$0xff] %vm489, %v394
  %523 = vst.msk [vmem:[%s2 + $0x108] sm:$0xff] %vm489, %v397
  %524 = vst.msk [vmem:[%s2 + $0x110] sm:$0xff] %vm489, %v400
  %525 = vst.msk [vmem:[%s2 + $0x118] sm:$0xff] %vm489, %v403
  %526 = vst.msk [vmem:[%s2 + $0x120] sm:$0xff] %vm489, %v406
  %527 = vst.msk [vmem:[%s2 + $0x128] sm:$0xff] %vm489, %v409
  %528 = vst.msk [vmem:[%s2 + $0x130] sm:$0xff] %vm489, %v412
  %529 = vst.msk [vmem:[%s2 + $0x138] sm:$0xff] %vm489, %v415
  %530 = vst.msk [vmem:[%s2 + $0x140] sm:$0xff] %vm489, %v418
  %531 = vst.msk [vmem:[%s2 + $0x148] sm:$0xff] %vm489, %v421
  %532 = vst.msk [vmem:[%s2 + $0x150] sm:$0xff] %vm489, %v424
  %533 = vst.msk [vmem:[%s2 + $0x158] sm:$0xff] %vm489, %v427
  %534 = vst.msk [vmem:[%s2 + $0x160] sm:$0xff] %vm489, %v430
  %535 = vst.msk [vmem:[%s2 + $0x168] sm:$0xff] %vm489, %v433
  %536 = vst.msk [vmem:[%s2 + $0x170] sm:$0xff] %vm489, %v436
  %537 = vst.msk [vmem:[%s2 + $0x178] sm:$0xff] %vm489, %v439
  %538 = vst.msk [vmem:[%s2 + $0x180] sm:$0xff] %vm489, %v442
  %539 = vst.msk [vmem:[%s2 + $0x188] sm:$0xff] %vm489, %v445
  %540 = vst.msk [vmem:[%s2 + $0x190] sm:$0xff] %vm489, %v448
  %541 = vst.msk [vmem:[%s2 + $0x198] sm:$0xff] %vm489, %v451
  %542 = vst.msk [vmem:[%s2 + $0x1a0] sm:$0xff] %vm489, %v454
  %543 = vst.msk [vmem:[%s2 + $0x1a8] sm:$0xff] %vm489, %v457
  %544 = vst.msk [vmem:[%s2 + $0x1b0] sm:$0xff] %vm489, %v460
  %545 = vst.msk [vmem:[%s2 + $0x1b8] sm:$0xff] %vm489, %v463
  %546 = vst.msk [vmem:[%s2 + $0x1c0] sm:$0xff] %vm489, %v466
  %547 = vst.msk [vmem:[%s2 + $0x1c8] sm:$0xff] %vm489, %v469
  %548 = vst.msk [vmem:[%s2 + $0x1d0] sm:$0xff] %vm489, %v472
  %549 = vst.msk [vmem:[%s2 + $0x1d8] sm:$0xff] %vm489, %v475
  %550 = vst.msk [vmem:[%s2 + $0x1e0] sm:$0xff] %vm489, %v478
  %551 = vst.msk [vmem:[%s2 + $0x1e8] sm:$0xff] %vm489, %v481
  %552 = vst.msk [vmem:[%s2 + $0x1f0] sm:$0xff] %vm489, %v484
  %553 = vst.msk [vmem:[%s2 + $0x1f8] sm:$0xff] %vm489, %v487
  %v554 = vld [vmem:[%s3] sm:$0x1]
  %v555 = vsel %vm489, %v298, 0.0
  %v556 = vsel %vm489, %v301, 0.0
  %v557 = vadd.f32 %v555, %v556
  %v558 = vsel %vm489, %v304, 0.0
  %v559 = vadd.f32 %v557, %v558
  %v560 = vsel %vm489, %v307, 0.0
  %v561 = vadd.f32 %v559, %v560
  %v562 = vsel %vm489, %v310, 0.0
  %v563 = vadd.f32 %v561, %v562
  %v564 = vsel %vm489, %v313, 0.0
  %v565 = vadd.f32 %v563, %v564
  %v566 = vsel %vm489, %v316, 0.0
  %v567 = vadd.f32 %v565, %v566
  %v568 = vsel %vm489, %v319, 0.0
  %v569 = vadd.f32 %v567, %v568
  %v570 = vsel %vm489, %v322, 0.0
  %v571 = vadd.f32 %v569, %v570
  %v572 = vsel %vm489, %v325, 0.0
  %v573 = vadd.f32 %v571, %v572
  %v574 = vsel %vm489, %v328, 0.0
  %v575 = vadd.f32 %v573, %v574
  %v576 = vsel %vm489, %v331, 0.0
  %v577 = vadd.f32 %v575, %v576
  %v578 = vsel %vm489, %v334, 0.0
  %v579 = vadd.f32 %v577, %v578
  %v580 = vsel %vm489, %v337, 0.0
  %v581 = vadd.f32 %v579, %v580
  %v582 = vsel %vm489, %v340, 0.0
  %v583 = vadd.f32 %v581, %v582
  %v584 = vsel %vm489, %v343, 0.0
  %v585 = vadd.f32 %v583, %v584
  %v586 = vsel %vm489, %v346, 0.0
  %v587 = vadd.f32 %v585, %v586
  %v588 = vsel %vm489, %v349, 0.0
  %v589 = vadd.f32 %v587, %v588
  %v590 = vsel %vm489, %v352, 0.0
  %v591 = vadd.f32 %v589, %v590
  %v592 = vsel %vm489, %v355, 0.0
  %v593 = vadd.f32 %v591, %v592
  %v594 = vsel %vm489, %v358, 0.0
  %v595 = vadd.f32 %v593, %v594
  %v596 = vsel %vm489, %v361, 0.0
  %v597 = vadd.f32 %v595, %v596
  %v598 = vsel %vm489, %v364, 0.0
  %v599 = vadd.f32 %v597, %v598
  %v600 = vsel %vm489, %v367, 0.0
  %v601 = vadd.f32 %v599, %v600
  %v602 = vsel %vm489, %v370, 0.0
  %v603 = vadd.f32 %v601, %v602
  %v604 = vsel %vm489, %v373, 0.0
  %v605 = vadd.f32 %v603, %v604
  %v606 = vsel %vm489, %v376, 0.0
  %v607 = vadd.f32 %v605, %v606
  %v608 = vsel %vm489, %v379, 0.0
  %v609 = vadd.f32 %v607, %v608
  %v610 = vsel %vm489, %v382, 0.0
  %v611 = vadd.f32 %v609, %v610
  %v612 = vsel %vm489, %v385, 0.0
  %v613 = vadd.f32 %v611, %v612
  %v614 = vsel %vm489, %v388, 0.0
  %v615 = vadd.f32 %v613, %v614
  %v616 = vsel %vm489, %v391, 0.0
  %v617 = vadd.f32 %v615, %v616
  %v618 = vsel %vm489, %v394, 0.0
  %v619 = vadd.f32 %v617, %v618
  %v620 = vsel %vm489, %v397, 0.0
  %v621 = vadd.f32 %v619, %v620
  %v622 = vsel %vm489, %v400, 0.0
  %v623 = vadd.f32 %v621, %v622
  %v624 = vsel %vm489, %v403, 0.0
  %v625 = vadd.f32 %v623, %v624
  %v626 = vsel %vm489, %v406, 0.0
  %v627 = vadd.f32 %v625, %v626
  %v628 = vsel %vm489, %v409, 0.0
  %v629 = vadd.f32 %v627, %v628
  %v630 = vsel %vm489, %v412, 0.0
  %v631 = vadd.f32 %v629, %v630
  %v632 = vsel %vm489, %v415, 0.0
  %v633 = vadd.f32 %v631, %v632
  %v634 = vsel %vm489, %v418, 0.0
  %v635 = vadd.f32 %v633, %v634
  %v636 = vsel %vm489, %v421, 0.0
  %v637 = vadd.f32 %v635, %v636
  %v638 = vsel %vm489, %v424, 0.0
  %v639 = vadd.f32 %v637, %v638
  %v640 = vsel %vm489, %v427, 0.0
  %v641 = vadd.f32 %v639, %v640
  %v642 = vsel %vm489, %v430, 0.0
  %v643 = vadd.f32 %v641, %v642
  %v644 = vsel %vm489, %v433, 0.0
  %v645 = vadd.f32 %v643, %v644
  %v646 = vsel %vm489, %v436, 0.0
  %v647 = vadd.f32 %v645, %v646
  %v648 = vsel %vm489, %v439, 0.0
  %v649 = vadd.f32 %v647, %v648
  %v650 = vsel %vm489, %v442, 0.0
  %v651 = vadd.f32 %v649, %v650
  %v652 = vsel %vm489, %v445, 0.0
  %v653 = vadd.f32 %v651, %v652
  %v654 = vsel %vm489, %v448, 0.0
  %v655 = vadd.f32 %v653, %v654
  %v656 = vsel %vm489, %v451, 0.0
  %v657 = vadd.f32 %v655, %v656
  %v658 = vsel %vm489, %v454, 0.0
  %v659 = vadd.f32 %v657, %v658
  %v660 = vsel %vm489, %v457, 0.0
  %v661 = vadd.f32 %v659, %v660
  %v662 = vsel %vm489, %v460, 0.0
  %v663 = vadd.f32 %v661, %v662
  %v664 = vsel %vm489, %v463, 0.0
  %v665 = vadd.f32 %v663, %v664
  %v666 = vsel %vm489, %v466, 0.0
  %v667 = vadd.f32 %v665, %v666
  %v668 = vsel %vm489, %v469, 0.0
  %v669 = vadd.f32 %v667, %v668
  %v670 = vsel %vm489, %v472, 0.0
  %v671 = vadd.f32 %v669, %v670
  %v672 = vsel %vm489, %v475, 0.0
  %v673 = vadd.f32 %v671, %v672
  %v674 = vsel %vm489, %v478, 0.0
  %v675 = vadd.f32 %v673, %v674
  %v676 = vsel %vm489, %v481, 0.0
  %v677 = vadd.f32 %v675, %v676
  %v678 = vsel %vm489, %v484, 0.0
  %v679 = vadd.f32 %v677, %v678
  %v680 = vsel %vm489, %v487, 0.0
  %v681 = vadd.f32 %v679, %v680
  %v682 = vrot.slane %v681, 4
  %v683 = vadd.f32 %v681, %v682
  %v684 = vrot.slane %v683, 2
  %v685 = vadd.f32 %v683, %v684
  %v686 = vrot.slane %v685, 1
  %v687 = vadd.f32 %v685, %v686
  %v688 = vadd.f32 %v554, %v687
  %vm689 = vcmask 24576
  %690 = vst.msk [vmem:[%s3] sm:$0x1] %vm689, %v688
  %v691 = vld [vmem:[%s4] sm:$0x1]
  %v692 = vmul.f32 %v298, %v298
  %v693 = vmul.f32 %v301, %v301
  %v694 = vmul.f32 %v304, %v304
  %v695 = vmul.f32 %v307, %v307
  %v696 = vmul.f32 %v310, %v310
  %v697 = vmul.f32 %v313, %v313
  %v698 = vmul.f32 %v316, %v316
  %v699 = vmul.f32 %v319, %v319
  %v700 = vmul.f32 %v322, %v322
  %v701 = vmul.f32 %v325, %v325
  %v702 = vmul.f32 %v328, %v328
  %v703 = vmul.f32 %v331, %v331
  %v704 = vmul.f32 %v334, %v334
  %v705 = vmul.f32 %v337, %v337
  %v706 = vmul.f32 %v340, %v340
  %v707 = vmul.f32 %v343, %v343
  %v708 = vmul.f32 %v346, %v346
  %v709 = vmul.f32 %v349, %v349
  %v710 = vmul.f32 %v352, %v352
  %v711 = vmul.f32 %v355, %v355
  %v712 = vmul.f32 %v358, %v358
  %v713 = vmul.f32 %v361, %v361
  %v714 = vmul.f32 %v364, %v364
  %v715 = vmul.f32 %v367, %v367
  %v716 = vmul.f32 %v370, %v370
  %v717 = vmul.f32 %v373, %v373
  %v718 = vmul.f32 %v376, %v376
  %v719 = vmul.f32 %v379, %v379
  %v720 = vmul.f32 %v382, %v382
  %v721 = vmul.f32 %v385, %v385
  %v722 = vmul.f32 %v388, %v388
  %v723 = vmul.f32 %v391, %v391
  %v724 = vmul.f32 %v394, %v394
  %v725 = vmul.f32 %v397, %v397
  %v726 = vmul.f32 %v400, %v400
  %v727 = vmul.f32 %v403, %v403
  %v728 = vmul.f32 %v406, %v406
  %v729 = vmul.f32 %v409, %v409
  %v730 = vmul.f32 %v412, %v412
  %v731 = vmul.f32 %v415, %v415
  %v732 = vmul.f32 %v418, %v418
  %v733 = vmul.f32 %v421, %v421
  %v734 = vmul.f32 %v424, %v424
  %v735 = vmul.f32 %v427, %v427
  %v736 = vmul.f32 %v430, %v430
  %v737 = vmul.f32 %v433, %v433
  %v738 = vmul.f32 %v436, %v436
  %v739 = vmul.f32 %v439, %v439
  %v740 = vmul.f32 %v442, %v442
  %v741 = vmul.f32 %v445, %v445
  %v742 = vmul.f32 %v448, %v448
  %v743 = vmul.f32 %v451, %v451
  %v744 = vmul.f32 %v454, %v454
  %v745 = vmul.f32 %v457, %v457
  %v746 = vmul.f32 %v460, %v460
  %v747 = vmul.f32 %v463, %v463
  %v748 = vmul.f32 %v466, %v466
  %v749 = vmul.f32 %v469, %v469
  %v750 = vmul.f32 %v472, %v472
  %v751 = vmul.f32 %v475, %v475
  %v752 = vmul.f32 %v478, %v478
  %v753 = vmul.f32 %v481, %v481
  %v754 = vmul.f32 %v484, %v484
  %v755 = vmul.f32 %v487, %v487
  %v756 = vsel %vm489, %v692, 0.0
  %v757 = vsel %vm489, %v693, 0.0
  %v758 = vadd.f32 %v756, %v757
  %v759 = vsel %vm489, %v694, 0.0
  %v760 = vadd.f32 %v758, %v759
  %v761 = vsel %vm489, %v695, 0.0
  %v762 = vadd.f32 %v760, %v761
  %v763 = vsel %vm489, %v696, 0.0
  %v764 = vadd.f32 %v762, %v763
  %v765 = vsel %vm489, %v697, 0.0
  %v766 = vadd.f32 %v764, %v765
  %v767 = vsel %vm489, %v698, 0.0
  %v768 = vadd.f32 %v766, %v767
  %v769 = vsel %vm489, %v699, 0.0
  %v770 = vadd.f32 %v768, %v769
  %v771 = vsel %vm489, %v700, 0.0
  %v772 = vadd.f32 %v770, %v771
  %v773 = vsel %vm489, %v701, 0.0
  %v774 = vadd.f32 %v772, %v773
  %v775 = vsel %vm489, %v702, 0.0
  %v776 = vadd.f32 %v774, %v775
  %v777 = vsel %vm489, %v703, 0.0
  %v778 = vadd.f32 %v776, %v777
  %v779 = vsel %vm489, %v704, 0.0
  %v780 = vadd.f32 %v778, %v779
  %v781 = vsel %vm489, %v705, 0.0
  %v782 = vadd.f32 %v780, %v781
  %v783 = vsel %vm489, %v706, 0.0
  %v784 = vadd.f32 %v782, %v783
  %v785 = vsel %vm489, %v707, 0.0
  %v786 = vadd.f32 %v784, %v785
  %v787 = vsel %vm489, %v708, 0.0
  %v788 = vadd.f32 %v786, %v787
  %v789 = vsel %vm489, %v709, 0.0
  %v790 = vadd.f32 %v788, %v789
  %v791 = vsel %vm489, %v710, 0.0
  %v792 = vadd.f32 %v790, %v791
  %v793 = vsel %vm489, %v711, 0.0
  %v794 = vadd.f32 %v792, %v793
  %v795 = vsel %vm489, %v712, 0.0
  %v796 = vadd.f32 %v794, %v795
  %v797 = vsel %vm489, %v713, 0.0
  %v798 = vadd.f32 %v796, %v797
  %v799 = vsel %vm489, %v714, 0.0
  %v800 = vadd.f32 %v798, %v799
  %v801 = vsel %vm489, %v715, 0.0
  %v802 = vadd.f32 %v800, %v801
  %v803 = vsel %vm489, %v716, 0.0
  %v804 = vadd.f32 %v802, %v803
  %v805 = vsel %vm489, %v717, 0.0
  %v806 = vadd.f32 %v804, %v805
  %v807 = vsel %vm489, %v718, 0.0
  %v808 = vadd.f32 %v806, %v807
  %v809 = vsel %vm489, %v719, 0.0
  %v810 = vadd.f32 %v808, %v809
  %v811 = vsel %vm489, %v720, 0.0
  %v812 = vadd.f32 %v810, %v811
  %v813 = vsel %vm489, %v721, 0.0
  %v814 = vadd.f32 %v812, %v813
  %v815 = vsel %vm489, %v722, 0.0
  %v816 = vadd.f32 %v814, %v815
  %v817 = vsel %vm489, %v723, 0.0
  %v818 = vadd.f32 %v816, %v817
  %v819 = vsel %vm489, %v724, 0.0
  %v820 = vadd.f32 %v818, %v819
  %v821 = vsel %vm489, %v725, 0.0
  %v822 = vadd.f32 %v820, %v821
  %v823 = vsel %vm489, %v726, 0.0
  %v824 = vadd.f32 %v822, %v823
  %v825 = vsel %vm489, %v727, 0.0
  %v826 = vadd.f32 %v824, %v825
  %v827 = vsel %vm489, %v728, 0.0
  %v828 = vadd.f32 %v826, %v827
  %v829 = vsel %vm489, %v729, 0.0
  %v830 = vadd.f32 %v828, %v829
  %v831 = vsel %vm489, %v730, 0.0
  %v832 = vadd.f32 %v830, %v831
  %v833 = vsel %vm489, %v731, 0.0
  %v834 = vadd.f32 %v832, %v833
  %v835 = vsel %vm489, %v732, 0.0
  %v836 = vadd.f32 %v834, %v835
  %v837 = vsel %vm489, %v733, 0.0
  %v838 = vadd.f32 %v836, %v837
  %v839 = vsel %vm489, %v734, 0.0
  %v840 = vadd.f32 %v838, %v839
  %v841 = vsel %vm489, %v735, 0.0
  %v842 = vadd.f32 %v840, %v841
  %v843 = vsel %vm489, %v736, 0.0
  %v844 = vadd.f32 %v842, %v843
  %v845 = vsel %vm489, %v737, 0.0
  %v846 = vadd.f32 %v844, %v845
  %v847 = vsel %vm489, %v738, 0.0
  %v848 = vadd.f32 %v846, %v847
  %v849 = vsel %vm489, %v739, 0.0
  %v850 = vadd.f32 %v848, %v849
  %v851 = vsel %vm489, %v740, 0.0
  %v852 = vadd.f32 %v850, %v851
  %v853 = vsel %vm489, %v741, 0.0
  %v854 = vadd.f32 %v852, %v853
  %v855 = vsel %vm489, %v742, 0.0
  %v856 = vadd.f32 %v854, %v855
  %v857 = vsel %vm489, %v743, 0.0
  %v858 = vadd.f32 %v856, %v857
  %v859 = vsel %vm489, %v744, 0.0
  %v860 = vadd.f32 %v858, %v859
  %v861 = vsel %vm489, %v745, 0.0
  %v862 = vadd.f32 %v860, %v861
  %v863 = vsel %vm489, %v746, 0.0
  %v864 = vadd.f32 %v862, %v863
  %v865 = vsel %vm489, %v747, 0.0
  %v866 = vadd.f32 %v864, %v865
  %v867 = vsel %vm489, %v748, 0.0
  %v868 = vadd.f32 %v866, %v867
  %v869 = vsel %vm489, %v749, 0.0
  %v870 = vadd.f32 %v868, %v869
  %v871 = vsel %vm489, %v750, 0.0
  %v872 = vadd.f32 %v870, %v871
  %v873 = vsel %vm489, %v751, 0.0
  %v874 = vadd.f32 %v872, %v873
  %v875 = vsel %vm489, %v752, 0.0
  %v876 = vadd.f32 %v874, %v875
  %v877 = vsel %vm489, %v753, 0.0
  %v878 = vadd.f32 %v876, %v877
  %v879 = vsel %vm489, %v754, 0.0
  %v880 = vadd.f32 %v878, %v879
  %v881 = vsel %vm489, %v755, 0.0
  %v882 = vadd.f32 %v880, %v881
  %v883 = vrot.slane %v882, 4
  %v884 = vadd.f32 %v882, %v883
  %v885 = vrot.slane %v884, 2
  %v886 = vadd.f32 %v884, %v885
  %v887 = vrot.slane %v886, 1
  %v888 = vadd.f32 %v886, %v887
  %v889 = vadd.f32 %v691, %v888
  %890 = vst.msk [vmem:[%s4] sm:$0x1] %vm689, %v889
  // Predicated region
  $region14: #{block_forward.4} parent=0 // pred_check
    _
  $region15: #{block_forward.4} parent=0 // pred_check_branch
    %892 = sbr.rel (0) target = $region17
  $region16: #{block_forward.4} parent=0 // pred_region
    _
  $region17: #{block_forward.4} parent=0 // pred_fallthru
    _
  // Predicated region
  $region18: #{block_forward.4} parent=0 // pred_check
    _
  $region19: #{block_forward.4} parent=0 // pred_check_branch
    %894 = sbr.rel (0) target = $region21
  $region20: #{block_forward.4} parent=0 // pred_region
    _
  $region21: #{block_forward.4} parent=0 // pred_fallthru
    _
  // Predicated region
  $region22: #{block_forward.4} parent=0 // pred_check
    _
  $region23: #{block_forward.4} parent=0 // pred_check_branch
    %896 = sbr.rel (0) target = $region25
  $region24: #{block_forward.4} parent=0 // pred_region
    _
  $region25: #{block_forward.4} parent=0 // pred_fallthru
    _
  // Predicated region
  $region26: #{block_forward.4} parent=0 // pred_check
    _
  $region27: #{block_forward.4} parent=0 // pred_check_branch
    %898 = sbr.rel (0) target = $region29
  $region28: #{block_forward.4} parent=0 // pred_region
    _
  $region29: #{block_forward.4} parent=0 // pred_fallthru
    _
  // Predicated region
  $region30: #{block_forward.4} parent=0 // pred_check
    _
  $region31: #{block_forward.4} parent=0 // pred_check_branch
    %900 = sbr.rel (0) target = $region33
  $region32: #{block_forward.4} parent=0 // pred_region
    _
  $region33: #{block_forward.4} parent=0 // pred_fallthru
    _
  // Predicated region
  $region34: #{block_forward.4} parent=0 // pred_check
    _
  $region35: #{block_forward.4} parent=0 // pred_check_branch
    %902 = sbr.rel (0) target = $region37
  $region36: #{block_forward.4} parent=0 // pred_region
    _
  $region37: #{block_forward.4} parent=0 // pred_fallthru
    _

// kernel: block_forward.6
$region0: #{block_forward.6}
  #allocation0 [shape = 'u32[]', space=smem, size = 0x4, offset = 0x4, fixed_abs, tag = 'smem constant byte address 0x4 - core index']
  #allocation1 [shape = 'u32[72,128]{1,0:T(1,128)}', space=vmem, size = 0x9000, scoped, tag = 'internal scratch']
  %s0 = inlined_call_operand.vmem [shape: f32[512,4], index: 0, kind: input, shape index: {}]
  %s1 = inlined_call_operand.vmem [shape: f32[1,4], index: 1, kind: input, shape index: {}]
  %s2 = inlined_call_operand.vmem [shape: f32[1,4], index: 2, kind: input, shape index: {}]
  %s3 = inlined_call_operand.vmem [shape: f32[4,16], index: 3, kind: input, shape index: {}]
  %s4 = inlined_call_operand.vmem [shape: f32[512,16], index: 4, kind: output, shape index: {0}]
  %s5 = inlined_call_operand.vmem [shape: f32[1,16], index: 5, kind: output, shape index: {1}]
  %s6 = inlined_call_operand.vmem [shape: f32[1,16], index: 6, kind: output, shape index: {2}]
  %7 = xla_tuple %s4, %s5, %s6
  %s8 = sld [smem:[#allocation0]]
  $region46: #{block_forward.6} parent=0
    _
  %s10 = ssub.s32 1, %s8
  %s11 = scalar_select 0, %s10, %s8
  // Predicated region
  $region2: #{block_forward.6} parent=0 // pred_check
    _
  $region3: #{block_forward.6} parent=0 // pred_check_branch
    %13 = sbr.rel (0) target = $region5
  $region4: #{block_forward.6} parent=0 // pred_region
    _
  $region5: #{block_forward.6} parent=0 // pred_fallthru
    _
  // Predicated region
  $region6: #{block_forward.6} parent=0 // pred_check
    _
  $region7: #{block_forward.6} parent=0 // pred_check_branch
    %15 = sbr.rel (0) target = $region9
  $region8: #{block_forward.6} parent=0 // pred_region
    _
  $region9: #{block_forward.6} parent=0 // pred_fallthru
    _
  // Predicated region
  $region10: #{block_forward.6} parent=0 // pred_check
    _
  $region11: #{block_forward.6} parent=0 // pred_check_branch
    %17 = sbr.rel (0) target = $region13
  $region12: #{block_forward.6} parent=0 // pred_region
    _
  $region13: #{block_forward.6} parent=0 // pred_fallthru
    _
  // Predicated region
  $region14: #{block_forward.6} parent=0 // pred_check
    _
  $region15: #{block_forward.6} parent=0 // pred_check_branch
    %19 = sbr.rel (0) target = $region17
  $region16: #{block_forward.6} parent=0 // pred_region
    _
  $region17: #{block_forward.6} parent=0 // pred_fallthru
    _
  %p20 = scmp.eq.s32.totalorder 0, 0
  // Predicated region
  $region18: #{block_forward.6} parent=0 // pred_check
    %p21 = pneg %p20
  $region19: #{block_forward.6} parent=0 // pred_check_branch
    %23 = sbr.rel (%p21) target = $region21
  $region20: #{block_forward.6} parent=0 // pred_region
    %vm24 = vcmask 122880
    %25 = vst.msk [vmem:[%s5] sm:$0x1] %vm24, 0.0
    %26 = vst.msk [vmem:[%s6] sm:$0x1] %vm24, 0.0
  $region21: #{block_forward.6} parent=0 // pred_fallthru
    _
  %v27 = vld [vmem:[%s0] sm:$0xff]
  %v28 = vld [vmem:[%s0 + $0x8] sm:$0xff]
  %v29 = vld [vmem:[%s0 + $0x10] sm:$0xff]
  %v30 = vld [vmem:[%s0 + $0x18] sm:$0xff]
  %v31 = vld [vmem:[%s0 + $0x20] sm:$0xff]
  %v32 = vld [vmem:[%s0 + $0x28] sm:$0xff]
  %v33 = vld [vmem:[%s0 + $0x30] sm:$0xff]
  %v34 = vld [vmem:[%s0 + $0x38] sm:$0xff]
  %v35 = vld [vmem:[%s0 + $0x40] sm:$0xff]
  %v36 = vld [vmem:[%s0 + $0x48] sm:$0xff]
  %v37 = vld [vmem:[%s0 + $0x50] sm:$0xff]
  %v38 = vld [vmem:[%s0 + $0x58] sm:$0xff]
  %v39 = vld [vmem:[%s0 + $0x60] sm:$0xff]
  %v40 = vld [vmem:[%s0 + $0x68] sm:$0xff]
  %v41 = vld [vmem:[%s0 + $0x70] sm:$0xff]
  %v42 = vld [vmem:[%s0 + $0x78] sm:$0xff]
  %v43 = vld [vmem:[%s0 + $0x80] sm:$0xff]
  %v44 = vld [vmem:[%s0 + $0x88] sm:$0xff]
  %v45 = vld [vmem:[%s0 + $0x90] sm:$0xff]
  %v46 = vld [vmem:[%s0 + $0x98] sm:$0xff]
  %v47 = vld [vmem:[%s0 + $0xa0] sm:$0xff]
  %v48 = vld [vmem:[%s0 + $0xa8] sm:$0xff]
  %v49 = vld [vmem:[%s0 + $0xb0] sm:$0xff]
  %v50 = vld [vmem:[%s0 + $0xb8] sm:$0xff]
  %v51 = vld [vmem:[%s0 + $0xc0] sm:$0xff]
  %v52 = vld [vmem:[%s0 + $0xc8] sm:$0xff]
  %v53 = vld [vmem:[%s0 + $0xd0] sm:$0xff]
  %v54 = vld [vmem:[%s0 + $0xd8] sm:$0xff]
  %v55 = vld [vmem:[%s0 + $0xe0] sm:$0xff]
  %v56 = vld [vmem:[%s0 + $0xe8] sm:$0xff]
  %v57 = vld [vmem:[%s0 + $0xf0] sm:$0xff]
  %v58 = vld [vmem:[%s0 + $0xf8] sm:$0xff]
  %v59 = vld [vmem:[%s0 + $0x100] sm:$0xff]
  %v60 = vld [vmem:[%s0 + $0x108] sm:$0xff]
  %v61 = vld [vmem:[%s0 + $0x110] sm:$0xff]
  %v62 = vld [vmem:[%s0 + $0x118] sm:$0xff]
  %v63 = vld [vmem:[%s0 + $0x120] sm:$0xff]
  %v64 = vld [vmem:[%s0 + $0x128] sm:$0xff]
  %v65 = vld [vmem:[%s0 + $0x130] sm:$0xff]
  %v66 = vld [vmem:[%s0 + $0x138] sm:$0xff]
  %v67 = vld [vmem:[%s0 + $0x140] sm:$0xff]
  %v68 = vld [vmem:[%s0 + $0x148] sm:$0xff]
  %v69 = vld [vmem:[%s0 + $0x150] sm:$0xff]
  %v70 = vld [vmem:[%s0 + $0x158] sm:$0xff]
  %v71 = vld [vmem:[%s0 + $0x160] sm:$0xff]
  %v72 = vld [vmem:[%s0 + $0x168] sm:$0xff]
  %v73 = vld [vmem:[%s0 + $0x170] sm:$0xff]
  %v74 = vld [vmem:[%s0 + $0x178] sm:$0xff]
  %v75 = vld [vmem:[%s0 + $0x180] sm:$0xff]
  %v76 = vld [vmem:[%s0 + $0x188] sm:$0xff]
  %v77 = vld [vmem:[%s0 + $0x190] sm:$0xff]
  %v78 = vld [vmem:[%s0 + $0x198] sm:$0xff]
  %v79 = vld [vmem:[%s0 + $0x1a0] sm:$0xff]
  %v80 = vld [vmem:[%s0 + $0x1a8] sm:$0xff]
  %v81 = vld [vmem:[%s0 + $0x1b0] sm:$0xff]
  %v82 = vld [vmem:[%s0 + $0x1b8] sm:$0xff]
  %v83 = vld [vmem:[%s0 + $0x1c0] sm:$0xff]
  %v84 = vld [vmem:[%s0 + $0x1c8] sm:$0xff]
  %v85 = vld [vmem:[%s0 + $0x1d0] sm:$0xff]
  %v86 = vld [vmem:[%s0 + $0x1d8] sm:$0xff]
  %v87 = vld [vmem:[%s0 + $0x1e0] sm:$0xff]
  %v88 = vld [vmem:[%s0 + $0x1e8] sm:$0xff]
  %v89 = vld [vmem:[%s0 + $0x1f0] sm:$0xff]
  %v90 = vld [vmem:[%s0 + $0x1f8] sm:$0xff]
  %v91 = vld [vmem:[%s1] sm:$0x1]
  %v93 = vperm.slane %v91, 0
  %v95 = vmul.f32 %v27, %v93
  %v96 = vmul.f32 %v28, %v93
  %v97 = vmul.f32 %v29, %v93
  %v98 = vmul.f32 %v30, %v93
  %v99 = vmul.f32 %v31, %v93
  %v100 = vmul.f32 %v32, %v93
  %v101 = vmul.f32 %v33, %v93
  %v102 = vmul.f32 %v34, %v93
  %v103 = vmul.f32 %v35, %v93
  %v104 = vmul.f32 %v36, %v93
  %v105 = vmul.f32 %v37, %v93
  %v106 = vmul.f32 %v38, %v93
  %v107 = vmul.f32 %v39, %v93
  %v108 = vmul.f32 %v40, %v93
  %v109 = vmul.f32 %v41, %v93
  %v110 = vmul.f32 %v42, %v93
  %v111 = vmul.f32 %v43, %v93
  %v112 = vmul.f32 %v44, %v93
  %v113 = vmul.f32 %v45, %v93
  %v114 = vmul.f32 %v46, %v93
  %v115 = vmul.f32 %v47, %v93
  %v116 = vmul.f32 %v48, %v93
  %v117 = vmul.f32 %v49, %v93
  %v118 = vmul.f32 %v50, %v93
  %v119 = vmul.f32 %v51, %v93
  %v120 = vmul.f32 %v52, %v93
  %v121 = vmul.f32 %v53, %v93
  %v122 = vmul.f32 %v54, %v93
  %v123 = vmul.f32 %v55, %v93
  %v124 = vmul.f32 %v56, %v93
  %v125 = vmul.f32 %v57, %v93
  %v126 = vmul.f32 %v58, %v93
  %v127 = vmul.f32 %v59, %v93
  %v128 = vmul.f32 %v60, %v93
  %v129 = vmul.f32 %v61, %v93
  %v130 = vmul.f32 %v62, %v93
  %v131 = vmul.f32 %v63, %v93
  %v132 = vmul.f32 %v64, %v93
  %v133 = vmul.f32 %v65, %v93
  %v134 = vmul.f32 %v66, %v93
  %v135 = vmul.f32 %v67, %v93
  %v136 = vmul.f32 %v68, %v93
  %v137 = vmul.f32 %v69, %v93
  %v138 = vmul.f32 %v70, %v93
  %v139 = vmul.f32 %v71, %v93
  %v140 = vmul.f32 %v72, %v93
  %v141 = vmul.f32 %v73, %v93
  %v142 = vmul.f32 %v74, %v93
  %v143 = vmul.f32 %v75, %v93
  %v144 = vmul.f32 %v76, %v93
  %v145 = vmul.f32 %v77, %v93
  %v146 = vmul.f32 %v78, %v93
  %v147 = vmul.f32 %v79, %v93
  %v148 = vmul.f32 %v80, %v93
  %v149 = vmul.f32 %v81, %v93
  %v150 = vmul.f32 %v82, %v93
  %v151 = vmul.f32 %v83, %v93
  %v152 = vmul.f32 %v84, %v93
  %v153 = vmul.f32 %v85, %v93
  %v154 = vmul.f32 %v86, %v93
  %v155 = vmul.f32 %v87, %v93
  %v156 = vmul.f32 %v88, %v93
  %v157 = vmul.f32 %v89, %v93
  %v158 = vmul.f32 %v90, %v93
  %v159 = vld [vmem:[%s2] sm:$0x1]
  %v161 = vperm.slane %v159, 0
  %v163 = vadd.f32 %v95, %v161
  %v164 = vadd.f32 %v96, %v161
  %v165 = vadd.f32 %v97, %v161
  %v166 = vadd.f32 %v98, %v161
  %v167 = vadd.f32 %v99, %v161
  %v168 = vadd.f32 %v100, %v161
  %v169 = vadd.f32 %v101, %v161
  %v170 = vadd.f32 %v102, %v161
  %v171 = vadd.f32 %v103, %v161
  %v172 = vadd.f32 %v104, %v161
  %v173 = vadd.f32 %v105, %v161
  %v174 = vadd.f32 %v106, %v161
  %v175 = vadd.f32 %v107, %v161
  %v176 = vadd.f32 %v108, %v161
  %v177 = vadd.f32 %v109, %v161
  %v178 = vadd.f32 %v110, %v161
  %v179 = vadd.f32 %v111, %v161
  %v180 = vadd.f32 %v112, %v161
  %v181 = vadd.f32 %v113, %v161
  %v182 = vadd.f32 %v114, %v161
  %v183 = vadd.f32 %v115, %v161
  %v184 = vadd.f32 %v116, %v161
  %v185 = vadd.f32 %v117, %v161
  %v186 = vadd.f32 %v118, %v161
  %v187 = vadd.f32 %v119, %v161
  %v188 = vadd.f32 %v120, %v161
  %v189 = vadd.f32 %v121, %v161
  %v190 = vadd.f32 %v122, %v161
  %v191 = vadd.f32 %v123, %v161
  %v192 = vadd.f32 %v124, %v161
  %v193 = vadd.f32 %v125, %v161
  %v194 = vadd.f32 %v126, %v161
  %v195 = vadd.f32 %v127, %v161
  %v196 = vadd.f32 %v128, %v161
  %v197 = vadd.f32 %v129, %v161
  %v198 = vadd.f32 %v130, %v161
  %v199 = vadd.f32 %v131, %v161
  %v200 = vadd.f32 %v132, %v161
  %v201 = vadd.f32 %v133, %v161
  %v202 = vadd.f32 %v134, %v161
  %v203 = vadd.f32 %v135, %v161
  %v204 = vadd.f32 %v136, %v161
  %v205 = vadd.f32 %v137, %v161
  %v206 = vadd.f32 %v138, %v161
  %v207 = vadd.f32 %v139, %v161
  %v208 = vadd.f32 %v140, %v161
  %v209 = vadd.f32 %v141, %v161
  %v210 = vadd.f32 %v142, %v161
  %v211 = vadd.f32 %v143, %v161
  %v212 = vadd.f32 %v144, %v161
  %v213 = vadd.f32 %v145, %v161
  %v214 = vadd.f32 %v146, %v161
  %v215 = vadd.f32 %v147, %v161
  %v216 = vadd.f32 %v148, %v161
  %v217 = vadd.f32 %v149, %v161
  %v218 = vadd.f32 %v150, %v161
  %v219 = vadd.f32 %v151, %v161
  %v220 = vadd.f32 %v152, %v161
  %v221 = vadd.f32 %v153, %v161
  %v222 = vadd.f32 %v154, %v161
  %v223 = vadd.f32 %v155, %v161
  %v224 = vadd.f32 %v156, %v161
  %v225 = vadd.f32 %v157, %v161
  %v226 = vadd.f32 %v158, %v161
  %v227 = vmax.f32 %v163, 0.0
  %v228 = vmax.f32 %v164, 0.0
  %v229 = vmax.f32 %v165, 0.0
  %v230 = vmax.f32 %v166, 0.0
  %v231 = vmax.f32 %v167, 0.0
  %v232 = vmax.f32 %v168, 0.0
  %v233 = vmax.f32 %v169, 0.0
  %v234 = vmax.f32 %v170, 0.0
  %v235 = vmax.f32 %v171, 0.0
  %v236 = vmax.f32 %v172, 0.0
  %v237 = vmax.f32 %v173, 0.0
  %v238 = vmax.f32 %v174, 0.0
  %v239 = vmax.f32 %v175, 0.0
  %v240 = vmax.f32 %v176, 0.0
  %v241 = vmax.f32 %v177, 0.0
  %v242 = vmax.f32 %v178, 0.0
  %v243 = vmax.f32 %v179, 0.0
  %v244 = vmax.f32 %v180, 0.0
  %v245 = vmax.f32 %v181, 0.0
  %v246 = vmax.f32 %v182, 0.0
  %v247 = vmax.f32 %v183, 0.0
  %v248 = vmax.f32 %v184, 0.0
  %v249 = vmax.f32 %v185, 0.0
  %v250 = vmax.f32 %v186, 0.0
  %v251 = vmax.f32 %v187, 0.0
  %v252 = vmax.f32 %v188, 0.0
  %v253 = vmax.f32 %v189, 0.0
  %v254 = vmax.f32 %v190, 0.0
  %v255 = vmax.f32 %v191, 0.0
  %v256 = vmax.f32 %v192, 0.0
  %v257 = vmax.f32 %v193, 0.0
  %v258 = vmax.f32 %v194, 0.0
  %v259 = vmax.f32 %v195, 0.0
  %v260 = vmax.f32 %v196, 0.0
  %v261 = vmax.f32 %v197, 0.0
  %v262 = vmax.f32 %v198, 0.0
  %v263 = vmax.f32 %v199, 0.0
  %v264 = vmax.f32 %v200, 0.0
  %v265 = vmax.f32 %v201, 0.0
  %v266 = vmax.f32 %v202, 0.0
  %v267 = vmax.f32 %v203, 0.0
  %v268 = vmax.f32 %v204, 0.0
  %v269 = vmax.f32 %v205, 0.0
  %v270 = vmax.f32 %v206, 0.0
  %v271 = vmax.f32 %v207, 0.0
  %v272 = vmax.f32 %v208, 0.0
  %v273 = vmax.f32 %v209, 0.0
  %v274 = vmax.f32 %v210, 0.0
  %v275 = vmax.f32 %v211, 0.0
  %v276 = vmax.f32 %v212, 0.0
  %v277 = vmax.f32 %v213, 0.0
  %v278 = vmax.f32 %v214, 0.0
  %v279 = vmax.f32 %v215, 0.0
  %v280 = vmax.f32 %v216, 0.0
  %v281 = vmax.f32 %v217, 0.0
  %v282 = vmax.f32 %v218, 0.0
  %v283 = vmax.f32 %v219, 0.0
  %v284 = vmax.f32 %v220, 0.0
  %v285 = vmax.f32 %v221, 0.0
  %v286 = vmax.f32 %v222, 0.0
  %v287 = vmax.f32 %v223, 0.0
  %v288 = vmax.f32 %v224, 0.0
  %v289 = vmax.f32 %v225, 0.0
  %v290 = vmax.f32 %v226, 0.0
  %v291 = vld [vmem:[%s3] sm:$0xf]
  %vm292 = vcmask 31744
  %v294 = vsel %vm292, %v227, 0
  %v297 = vsel %vm292, %v228, 0
  %v300 = vsel %vm292, %v229, 0
  %v303 = vsel %vm292, %v230, 0
  %v306 = vsel %vm292, %v231, 0
  %v309 = vsel %vm292, %v232, 0
  %v312 = vsel %vm292, %v233, 0
  %v315 = vsel %vm292, %v234, 0
  %v318 = vsel %vm292, %v235, 0
  %v321 = vsel %vm292, %v236, 0
  %v324 = vsel %vm292, %v237, 0
  %v327 = vsel %vm292, %v238, 0
  %v330 = vsel %vm292, %v239, 0
  %v333 = vsel %vm292, %v240, 0
  %v336 = vsel %vm292, %v241, 0
  %v339 = vsel %vm292, %v242, 0
  %v342 = vsel %vm292, %v243, 0
  %v345 = vsel %vm292, %v244, 0
  %v348 = vsel %vm292, %v245, 0
  %v351 = vsel %vm292, %v246, 0
  %v354 = vsel %vm292, %v247, 0
  %v357 = vsel %vm292, %v248, 0
  %v360 = vsel %vm292, %v249, 0
  %v363 = vsel %vm292, %v250, 0
  %v366 = vsel %vm292, %v251, 0
  %v369 = vsel %vm292, %v252, 0
  %v372 = vsel %vm292, %v253, 0
  %v375 = vsel %vm292, %v254, 0
  %v378 = vsel %vm292, %v255, 0
  %v381 = vsel %vm292, %v256, 0
  %v384 = vsel %vm292, %v257, 0
  %v387 = vsel %vm292, %v258, 0
  %v390 = vsel %vm292, %v259, 0
  %v393 = vsel %vm292, %v260, 0
  %v396 = vsel %vm292, %v261, 0
  %v399 = vsel %vm292, %v262, 0
  %v402 = vsel %vm292, %v263, 0
  %v405 = vsel %vm292, %v264, 0
  %v408 = vsel %vm292, %v265, 0
  %v411 = vsel %vm292, %v266, 0
  %v414 = vsel %vm292, %v267, 0
  %v417 = vsel %vm292, %v268, 0
  %v420 = vsel %vm292, %v269, 0
  %v423 = vsel %vm292, %v270, 0
  %v426 = vsel %vm292, %v271, 0
  %v429 = vsel %vm292, %v272, 0
  %v432 = vsel %vm292, %v273, 0
  %v435 = vsel %vm292, %v274, 0
  %v438 = vsel %vm292, %v275, 0
  %v441 = vsel %vm292, %v276, 0
  %v444 = vsel %vm292, %v277, 0
  %v447 = vsel %vm292, %v278, 0
  %v450 = vsel %vm292, %v279, 0
  %v453 = vsel %vm292, %v280, 0
  %v456 = vsel %vm292, %v281, 0
  %v459 = vsel %vm292, %v282, 0
  %v462 = vsel %vm292, %v283, 0
  %v465 = vsel %vm292, %v284, 0
  %v468 = vsel %vm292, %v285, 0
  %v471 = vsel %vm292, %v286, 0
  %v474 = vsel %vm292, %v287, 0
  %v477 = vsel %vm292, %v288, 0
  %v480 = vsel %vm292, %v289, 0
  %v483 = vsel %vm292, %v290, 0
  %vm485 = vcmask 1043456
  %v487 = vsel %vm485, %v291, 0
  %489 = vmatpush.msra.mxu0 0.0
  %490 = vmatpush.msra.mxu0 0.0
  %491 = vmatpush.msra.mxu0 0.0
  %492 = vmatpush.msra.mxu0 0.0
  %493 = vmatpush.msra.mxu0 0.0
  %494 = vmatpush.msra.mxu0 0.0
  %495 = vmatpush.msra.mxu0 0.0
  %496 = vmatpush.msra.mxu0 0.0
  %497 = vmatpush.msra.mxu0 0.0
  %498 = vmatpush.msra.mxu0 0.0
  %499 = vmatpush.msra.mxu0 0.0
  %500 = vmatpush.msra.mxu0 0.0
  %501 = vmatpush.msra.mxu0 0.0
  %502 = vmatpush.msra.mxu0 0.0
  %503 = vmatpush.msra.mxu0 0.0
  %504 = vmatpush.msra.mxu0 %v487
  %505 = vmatmul.f32.gmra.mxu0 %v294
  %v506 = vpop.f32.mrf.mxu0
  %v507 = vadd.f32 0.0, %v506
  %508 = vmatmul.f32.gmra.mxu0 %v297
  %v509 = vpop.f32.mrf.mxu0
  %v510 = vadd.f32 0.0, %v509
  %511 = vmatmul.f32.gmra.mxu0 %v300
  %v512 = vpop.f32.mrf.mxu0
  %v513 = vadd.f32 0.0, %v512
  %514 = vmatmul.f32.gmra.mxu0 %v303
  %v515 = vpop.f32.mrf.mxu0
  %v516 = vadd.f32 0.0, %v515
  %517 = vmatmul.f32.gmra.mxu0 %v306
  %v518 = vpop.f32.mrf.mxu0
  %v519 = vadd.f32 0.0, %v518
  %520 = vmatmul.f32.gmra.mxu0 %v309
  %v521 = vpop.f32.mrf.mxu0
  %v522 = vadd.f32 0.0, %v521
  %523 = vmatmul.f32.gmra.mxu0 %v312
  %v524 = vpop.f32.mrf.mxu0
  %v525 = vadd.f32 0.0, %v524
  %526 = vmatmul.f32.gmra.mxu0 %v315
  %v527 = vpop.f32.mrf.mxu0
  %v528 = vadd.f32 0.0, %v527
  %529 = vmatmul.f32.gmra.mxu0 %v318
  %v530 = vpop.f32.mrf.mxu0
  %v531 = vadd.f32 0.0, %v530
  %532 = vmatmul.f32.gmra.mxu0 %v321
  %v533 = vpop.f32.mrf.mxu0
  %v534 = vadd.f32 0.0, %v533
  %535 = vmatmul.f32.gmra.mxu0 %v324
  %v536 = vpop.f32.mrf.mxu0
  %v537 = vadd.f32 0.0, %v536
  %538 = vmatmul.f32.gmra.mxu0 %v327
  %v539 = vpop.f32.mrf.mxu0
  %v540 = vadd.f32 0.0, %v539
  %541 = vmatmul.f32.gmra.mxu0 %v330
  %v542 = vpop.f32.mrf.mxu0
  %v543 = vadd.f32 0.0, %v542
  %544 = vmatmul.f32.gmra.mxu0 %v333
  %v545 = vpop.f32.mrf.mxu0
  %v546 = vadd.f32 0.0, %v545
  %547 = vmatmul.f32.gmra.mxu0 %v336
  %v548 = vpop.f32.mrf.mxu0
  %v549 = vadd.f32 0.0, %v548
  %550 = vmatmul.f32.gmra.mxu0 %v339
  %v551 = vpop.f32.mrf.mxu0
  %v552 = vadd.f32 0.0, %v551
  %553 = vmatmul.f32.gmra.mxu0 %v342
  %v554 = vpop.f32.mrf.mxu0
  %v555 = vadd.f32 0.0, %v554
  %556 = vmatmul.f32.gmra.mxu0 %v345
  %v557 = vpop.f32.mrf.mxu0
  %v558 = vadd.f32 0.0, %v557
  %559 = vmatmul.f32.gmra.mxu0 %v348
  %v560 = vpop.f32.mrf.mxu0
  %v561 = vadd.f32 0.0, %v560
  %562 = vmatmul.f32.gmra.mxu0 %v351
  %v563 = vpop.f32.mrf.mxu0
  %v564 = vadd.f32 0.0, %v563
  %565 = vmatmul.f32.gmra.mxu0 %v354
  %v566 = vpop.f32.mrf.mxu0
  %v567 = vadd.f32 0.0, %v566
  %568 = vmatmul.f32.gmra.mxu0 %v357
  %v569 = vpop.f32.mrf.mxu0
  %v570 = vadd.f32 0.0, %v569
  %571 = vmatmul.f32.gmra.mxu0 %v360
  %v572 = vpop.f32.mrf.mxu0
  %v573 = vadd.f32 0.0, %v572
  %574 = vmatmul.f32.gmra.mxu0 %v363
  %v575 = vpop.f32.mrf.mxu0
  %v576 = vadd.f32 0.0, %v575
  %577 = vmatmul.f32.gmra.mxu0 %v366
  %v578 = vpop.f32.mrf.mxu0
  %v579 = vadd.f32 0.0, %v578
  %580 = vmatmul.f32.gmra.mxu0 %v369
  %v581 = vpop.f32.mrf.mxu0
  %v582 = vadd.f32 0.0, %v581
  %583 = vmatmul.f32.gmra.mxu0 %v372
  %v584 = vpop.f32.mrf.mxu0
  %v585 = vadd.f32 0.0, %v584
  %586 = vmatmul.f32.gmra.mxu0 %v375
  %v587 = vpop.f32.mrf.mxu0
  %v588 = vadd.f32 0.0, %v587
  %589 = vmatmul.f32.gmra.mxu0 %v378
  %v590 = vpop.f32.mrf.mxu0
  %v591 = vadd.f32 0.0, %v590
  %592 = vmatmul.f32.gmra.mxu0 %v381
  %v593 = vpop.f32.mrf.mxu0
  %v594 = vadd.f32 0.0, %v593
  %595 = vmatmul.f32.gmra.mxu0 %v384
  %v596 = vpop.f32.mrf.mxu0
  %v597 = vadd.f32 0.0, %v596
  %598 = vmatmul.f32.gmra.mxu0 %v387
  %v599 = vpop.f32.mrf.mxu0
  %v600 = vadd.f32 0.0, %v599
  %601 = vmatmul.f32.gmra.mxu0 %v390
  %v602 = vpop.f32.mrf.mxu0
  %v603 = vadd.f32 0.0, %v602
  %604 = vmatmul.f32.gmra.mxu0 %v393
  %v605 = vpop.f32.mrf.mxu0
  %v606 = vadd.f32 0.0, %v605
  %607 = vmatmul.f32.gmra.mxu0 %v396
  %v608 = vpop.f32.mrf.mxu0
  %v609 = vadd.f32 0.0, %v608
  %610 = vmatmul.f32.gmra.mxu0 %v399
  %v611 = vpop.f32.mrf.mxu0
  %v612 = vadd.f32 0.0, %v611
  %613 = vmatmul.f32.gmra.mxu0 %v402
  %v614 = vpop.f32.mrf.mxu0
  %v615 = vadd.f32 0.0, %v614
  %616 = vmatmul.f32.gmra.mxu0 %v405
  %v617 = vpop.f32.mrf.mxu0
  %v618 = vadd.f32 0.0, %v617
  %619 = vmatmul.f32.gmra.mxu0 %v408
  %v620 = vpop.f32.mrf.mxu0
  %v621 = vadd.f32 0.0, %v620
  %622 = vmatmul.f32.gmra.mxu0 %v411
  %v623 = vpop.f32.mrf.mxu0
  %v624 = vadd.f32 0.0, %v623
  %625 = vmatmul.f32.gmra.mxu0 %v414
  %v626 = vpop.f32.mrf.mxu0
  %v627 = vadd.f32 0.0, %v626
  %628 = vmatmul.f32.gmra.mxu0 %v417
  %v629 = vpop.f32.mrf.mxu0
  %v630 = vadd.f32 0.0, %v629
  %631 = vmatmul.f32.gmra.mxu0 %v420
  %v632 = vpop.f32.mrf.mxu0
  %v633 = vadd.f32 0.0, %v632
  %634 = vmatmul.f32.gmra.mxu0 %v423
  %v635 = vpop.f32.mrf.mxu0
  %v636 = vadd.f32 0.0, %v635
  %637 = vmatmul.f32.gmra.mxu0 %v426
  %v638 = vpop.f32.mrf.mxu0
  %v639 = vadd.f32 0.0, %v638
  %640 = vmatmul.f32.gmra.mxu0 %v429
  %v641 = vpop.f32.mrf.mxu0
  %v642 = vadd.f32 0.0, %v641
  %643 = vmatmul.f32.gmra.mxu0 %v432
  %v644 = vpop.f32.mrf.mxu0
  %v645 = vadd.f32 0.0, %v644
  %646 = vmatmul.f32.gmra.mxu0 %v435
  %v647 = vpop.f32.mrf.mxu0
  %v648 = vadd.f32 0.0, %v647
  %649 = vmatmul.f32.gmra.mxu0 %v438
  %v650 = vpop.f32.mrf.mxu0
  %v651 = vadd.f32 0.0, %v650
  %652 = vmatmul.f32.gmra.mxu0 %v441
  %v653 = vpop.f32.mrf.mxu0
  %v654 = vadd.f32 0.0, %v653
  %655 = vmatmul.f32.gmra.mxu0 %v444
  %v656 = vpop.f32.mrf.mxu0
  %v657 = vadd.f32 0.0, %v656
  %658 = vmatmul.f32.gmra.mxu0 %v447
  %v659 = vpop.f32.mrf.mxu0
  %v660 = vadd.f32 0.0, %v659
  %661 = vmatmul.f32.gmra.mxu0 %v450
  %v662 = vpop.f32.mrf.mxu0
  %v663 = vadd.f32 0.0, %v662
  %664 = vmatmul.f32.gmra.mxu0 %v453
  %v665 = vpop.f32.mrf.mxu0
  %v666 = vadd.f32 0.0, %v665
  %667 = vmatmul.f32.gmra.mxu0 %v456
  %v668 = vpop.f32.mrf.mxu0
  %v669 = vadd.f32 0.0, %v668
  %670 = vmatmul.f32.gmra.mxu0 %v459
  %v671 = vpop.f32.mrf.mxu0
  %v672 = vadd.f32 0.0, %v671
  %673 = vmatmul.f32.gmra.mxu0 %v462
  %v674 = vpop.f32.mrf.mxu0
  %v675 = vadd.f32 0.0, %v674
  %676 = vmatmul.f32.gmra.mxu0 %v465
  %v677 = vpop.f32.mrf.mxu0
  %v678 = vadd.f32 0.0, %v677
  %679 = vmatmul.f32.gmra.mxu0 %v468
  %v680 = vpop.f32.mrf.mxu0
  %v681 = vadd.f32 0.0, %v680
  %682 = vmatmul.f32.gmra.mxu0 %v471
  %v683 = vpop.f32.mrf.mxu0
  %v684 = vadd.f32 0.0, %v683
  %685 = vmatmul.f32.gmra.mxu0 %v474
  %v686 = vpop.f32.mrf.mxu0
  %v687 = vadd.f32 0.0, %v686
  %688 = vmatmul.f32.gmra.mxu0 %v477
  %v689 = vpop.f32.mrf.mxu0
  %v690 = vadd.f32 0.0, %v689
  %691 = vmatmul.f32.gmra.mxu0 %v480
  %v692 = vpop.f32.mrf.mxu0
  %v693 = vadd.f32 0.0, %v692
  %694 = vmatmul.f32.gmra.mxu0 %v483
  %v695 = vpop.f32.mrf.mxu0
  %v696 = vadd.f32 0.0, %v695
  %697 = vdwg.mxu0
  %vm698 = vcmask 130048
  %699 = vst.msk [vmem:[%s4] sm:$0xff] %vm698, %v507
  %700 = vst.msk [vmem:[%s4 + $0x8] sm:$0xff] %vm698, %v510
  %701 = vst.msk [vmem:[%s4 + $0x10] sm:$0xff] %vm698, %v513
  %702 = vst.msk [vmem:[%s4 + $0x18] sm:$0xff] %vm698, %v516
  %703 = vst.msk [vmem:[%s4 + $0x20] sm:$0xff] %vm698, %v519
  %704 = vst.msk [vmem:[%s4 + $0x28] sm:$0xff] %vm698, %v522
  %705 = vst.msk [vmem:[%s4 + $0x30] sm:$0xff] %vm698, %v525
  %706 = vst.msk [vmem:[%s4 + $0x38] sm:$0xff] %vm698, %v528
  %707 = vst.msk [vmem:[%s4 + $0x40] sm:$0xff] %vm698, %v531
  %708 = vst.msk [vmem:[%s4 + $0x48] sm:$0xff] %vm698, %v534
  %709 = vst.msk [vmem:[%s4 + $0x50] sm:$0xff] %vm698, %v537
  %710 = vst.msk [vmem:[%s4 + $0x58] sm:$0xff] %vm698, %v540
  %711 = vst.msk [vmem:[%s4 + $0x60] sm:$0xff] %vm698, %v543
  %712 = vst.msk [vmem:[%s4 + $0x68] sm:$0xff] %vm698, %v546
  %713 = vst.msk [vmem:[%s4 + $0x70] sm:$0xff] %vm698, %v549
  %714 = vst.msk [vmem:[%s4 + $0x78] sm:$0xff] %vm698, %v552
  %715 = vst.msk [vmem:[%s4 + $0x80] sm:$0xff] %vm698, %v555
  %716 = vst.msk [vmem:[%s4 + $0x88] sm:$0xff] %vm698, %v558
  %717 = vst.msk [vmem:[%s4 + $0x90] sm:$0xff] %vm698, %v561
  %718 = vst.msk [vmem:[%s4 + $0x98] sm:$0xff] %vm698, %v564
  %719 = vst.msk [vmem:[%s4 + $0xa0] sm:$0xff] %vm698, %v567
  %720 = vst.msk [vmem:[%s4 + $0xa8] sm:$0xff] %vm698, %v570
  %721 = vst.msk [vmem:[%s4 + $0xb0] sm:$0xff] %vm698, %v573
  %722 = vst.msk [vmem:[%s4 + $0xb8] sm:$0xff] %vm698, %v576
  %723 = vst.msk [vmem:[%s4 + $0xc0] sm:$0xff] %vm698, %v579
  %724 = vst.msk [vmem:[%s4 + $0xc8] sm:$0xff] %vm698, %v582
  %725 = vst.msk [vmem:[%s4 + $0xd0] sm:$0xff] %vm698, %v585
  %726 = vst.msk [vmem:[%s4 + $0xd8] sm:$0xff] %vm698, %v588
  %727 = vst.msk [vmem:[%s4 + $0xe0] sm:$0xff] %vm698, %v591
  %728 = vst.msk [vmem:[%s4 + $0xe8] sm:$0xff] %vm698, %v594
  %729 = vst.msk [vmem:[%s4 + $0xf0] sm:$0xff] %vm698, %v597
  %730 = vst.msk [vmem:[%s4 + $0xf8] sm:$0xff] %vm698, %v600
  %731 = vst.msk [vmem:[%s4 + $0x100] sm:$0xff] %vm698, %v603
  %732 = vst.msk [vmem:[%s4 + $0x108] sm:$0xff] %vm698, %v606
  %733 = vst.msk [vmem:[%s4 + $0x110] sm:$0xff] %vm698, %v609
  %734 = vst.msk [vmem:[%s4 + $0x118] sm:$0xff] %vm698, %v612
  %735 = vst.msk [vmem:[%s4 + $0x120] sm:$0xff] %vm698, %v615
  %736 = vst.msk [vmem:[%s4 + $0x128] sm:$0xff] %vm698, %v618
  %737 = vst.msk [vmem:[%s4 + $0x130] sm:$0xff] %vm698, %v621
  %738 = vst.msk [vmem:[%s4 + $0x138] sm:$0xff] %vm698, %v624
  %739 = vst.msk [vmem:[%s4 + $0x140] sm:$0xff] %vm698, %v627
  %740 = vst.msk [vmem:[%s4 + $0x148] sm:$0xff] %vm698, %v630
  %741 = vst.msk [vmem:[%s4 + $0x150] sm:$0xff] %vm698, %v633
  %742 = vst.msk [vmem:[%s4 + $0x158] sm:$0xff] %vm698, %v636
  %743 = vst.msk [vmem:[%s4 + $0x160] sm:$0xff] %vm698, %v639
  %744 = vst.msk [vmem:[%s4 + $0x168] sm:$0xff] %vm698, %v642
  %745 = vst.msk [vmem:[%s4 + $0x170] sm:$0xff] %vm698, %v645
  %746 = vst.msk [vmem:[%s4 + $0x178] sm:$0xff] %vm698, %v648
  %747 = vst.msk [vmem:[%s4 + $0x180] sm:$0xff] %vm698, %v651
  %748 = vst.msk [vmem:[%s4 + $0x188] sm:$0xff] %vm698, %v654
  %749 = vst.msk [vmem:[%s4 + $0x190] sm:$0xff] %vm698, %v657
  %750 = vst.msk [vmem:[%s4 + $0x198] sm:$0xff] %vm698, %v660
  %751 = vst.msk [vmem:[%s4 + $0x1a0] sm:$0xff] %vm698, %v663
  %752 = vst.msk [vmem:[%s4 + $0x1a8] sm:$0xff] %vm698, %v666
  %753 = vst.msk [vmem:[%s4 + $0x1b0] sm:$0xff] %vm698, %v669
  %754 = vst.msk [vmem:[%s4 + $0x1b8] sm:$0xff] %vm698, %v672
  %755 = vst.msk [vmem:[%s4 + $0x1c0] sm:$0xff] %vm698, %v675
  %756 = vst.msk [vmem:[%s4 + $0x1c8] sm:$0xff] %vm698, %v678
  %757 = vst.msk [vmem:[%s4 + $0x1d0] sm:$0xff] %vm698, %v681
  %758 = vst.msk [vmem:[%s4 + $0x1d8] sm:$0xff] %vm698, %v684
  %759 = vst.msk [vmem:[%s4 + $0x1e0] sm:$0xff] %vm698, %v687
  %760 = vst.msk [vmem:[%s4 + $0x1e8] sm:$0xff] %vm698, %v690
  %761 = vst.msk [vmem:[%s4 + $0x1f0] sm:$0xff] %vm698, %v693
  %762 = vst.msk [vmem:[%s4 + $0x1f8] sm:$0xff] %vm698, %v696
  %v763 = vld [vmem:[%s5] sm:$0x1]
  %v764 = vsel %vm698, %v507, 0.0
  %v765 = vsel %vm698, %v510, 0.0
  %v766 = vadd.f32 %v764, %v765
  %v767 = vsel %vm698, %v513, 0.0
  %v768 = vadd.f32 %v766, %v767
  %v769 = vsel %vm698, %v516, 0.0
  %v770 = vadd.f32 %v768, %v769
  %v771 = vsel %vm698, %v519, 0.0
  %v772 = vadd.f32 %v770, %v771
  %v773 = vsel %vm698, %v522, 0.0
  %v774 = vadd.f32 %v772, %v773
  %v775 = vsel %vm698, %v525, 0.0
  %v776 = vadd.f32 %v774, %v775
  %v777 = vsel %vm698, %v528, 0.0
  %v778 = vadd.f32 %v776, %v777
  %v779 = vsel %vm698, %v531, 0.0
  %v780 = vadd.f32 %v778, %v779
  %v781 = vsel %vm698, %v534, 0.0
  %v782 = vadd.f32 %v780, %v781
  %v783 = vsel %vm698, %v537, 0.0
  %v784 = vadd.f32 %v782, %v783
  %v785 = vsel %vm698, %v540, 0.0
  %v786 = vadd.f32 %v784, %v785
  %v787 = vsel %vm698, %v543, 0.0
  %v788 = vadd.f32 %v786, %v787
  %v789 = vsel %vm698, %v546, 0.0
  %v790 = vadd.f32 %v788, %v789
  %v791 = vsel %vm698, %v549, 0.0
  %v792 = vadd.f32 %v790, %v791
  %v793 = vsel %vm698, %v552, 0.0
  %v794 = vadd.f32 %v792, %v793
  %v795 = vsel %vm698, %v555, 0.0
  %v796 = vadd.f32 %v794, %v795
  %v797 = vsel %vm698, %v558, 0.0
  %v798 = vadd.f32 %v796, %v797
  %v799 = vsel %vm698, %v561, 0.0
  %v800 = vadd.f32 %v798, %v799
  %v801 = vsel %vm698, %v564, 0.0
  %v802 = vadd.f32 %v800, %v801
  %v803 = vsel %vm698, %v567, 0.0
  %v804 = vadd.f32 %v802, %v803
  %v805 = vsel %vm698, %v570, 0.0
  %v806 = vadd.f32 %v804, %v805
  %v807 = vsel %vm698, %v573, 0.0
  %v808 = vadd.f32 %v806, %v807
  %v809 = vsel %vm698, %v576, 0.0
  %v810 = vadd.f32 %v808, %v809
  %v811 = vsel %vm698, %v579, 0.0
  %v812 = vadd.f32 %v810, %v811
  %v813 = vsel %vm698, %v582, 0.0
  %v814 = vadd.f32 %v812, %v813
  %v815 = vsel %vm698, %v585, 0.0
  %v816 = vadd.f32 %v814, %v815
  %v817 = vsel %vm698, %v588, 0.0
  %v818 = vadd.f32 %v816, %v817
  %v819 = vsel %vm698, %v591, 0.0
  %v820 = vadd.f32 %v818, %v819
  %v821 = vsel %vm698, %v594, 0.0
  %v822 = vadd.f32 %v820, %v821
  %v823 = vsel %vm698, %v597, 0.0
  %v824 = vadd.f32 %v822, %v823
  %v825 = vsel %vm698, %v600, 0.0
  %v826 = vadd.f32 %v824, %v825
  %v827 = vsel %vm698, %v603, 0.0
  %v828 = vadd.f32 %v826, %v827
  %v829 = vsel %vm698, %v606, 0.0
  %v830 = vadd.f32 %v828, %v829
  %v831 = vsel %vm698, %v609, 0.0
  %v832 = vadd.f32 %v830, %v831
  %v833 = vsel %vm698, %v612, 0.0
  %v834 = vadd.f32 %v832, %v833
  %v835 = vsel %vm698, %v615, 0.0
  %v836 = vadd.f32 %v834, %v835
  %v837 = vsel %vm698, %v618, 0.0
  %v838 = vadd.f32 %v836, %v837
  %v839 = vsel %vm698, %v621, 0.0
  %v840 = vadd.f32 %v838, %v839
  %v841 = vsel %vm698, %v624, 0.0
  %v842 = vadd.f32 %v840, %v841
  %v843 = vsel %vm698, %v627, 0.0
  %v844 = vadd.f32 %v842, %v843
  %v845 = vsel %vm698, %v630, 0.0
  %v846 = vadd.f32 %v844, %v845
  %v847 = vsel %vm698, %v633, 0.0
  %v848 = vadd.f32 %v846, %v847
  %v849 = vsel %vm698, %v636, 0.0
  %v850 = vadd.f32 %v848, %v849
  %v851 = vsel %vm698, %v639, 0.0
  %v852 = vadd.f32 %v850, %v851
  %v853 = vsel %vm698, %v642, 0.0
  %v854 = vadd.f32 %v852, %v853
  %v855 = vsel %vm698, %v645, 0.0
  %v856 = vadd.f32 %v854, %v855
  %v857 = vsel %vm698, %v648, 0.0
  %v858 = vadd.f32 %v856, %v857
  %v859 = vsel %vm698, %v651, 0.0
  %v860 = vadd.f32 %v858, %v859
  %v861 = vsel %vm698, %v654, 0.0
  %v862 = vadd.f32 %v860, %v861
  %v863 = vsel %vm698, %v657, 0.0
  %v864 = vadd.f32 %v862, %v863
  %v865 = vsel %vm698, %v660, 0.0
  %v866 = vadd.f32 %v864, %v865
  %v867 = vsel %vm698, %v663, 0.0
  %v868 = vadd.f32 %v866, %v867
  %v869 = vsel %vm698, %v666, 0.0
  %v870 = vadd.f32 %v868, %v869
  %v871 = vsel %vm698, %v669, 0.0
  %v872 = vadd.f32 %v870, %v871
  %v873 = vsel %vm698, %v672, 0.0
  %v874 = vadd.f32 %v872, %v873
  %v875 = vsel %vm698, %v675, 0.0
  %v876 = vadd.f32 %v874, %v875
  %v877 = vsel %vm698, %v678, 0.0
  %v878 = vadd.f32 %v876, %v877
  %v879 = vsel %vm698, %v681, 0.0
  %v880 = vadd.f32 %v878, %v879
  %v881 = vsel %vm698, %v684, 0.0
  %v882 = vadd.f32 %v880, %v881
  %v883 = vsel %vm698, %v687, 0.0
  %v884 = vadd.f32 %v882, %v883
  %v885 = vsel %vm698, %v690, 0.0
  %v886 = vadd.f32 %v884, %v885
  %v887 = vsel %vm698, %v693, 0.0
  %v888 = vadd.f32 %v886, %v887
  %v889 = vsel %vm698, %v696, 0.0
  %v890 = vadd.f32 %v888, %v889
  %v891 = vrot.slane %v890, 4
  %v892 = vadd.f32 %v890, %v891
  %v893 = vrot.slane %v892, 2
  %v894 = vadd.f32 %v892, %v893
  %v895 = vrot.slane %v894, 1
  %v896 = vadd.f32 %v894, %v895
  %v897 = vadd.f32 %v763, %v896
  %vm898 = vcmask 122880
  %899 = vst.msk [vmem:[%s5] sm:$0x1] %vm898, %v897
  %v900 = vld [vmem:[%s6] sm:$0x1]
  %v901 = vmul.f32 %v507, %v507
  %v902 = vmul.f32 %v510, %v510
  %v903 = vmul.f32 %v513, %v513
  %v904 = vmul.f32 %v516, %v516
  %v905 = vmul.f32 %v519, %v519
  %v906 = vmul.f32 %v522, %v522
  %v907 = vmul.f32 %v525, %v525
  %v908 = vmul.f32 %v528, %v528
  %v909 = vmul.f32 %v531, %v531
  %v910 = vmul.f32 %v534, %v534
  %v911 = vmul.f32 %v537, %v537
  %v912 = vmul.f32 %v540, %v540
  %v913 = vmul.f32 %v543, %v543
  %v914 = vmul.f32 %v546, %v546
  %v915 = vmul.f32 %v549, %v549
  %v916 = vmul.f32 %v552, %v552
  %v917 = vmul.f32 %v555, %v555
  %v918 = vmul.f32 %v558, %v558
  %v919 = vmul.f32 %v561, %v561
  %v920 = vmul.f32 %v564, %v564
  %v921 = vmul.f32 %v567, %v567
  %v922 = vmul.f32 %v570, %v570
  %v923 = vmul.f32 %v573, %v573
  %v924 = vmul.f32 %v576, %v576
  %v925 = vmul.f32 %v579, %v579
  %v926 = vmul.f32 %v582, %v582
  %v927 = vmul.f32 %v585, %v585
  %v928 = vmul.f32 %v588, %v588
  %v929 = vmul.f32 %v591, %v591
  %v930 = vmul.f32 %v594, %v594
  %v931 = vmul.f32 %v597, %v597
  %v932 = vmul.f32 %v600, %v600
  %v933 = vmul.f32 %v603, %v603
  %v934 = vmul.f32 %v606, %v606
  %v935 = vmul.f32 %v609, %v609
  %v936 = vmul.f32 %v612, %v612
  %v937 = vmul.f32 %v615, %v615
  %v938 = vmul.f32 %v618, %v618
  %v939 = vmul.f32 %v621, %v621
  %v940 = vmul.f32 %v624, %v624
  %v941 = vmul.f32 %v627, %v627
  %v942 = vmul.f32 %v630, %v630
  %v943 = vmul.f32 %v633, %v633
  %v944 = vmul.f32 %v636, %v636
  %v945 = vmul.f32 %v639, %v639
  %v946 = vmul.f32 %v642, %v642
  %v947 = vmul.f32 %v645, %v645
  %v948 = vmul.f32 %v648, %v648
  %v949 = vmul.f32 %v651, %v651
  %v950 = vmul.f32 %v654, %v654
  %v951 = vmul.f32 %v657, %v657
  %v952 = vmul.f32 %v660, %v660
  %v953 = vmul.f32 %v663, %v663
  %v954 = vmul.f32 %v666, %v666
  %v955 = vmul.f32 %v669, %v669
  %v956 = vmul.f32 %v672, %v672
  %v957 = vmul.f32 %v675, %v675
  %v958 = vmul.f32 %v678, %v678
  %v959 = vmul.f32 %v681, %v681
  %v960 = vmul.f32 %v684, %v684
  %v961 = vmul.f32 %v687, %v687
  %v962 = vmul.f32 %v690, %v690
  %v963 = vmul.f32 %v693, %v693
  %v964 = vmul.f32 %v696, %v696
  %v965 = vsel %vm698, %v901, 0.0
  %v966 = vsel %vm698, %v902, 0.0
  %v967 = vadd.f32 %v965, %v966
  %v968 = vsel %vm698, %v903, 0.0
  %v969 = vadd.f32 %v967, %v968
  %v970 = vsel %vm698, %v904, 0.0
  %v971 = vadd.f32 %v969, %v970
  %v972 = vsel %vm698, %v905, 0.0
  %v973 = vadd.f32 %v971, %v972
  %v974 = vsel %vm698, %v906, 0.0
  %v975 = vadd.f32 %v973, %v974
  %v976 = vsel %vm698, %v907, 0.0
  %v977 = vadd.f32 %v975, %v976
  %v978 = vsel %vm698, %v908, 0.0
  %v979 = vadd.f32 %v977, %v978
  %v980 = vsel %vm698, %v909, 0.0
  %v981 = vadd.f32 %v979, %v980
  %v982 = vsel %vm698, %v910, 0.0
  %v983 = vadd.f32 %v981, %v982
  %v984 = vsel %vm698, %v911, 0.0
  %v985 = vadd.f32 %v983, %v984
  %v986 = vsel %vm698, %v912, 0.0
  %v987 = vadd.f32 %v985, %v986
  %v988 = vsel %vm698, %v913, 0.0
  %v989 = vadd.f32 %v987, %v988
  %v990 = vsel %vm698, %v914, 0.0
  %v991 = vadd.f32 %v989, %v990
  %v992 = vsel %vm698, %v915, 0.0
  %v993 = vadd.f32 %v991, %v992
  %v994 = vsel %vm698, %v916, 0.0
  %v995 = vadd.f32 %v993, %v994
  %v996 = vsel %vm698, %v917, 0.0
  %v997 = vadd.f32 %v995, %v996
  %v998 = vsel %vm698, %v918, 0.0
  %v999 = vadd.f32 %v997, %v998
  %v1000 = vsel %vm698, %v919, 0.0
  %v1001 = vadd.f32 %v999, %v1000
  %v1002 = vsel %vm698, %v920, 0.0
  %v1003 = vadd.f32 %v1001, %v1002
  %v1004 = vsel %vm698, %v921, 0.0
  %v1005 = vadd.f32 %v1003, %v1004
  %v1006 = vsel %vm698, %v922, 0.0
  %v1007 = vadd.f32 %v1005, %v1006
  %v1008 = vsel %vm698, %v923, 0.0
  %v1009 = vadd.f32 %v1007, %v1008
  %v1010 = vsel %vm698, %v924, 0.0
  %v1011 = vadd.f32 %v1009, %v1010
  %v1012 = vsel %vm698, %v925, 0.0
  %v1013 = vadd.f32 %v1011, %v1012
  %v1014 = vsel %vm698, %v926, 0.0
  %v1015 = vadd.f32 %v1013, %v1014
  %v1016 = vsel %vm698, %v927, 0.0
  %v1017 = vadd.f32 %v1015, %v1016
  %v1018 = vsel %vm698, %v928, 0.0
  %v1019 = vadd.f32 %v1017, %v1018
  %v1020 = vsel %vm698, %v929, 0.0
  %v1021 = vadd.f32 %v1019, %v1020
  %v1022 = vsel %vm698, %v930, 0.0
  %v1023 = vadd.f32 %v1021, %v1022
  %v1024 = vsel %vm698, %v931, 0.0
  %v1025 = vadd.f32 %v1023, %v1024
  %v1026 = vsel %vm698, %v932, 0.0
  %v1027 = vadd.f32 %v1025, %v1026
  %v1028 = vsel %vm698, %v933, 0.0
  %v1029 = vadd.f32 %v1027, %v1028
  %v1030 = vsel %vm698, %v934, 0.0
  %v1031 = vadd.f32 %v1029, %v1030
  %v1032 = vsel %vm698, %v935, 0.0
  %v1033 = vadd.f32 %v1031, %v1032
  %v1034 = vsel %vm698, %v936, 0.0
  %v1035 = vadd.f32 %v1033, %v1034
  %v1036 = vsel %vm698, %v937, 0.0
  %v1037 = vadd.f32 %v1035, %v1036
  %v1038 = vsel %vm698, %v938, 0.0
  %v1039 = vadd.f32 %v1037, %v1038
  %v1040 = vsel %vm698, %v939, 0.0
  %v1041 = vadd.f32 %v1039, %v1040
  %v1042 = vsel %vm698, %v940, 0.0
  %v1043 = vadd.f32 %v1041, %v1042
  %v1044 = vsel %vm698, %v941, 0.0
  %v1045 = vadd.f32 %v1043, %v1044
  %v1046 = vsel %vm698, %v942, 0.0
  %v1047 = vadd.f32 %v1045, %v1046
  %v1048 = vsel %vm698, %v943, 0.0
  %v1049 = vadd.f32 %v1047, %v1048
  %v1050 = vsel %vm698, %v944, 0.0
  %v1051 = vadd.f32 %v1049, %v1050
  %v1052 = vsel %vm698, %v945, 0.0
  %v1053 = vadd.f32 %v1051, %v1052
  %v1054 = vsel %vm698, %v946, 0.0
  %v1055 = vadd.f32 %v1053, %v1054
  %v1056 = vsel %vm698, %v947, 0.0
  %v1057 = vadd.f32 %v1055, %v1056
  %v1058 = vsel %vm698, %v948, 0.0
  %v1059 = vadd.f32 %v1057, %v1058
  %v1060 = vsel %vm698, %v949, 0.0
  %v1061 = vadd.f32 %v1059, %v1060
  %v1062 = vsel %vm698, %v950, 0.0
  %v1063 = vadd.f32 %v1061, %v1062
  %v1064 = vsel %vm698, %v951, 0.0
  %v1065 = vadd.f32 %v1063, %v1064
  %v1066 = vsel %vm698, %v952, 0.0
  %v1067 = vadd.f32 %v1065, %v1066
  %v1068 = vsel %vm698, %v953, 0.0
  %v1069 = vadd.f32 %v1067, %v1068
  %v1070 = vsel %vm698, %v954, 0.0
  %v1071 = vadd.f32 %v1069, %v1070
  %v1072 = vsel %vm698, %v955, 0.0
  %v1073 = vadd.f32 %v1071, %v1072
  %v1074 = vsel %vm698, %v956, 0.0
  %v1075 = vadd.f32 %v1073, %v1074
  %v1076 = vsel %vm698, %v957, 0.0
  %v1077 = vadd.f32 %v1075, %v1076
  %v1078 = vsel %vm698, %v958, 0.0
  %v1079 = vadd.f32 %v1077, %v1078
  %v1080 = vsel %vm698, %v959, 0.0
  %v1081 = vadd.f32 %v1079, %v1080
  %v1082 = vsel %vm698, %v960, 0.0
  %v1083 = vadd.f32 %v1081, %v1082
  %v1084 = vsel %vm698, %v961, 0.0
  %v1085 = vadd.f32 %v1083, %v1084
  %v1086 = vsel %vm698, %v962, 0.0
  %v1087 = vadd.f32 %v1085, %v1086
  %v1088 = vsel %vm698, %v963, 0.0
  %v1089 = vadd.f32 %v1087, %v1088
  %v1090 = vsel %vm698, %v964, 0.0
  %v1091 = vadd.f32 %v1089, %v1090
  %v1092 = vrot.slane %v1091, 4
  %v1093 = vadd.f32 %v1091, %v1092
  %v1094 = vrot.slane %v1093, 2
  %v1095 = vadd.f32 %v1093, %v1094
  %v1096 = vrot.slane %v1095, 1
  %v1097 = vadd.f32 %v1095, %v1096
  %v1098 = vadd.f32 %v900, %v1097
  %1099 = vst.msk [vmem:[%s6] sm:$0x1] %vm898, %v1098
  // Predicated region
  $region22: #{block_forward.6} parent=0 // pred_check
    _
  $region23: #{block_forward.6} parent=0 // pred_check_branch
    %1101 = sbr.rel (0) target = $region25
  $region24: #{block_forward.6} parent=0 // pred_region
    _
  $region25: #{block_forward.6} parent=0 // pred_fallthru
    _
  // Predicated region
  $region26: #{block_forward.6} parent=0 // pred_check
    _
  $region27: #{block_forward.6} parent=0 // pred_check_branch
    %1103 = sbr.rel (0) target = $region29
  $region28: #{block_forward.6} parent=0 // pred_region
    _
  $region29: #{block_forward.6} parent=0 // pred_fallthru
    _
  // Predicated region
  $region30: #{block_forward.6} parent=0 // pred_check
    _
  $region31: #{block_forward.6} parent=0 // pred_check_branch
    %1105 = sbr.rel (0) target = $region33
  $region32: #{block_forward.6} parent=0 // pred_region
    _
  $region33: #{block_forward.6} parent=0 // pred_fallthru
    _
  // Predicated region
  $region34: #{block_forward.6} parent=0 // pred_check
    _
  $region35: #{block_forward.6} parent=0 // pred_check_branch
    %1107 = sbr.rel (0) target = $region37
  $region36: #{block_forward.6} parent=0 // pred_region
    _
  $region37: #{block_forward.6} parent=0 // pred_fallthru
    _
  // Predicated region
  $region38: #{block_forward.6} parent=0 // pred_check
    _
  $region39: #{block_forward.6} parent=0 // pred_check_branch
    %1109 = sbr.rel (0) target = $region41
  $region40: #{block_forward.6} parent=0 // pred_region
    _
  $region41: #{block_forward.6} parent=0 // pred_fallthru
    _
  // Predicated region
  $region42: #{block_forward.6} parent=0 // pred_check
    _
  $region43: #{block_forward.6} parent=0 // pred_check_branch
    %1111 = sbr.rel (0) target = $region45
  $region44: #{block_forward.6} parent=0 // pred_region
    _
  $region45: #{block_forward.6} parent=0 // pred_fallthru
    _

// kernel: block_forward.5
$region0: #{block_forward.5}
  #allocation0 [shape = 'u32[]', space=smem, size = 0x4, offset = 0x4, fixed_abs, tag = 'smem constant byte address 0x4 - core index']
  #allocation1 [shape = 'u32[72,128]{1,0:T(1,128)}', space=vmem, size = 0x9000, scoped, tag = 'internal scratch']
  #allocation2 [shape = 'f32[18,24,4]{2,1,0:T(8,128)}', space=vmem, size = 0x36000, scoped, tag = 'scratch operand']
  %s0 = inlined_call_operand.vmem [shape: f32[2,16,16,4], index: 0, kind: input, shape index: {}]
  %s1 = inlined_call_operand.vmem [shape: f32[1,4], index: 1, kind: input, shape index: {}]
  %s2 = inlined_call_operand.vmem [shape: f32[1,4], index: 2, kind: input, shape index: {}]
  %s3 = inlined_call_operand.vmem [shape: f32[3,4,12], index: 3, kind: input, shape index: {}]
  %s4 = inlined_call_operand.vmem [shape: f32[2,16,16,4], index: 4, kind: output, shape index: {0}]
  %s5 = inlined_call_operand.vmem [shape: f32[1,4], index: 5, kind: output, shape index: {1}]
  %s6 = inlined_call_operand.vmem [shape: f32[1,4], index: 6, kind: output, shape index: {2}]
  %7 = xla_tuple %s4, %s5, %s6
  %s8 = sld [smem:[#allocation0]]
  $region69: #{block_forward.5} parent=0
    _
  %s10 = ssub.s32 1, %s8
  %s11 = scalar_select 0, %s10, %s8
  loop: start=0, step=1, limit=4
  $region2: #{block_forward.5} parent=0 // loop_pre_header
    _
  $region3: #{block_forward.5} parent=0 // loop_header
    %s13 = sphi 0, %s17
    %p14 = scmp.ge.s32.totalorder %s13, 4
    %s23 = sphi 0, %s25
    %s26 = sphi 0, %s23
    %s27 = sphi 0, %s26
    %s43 = sphi 0, %s27
    %s47 = sphi 0, %s47
    %s49 = sphi 0, %s47
    %s50 = sphi 0, %s49
    %s64 = sphi 0, %s50
    %s68 = sphi 0, %s68
    %s70 = sphi 0, %s68
    %s71 = sphi 0, %s70
    %s85 = sphi 0, %s71
    %s89 = sphi 0, %s89
    %s91 = sphi 0, %s89
    %s92 = sphi 0, %s91
    %s106 = sphi 0, %s92
    %s112 = sphi 0, %s114
    %s115 = sphi 0, %s112
    %s116 = sphi 0, %s115
    %s132 = sphi 0, %s116
    %s136 = sphi 0, %s136
    %s138 = sphi 0, %s136
    %s139 = sphi 0, %s138
    %s153 = sphi 0, %s139
    %s157 = sphi 0, %s157
    %s159 = sphi 0, %s157
    %s160 = sphi 0, %s159
    %s174 = sphi 0, %s160
  $region4: #{block_forward.5} parent=0 // loop_header_branch
    %16 = sbr.rel (%p14) target = $region8
  $region5: #{block_forward.5} parent=0 // loop_body
    %s18 = ssub.s32 %s13, 1
    %s19 = ssub.s32 %s13, 2
    %s20 = sadd.s32 %s13, 1
    %s21 = ssub.s32 %s13, %s20
    %p22 = scmp.eq.s32.totalorder %s21, 0
    %s24 = sadd.s32 %s23, 1
    %s25 = scalar_select %p22, %s23, %s24
    %p28 = pneg %p22
    %p29 = scmp.eq.s32.totalorder %s13, 1
    %p30 = por %p28, %p29
    %p31 = scmp.ne.s32.totalorder %s23, %s26
    %p32 = scmp.eq.s32.totalorder %s13, 0
    %p33 = por %p31, %p32
    %p34 = scmp.ne.s32.totalorder %s23, %s26
    %p35 = scmp.eq.s32.totalorder %s18, 1
    %p36 = por %p34, %p35
    %p37 = scmp.ne.s32.totalorder %s26, %s27
    %p38 = scmp.eq.s32.totalorder %s18, 0
    %p39 = por %p37, %p38
    %p40 = scmp.ne.s32.totalorder %s26, %s27
    %p41 = scmp.eq.s32.totalorder %s19, 1
    %p42 = por %p40, %p41
    %p44 = scmp.ne.s32.totalorder %s27, %s43
    %p45 = scmp.eq.s32.totalorder %s19, 0
    %p46 = por %p44, %p45
    %s48 = sadd.s32 %s47, 1
    %p51 = scmp.eq.s32.totalorder %s13, 1
    %p52 = scmp.ne.s32.totalorder %s47, %s49
    %p53 = scmp.eq.s32.totalorder %s13, 0
    %p54 = por %p52, %p53
    %p55 = scmp.ne.s32.totalorder %s47, %s49
    %p56 = scmp.eq.s32.totalorder %s18, 1
    %p57 = por %p55, %p56
    %p58 = scmp.ne.s32.totalorder %s49, %s50
    %p59 = scmp.eq.s32.totalorder %s18, 0
    %p60 = por %p58, %p59
    %p61 = scmp.ne.s32.totalorder %s49, %s50
    %p62 = scmp.eq.s32.totalorder %s19, 1
    %p63 = por %p61, %p62
    %p65 = scmp.ne.s32.totalorder %s50, %s64
    %p66 = scmp.eq.s32.totalorder %s19, 0
    %p67 = por %p65, %p66
    %s69 = sadd.s32 %s68, 1
    %p72 = scmp.eq.s32.totalorder %s13, 1
    %p73 = scmp.ne.s32.totalorder %s68, %s70
    %p74 = scmp.eq.s32.totalorder %s13, 0
    %p75 = por %p73, %p74
    %p76 = scmp.ne.s32.totalorder %s68, %s70
    %p77 = scmp.eq.s32.totalorder %s18, 1
    %p78 = por %p76, %p77
    %p79 = scmp.ne.s32.totalorder %s70, %s71
    %p80 = scmp.eq.s32.totalorder %s18, 0
    %p81 = por %p79, %p80
    %p82 = scmp.ne.s32.totalorder %s70, %s71
    %p83 = scmp.eq.s32.totalorder %s19, 1
    %p84 = por %p82, %p83
    %p86 = scmp.ne.s32.totalorder %s71, %s85
    %p87 = scmp.eq.s32.totalorder %s19, 0
    %p88 = por %p86, %p87
    %s90 = sadd.s32 %s89, 1
    %p93 = scmp.eq.s32.totalorder %s13, 1
    %p94 = scmp.ne.s32.totalorder %s89, %s91
    %p95 = scmp.eq.s32.totalorder %s13, 0
    %p96 = por %p94, %p95
    %p97 = scmp.ne.s32.totalorder %s89, %s91
    %p98 = scmp.eq.s32.totalorder %s18, 1
    %p99 = por %p97, %p98
    %p100 = scmp.ne.s32.totalorder %s91, %s92
    %p101 = scmp.eq.s32.totalorder %s18, 0
    %p102 = por %p100, %p101
    %p103 = scmp.ne.s32.totalorder %s91, %s92
    %p104 = scmp.eq.s32.totalorder %s19, 1
    %p105 = por %p103, %p104
    %p107 = scmp.ne.s32.totalorder %s92, %s106
    %p108 = scmp.eq.s32.totalorder %s19, 0
    %p109 = por %p107, %p108
    %s110 = ssub.s32 %s13, %s20
    %p111 = scmp.eq.s32.totalorder %s110, 0
    %s113 = sadd.s32 %s112, 1
    %s114 = scalar_select %p111, %s112, %s113
    %p117 = pneg %p111
    %p118 = scmp.eq.s32.totalorder %s13, 1
    %p119 = por %p117, %p118
    %p120 = scmp.ne.s32.totalorder %s112, %s115
    %p121 = scmp.eq.s32.totalorder %s13, 0
    %p122 = por %p120, %p121
    %p123 = scmp.ne.s32.totalorder %s112, %s115
    %p124 = scmp.eq.s32.totalorder %s18, 1
    %p125 = por %p123, %p124
    %p126 = scmp.ne.s32.totalorder %s115, %s116
    %p127 = scmp.eq.s32.totalorder %s18, 0
    %p128 = por %p126, %p127
    %p129 = scmp.ne.s32.totalorder %s115, %s116
    %p130 = scmp.eq.s32.totalorder %s19, 1
    %p131 = por %p129, %p130
    %p133 = scmp.ne.s32.totalorder %s116, %s132
    %p134 = scmp.eq.s32.totalorder %s19, 0
    %p135 = por %p133, %p134
    %s137 = sadd.s32 %s136, 1
    %p140 = scmp.eq.s32.totalorder %s13, 1
    %p141 = scmp.ne.s32.totalorder %s136, %s138
    %p142 = scmp.eq.s32.totalorder %s13, 0
    %p143 = por %p141, %p142
    %p144 = scmp.ne.s32.totalorder %s136, %s138
    %p145 = scmp.eq.s32.totalorder %s18, 1
    %p146 = por %p144, %p145
    %p147 = scmp.ne.s32.totalorder %s138, %s139
    %p148 = scmp.eq.s32.totalorder %s18, 0
    %p149 = por %p147, %p148
    %p150 = scmp.ne.s32.totalorder %s138, %s139
    %p151 = scmp.eq.s32.totalorder %s19, 1
    %p152 = por %p150, %p151
    %p154 = scmp.ne.s32.totalorder %s139, %s153
    %p155 = scmp.eq.s32.totalorder %s19, 0
    %p156 = por %p154, %p155
    %s158 = sadd.s32 %s157, 1
    %p161 = scmp.eq.s32.totalorder %s13, 1
    %p162 = scmp.ne.s32.totalorder %s157, %s159
    %p163 = scmp.eq.s32.totalorder %s13, 0
    %p164 = por %p162, %p163
    %p165 = scmp.ne.s32.totalorder %s157, %s159
    %p166 = scmp.eq.s32.totalorder %s18, 1
    %p167 = por %p165, %p166
    %p168 = scmp.ne.s32.totalorder %s159, %s160
    %p169 = scmp.eq.s32.totalorder %s18, 0
    %p170 = por %p168, %p169
    %p171 = scmp.ne.s32.totalorder %s159, %s160
    %p172 = scmp.eq.s32.totalorder %s19, 1
    %p173 = por %p171, %p172
    %p175 = scmp.ne.s32.totalorder %s160, %s174
    %p176 = scmp.eq.s32.totalorder %s19, 0
    %p177 = por %p175, %p176
    %p178 = scmp.le.s32.totalorder 1, %s13
    %p179 = scmp.lt.s32.totalorder %s13, 3
    %p180 = pnand %p178, %p179
    %p181 = pneg %p180
    // Predicated region
    $region9: #{block_forward.5} parent=5 // pred_check
      _
    $region10: #{block_forward.5} parent=5 // pred_check_branch
      %183 = sbr.rel (%p180) target = $region12
    $region11: #{block_forward.5} parent=5 // pred_region
      %s184 = ssub.s32 %s13, 1
      // Predicated region
      $region13: #{block_forward.5} parent=11 // pred_check
        %p185 = pneg %p60
      $region14: #{block_forward.5} parent=11 // pred_check_branch
        %187 = sbr.rel (%p185) target = $region16
      $region15: #{block_forward.5} parent=11 // pred_region
        _
      $region16: #{block_forward.5} parent=11 // pred_fallthru
        _
      // Predicated region
      $region17: #{block_forward.5} parent=11 // pred_check
        %p188 = pneg %p81
      $region18: #{block_forward.5} parent=11 // pred_check_branch
        %190 = sbr.rel (%p188) target = $region20
      $region19: #{block_forward.5} parent=11 // pred_region
        _
      $region20: #{block_forward.5} parent=11 // pred_fallthru
        _
      // Predicated region
      $region21: #{block_forward.5} parent=11 // pred_check
        %p191 = pneg %p102
      $region22: #{block_forward.5} parent=11 // pred_check_branch
        %193 = sbr.rel (%p191) target = $region24
      $region23: #{block_forward.5} parent=11 // pred_region
        _
      $region24: #{block_forward.5} parent=11 // pred_fallthru
        _
    $region12: #{block_forward.5} parent=5 // pred_fallthru
      _
    %p194 = scmp.lt.s32.totalorder %s13, 2
    // Predicated region
    $region25: #{block_forward.5} parent=5 // pred_check
      %p195 = pneg %p194
    $region26: #{block_forward.5} parent=5 // pred_check_branch
      %197 = sbr.rel (%p195) target = $region28
    $region27: #{block_forward.5} parent=5 // pred_region
      // Predicated region
      $region29: #{block_forward.5} parent=27 // pred_check
        %p198 = pneg %p33
      $region30: #{block_forward.5} parent=27 // pred_check_branch
        %200 = sbr.rel (%p198) target = $region32
      $region31: #{block_forward.5} parent=27 // pred_region
        %p201 = scmp.lt.s32.totalorder %s13, 1
        %s202 = scalar_select %p201, %s13, 1
        %s203 = smul.addr %s202, 32
        %s204 = smul.addr %s203, 8
        %s205 = scalar_lea.vmem %s0, %s204
      $region32: #{block_forward.5} parent=27 // pred_fallthru
        _
    $region28: #{block_forward.5} parent=5 // pred_fallthru
      _
    %p206 = scmp.le.s32.totalorder 1, %s13
    %p207 = scmp.lt.s32.totalorder %s13, 3
    %p208 = pnand %p206, %p207
    %p209 = pneg %p208
    // Predicated region
    $region33: #{block_forward.5} parent=5 // pred_check
      _
    $region34: #{block_forward.5} parent=5 // pred_check_branch
      %211 = sbr.rel (%p208) target = $region36
    $region35: #{block_forward.5} parent=5 // pred_region
      %s212 = ssub.s32 %s13, 1
      %p213 = scmp.lt.s32.totalorder %s18, 1
      %s214 = scalar_select %p213, %s18, 1
      %s215 = smul.addr %s214, 32
      %s216 = smul.addr %s215, 8
      %s217 = scalar_lea.vmem %s0, %s216
      %p218 = pneg %p39
      %p219 = pneg %p36
      %p220 = pneg %p60
      %p221 = pneg %p57
      %p222 = pneg %p81
      %p223 = pneg %p78
      %p224 = pneg %p102
      %p225 = pneg %p99
      %p226 = pneg %p128
      %p227 = pneg %p125
      %p228 = scmp.lt.s32.totalorder %s18, 1
      %s229 = scalar_select %p228, %s18, 1
      %s230 = smul.addr %s229, 32
      %s231 = smul.addr %s230, 8
      %s232 = scalar_lea.vmem %s4, %s231
      %p233 = pneg %p149
      %p234 = pneg %p146
      %p235 = pneg %p170
      %p236 = pneg %p167
      %p237 = scmp.lt.s32.totalorder %s18, 1
      %s238 = scalar_select %p237, %s18, 1
      %s239 = smul.addr %s238, 32
      %s240 = smul.addr %s239, 8
      %s241 = scalar_lea.vmem %s0, %s240
      %p242 = scmp.lt.s32.totalorder %s18, 1
      %s243 = scalar_select %p242, %s18, 1
      %s244 = smul.addr %s243, 32
      %s245 = smul.addr %s244, 8
      %s246 = scalar_lea.vmem %s4, %s245
      %p247 = scmp.eq.s32.totalorder %s18, 0
      // Predicated region
      $region37: #{block_forward.5} parent=35 // pred_check
        %p248 = pneg %p247
      $region38: #{block_forward.5} parent=35 // pred_check_branch
        %250 = sbr.rel (%p248) target = $region40
      $region39: #{block_forward.5} parent=35 // pred_region
        %vm251 = vcmask 24576
        %252 = vst.msk [vmem:[%s5] sm:$0x1] %vm251, 0.0
        %253 = vst.msk [vmem:[%s6] sm:$0x1] %vm251, 0.0
        %vm254 = vcmask 31744
        %255 = vst.msk [vmem:[#allocation2] sm:$0xff] %vm254, 0.0
        %256 = vst.msk [vmem:[#allocation2 + $0x8] sm:$0xff] %vm254, 0.0
        %257 = vst.msk [vmem:[#allocation2 + $0x10] sm:$0xff] %vm254, 0.0
        %258 = vst.msk [vmem:[#allocation2 + $0x18] sm:$0xff] %vm254, 0.0
        %259 = vst.msk [vmem:[#allocation2 + $0x20] sm:$0xff] %vm254, 0.0
        %260 = vst.msk [vmem:[#allocation2 + $0x28] sm:$0xff] %vm254, 0.0
        %261 = vst.msk [vmem:[#allocation2 + $0x30] sm:$0xff] %vm254, 0.0
        %262 = vst.msk [vmem:[#allocation2 + $0x38] sm:$0xff] %vm254, 0.0
        %263 = vst.msk [vmem:[#allocation2 + $0x40] sm:$0xff] %vm254, 0.0
        %264 = vst.msk [vmem:[#allocation2 + $0x48] sm:$0xff] %vm254, 0.0
        %265 = vst.msk [vmem:[#allocation2 + $0x50] sm:$0xff] %vm254, 0.0
        %266 = vst.msk [vmem:[#allocation2 + $0x58] sm:$0xff] %vm254, 0.0
        %267 = vst.msk [vmem:[#allocation2 + $0x60] sm:$0xff] %vm254, 0.0
        %268 = vst.msk [vmem:[#allocation2 + $0x68] sm:$0xff] %vm254, 0.0
        %269 = vst.msk [vmem:[#allocation2 + $0x70] sm:$0xff] %vm254, 0.0
        %270 = vst.msk [vmem:[#allocation2 + $0x78] sm:$0xff] %vm254, 0.0
        %271 = vst.msk [vmem:[#allocation2 + $0x80] sm:$0xff] %vm254, 0.0
        %272 = vst.msk [vmem:[#allocation2 + $0x88] sm:$0xff] %vm254, 0.0
        %273 = vst.msk [vmem:[#allocation2 + $0x90] sm:$0xff] %vm254, 0.0
        %274 = vst.msk [vmem:[#allocation2 + $0x98] sm:$0xff] %vm254, 0.0
        %275 = vst.msk [vmem:[#allocation2 + $0xa0] sm:$0xff] %vm254, 0.0
        %276 = vst.msk [vmem:[#allocation2 + $0xa8] sm:$0xff] %vm254, 0.0
        %277 = vst.msk [vmem:[#allocation2 + $0xb0] sm:$0xff] %vm254, 0.0
        %278 = vst.msk [vmem:[#allocation2 + $0xb8] sm:$0xff] %vm254, 0.0
        %279 = vst.msk [vmem:[#allocation2 + $0xc0] sm:$0xff] %vm254, 0.0
        %280 = vst.msk [vmem:[#allocation2 + $0xc8] sm:$0xff] %vm254, 0.0
        %281 = vst.msk [vmem:[#allocation2 + $0xd0] sm:$0xff] %vm254, 0.0
        %282 = vst.msk [vmem:[#allocation2 + $0xd8] sm:$0xff] %vm254, 0.0
        %283 = vst.msk [vmem:[#allocation2 + $0xe0] sm:$0xff] %vm254, 0.0
        %284 = vst.msk [vmem:[#allocation2 + $0xe8] sm:$0xff] %vm254, 0.0
        %285 = vst.msk [vmem:[#allocation2 + $0xf0] sm:$0xff] %vm254, 0.0
        %286 = vst.msk [vmem:[#allocation2 + $0xf8] sm:$0xff] %vm254, 0.0
        %287 = vst.msk [vmem:[#allocation2 + $0x100] sm:$0xff] %vm254, 0.0
        %288 = vst.msk [vmem:[#allocation2 + $0x108] sm:$0xff] %vm254, 0.0
        %289 = vst.msk [vmem:[#allocation2 + $0x110] sm:$0xff] %vm254, 0.0
        %290 = vst.msk [vmem:[#allocation2 + $0x118] sm:$0xff] %vm254, 0.0
        %291 = vst.msk [vmem:[#allocation2 + $0x120] sm:$0xff] %vm254, 0.0
        %292 = vst.msk [vmem:[#allocation2 + $0x128] sm:$0xff] %vm254, 0.0
        %293 = vst.msk [vmem:[#allocation2 + $0x130] sm:$0xff] %vm254, 0.0
        %294 = vst.msk [vmem:[#allocation2 + $0x138] sm:$0xff] %vm254, 0.0
        %295 = vst.msk [vmem:[#allocation2 + $0x140] sm:$0xff] %vm254, 0.0
        %296 = vst.msk [vmem:[#allocation2 + $0x148] sm:$0xff] %vm254, 0.0
        %297 = vst.msk [vmem:[#allocation2 + $0x150] sm:$0xff] %vm254, 0.0
        %298 = vst.msk [vmem:[#allocation2 + $0x158] sm:$0xff] %vm254, 0.0
        %299 = vst.msk [vmem:[#allocation2 + $0x160] sm:$0xff] %vm254, 0.0
        %300 = vst.msk [vmem:[#allocation2 + $0x168] sm:$0xff] %vm254, 0.0
        %301 = vst.msk [vmem:[#allocation2 + $0x170] sm:$0xff] %vm254, 0.0
        %302 = vst.msk [vmem:[#allocation2 + $0x178] sm:$0xff] %vm254, 0.0
        %303 = vst.msk [vmem:[#allocation2 + $0x180] sm:$0xff] %vm254, 0.0
        %304 = vst.msk [vmem:[#allocation2 + $0x188] sm:$0xff] %vm254, 0.0
        %305 = vst.msk [vmem:[#allocation2 + $0x190] sm:$0xff] %vm254, 0.0
        %306 = vst.msk [vmem:[#allocation2 + $0x198] sm:$0xff] %vm254, 0.0
        %307 = vst.msk [vmem:[#allocation2 + $0x1a0] sm:$0xff] %vm254, 0.0
        %308 = vst.msk [vmem:[#allocation2 + $0x1a8] sm:$0xff] %vm254, 0.0
      $region40: #{block_forward.5} parent=35 // pred_fallthru
        _
      %v309 = vld [vmem:[%s241] sm:$0xff]
      %v310 = vld [vmem:[%s241 + $0x8] sm:$0xff]
      %v311 = vld [vmem:[%s241 + $0x10] sm:$0xff]
      %v312 = vld [vmem:[%s241 + $0x18] sm:$0xff]
      %v313 = vld [vmem:[%s241 + $0x20] sm:$0xff]
      %v314 = vld [vmem:[%s241 + $0x28] sm:$0xff]
      %v315 = vld [vmem:[%s241 + $0x30] sm:$0xff]
      %v316 = vld [vmem:[%s241 + $0x38] sm:$0xff]
      %v317 = vld [vmem:[%s241 + $0x40] sm:$0xff]
      %v318 = vld [vmem:[%s241 + $0x48] sm:$0xff]
      %v319 = vld [vmem:[%s241 + $0x50] sm:$0xff]
      %v320 = vld [vmem:[%s241 + $0x58] sm:$0xff]
      %v321 = vld [vmem:[%s241 + $0x60] sm:$0xff]
      %v322 = vld [vmem:[%s241 + $0x68] sm:$0xff]
      %v323 = vld [vmem:[%s241 + $0x70] sm:$0xff]
      %v324 = vld [vmem:[%s241 + $0x78] sm:$0xff]
      %v325 = vld [vmem:[%s241 + $0x80] sm:$0xff]
      %v326 = vld [vmem:[%s241 + $0x88] sm:$0xff]
      %v327 = vld [vmem:[%s241 + $0x90] sm:$0xff]
      %v328 = vld [vmem:[%s241 + $0x98] sm:$0xff]
      %v329 = vld [vmem:[%s241 + $0xa0] sm:$0xff]
      %v330 = vld [vmem:[%s241 + $0xa8] sm:$0xff]
      %v331 = vld [vmem:[%s241 + $0xb0] sm:$0xff]
      %v332 = vld [vmem:[%s241 + $0xb8] sm:$0xff]
      %v333 = vld [vmem:[%s241 + $0xc0] sm:$0xff]
      %v334 = vld [vmem:[%s241 + $0xc8] sm:$0xff]
      %v335 = vld [vmem:[%s241 + $0xd0] sm:$0xff]
      %v336 = vld [vmem:[%s241 + $0xd8] sm:$0xff]
      %v337 = vld [vmem:[%s241 + $0xe0] sm:$0xff]
      %v338 = vld [vmem:[%s241 + $0xe8] sm:$0xff]
      %v339 = vld [vmem:[%s241 + $0xf0] sm:$0xff]
      %v340 = vld [vmem:[%s241 + $0xf8] sm:$0xff]
      %v341 = vld [vmem:[%s1] sm:$0x1]
      %v343 = vperm.slane %v341, 0
      %v345 = vmul.f32 %v309, %v343
      %v346 = vmul.f32 %v310, %v343
      %v347 = vmul.f32 %v311, %v343
      %v348 = vmul.f32 %v312, %v343
      %v349 = vmul.f32 %v313, %v343
      %v350 = vmul.f32 %v314, %v343
      %v351 = vmul.f32 %v315, %v343
      %v352 = vmul.f32 %v316, %v343
      %v353 = vmul.f32 %v317, %v343
      %v354 = vmul.f32 %v318, %v343
      %v355 = vmul.f32 %v319, %v343
      %v356 = vmul.f32 %v320, %v343
      %v357 = vmul.f32 %v321, %v343
      %v358 = vmul.f32 %v322, %v343
      %v359 = vmul.f32 %v323, %v343
      %v360 = vmul.f32 %v324, %v343
      %v361 = vmul.f32 %v325, %v343
      %v362 = vmul.f32 %v326, %v343
      %v363 = vmul.f32 %v327, %v343
      %v364 = vmul.f32 %v328, %v343
      %v365 = vmul.f32 %v329, %v343
      %v366 = vmul.f32 %v330, %v343
      %v367 = vmul.f32 %v331, %v343
      %v368 = vmul.f32 %v332, %v343
      %v369 = vmul.f32 %v333, %v343
      %v370 = vmul.f32 %v334, %v343
      %v371 = vmul.f32 %v335, %v343
      %v372 = vmul.f32 %v336, %v343
      %v373 = vmul.f32 %v337, %v343
      %v374 = vmul.f32 %v338, %v343
      %v375 = vmul.f32 %v339, %v343
      %v376 = vmul.f32 %v340, %v343
      %v377 = vld [vmem:[%s2] sm:$0x1]
      %v379 = vperm.slane %v377, 0
      %v381 = vadd.f32 %v345, %v379
      %v382 = vadd.f32 %v346, %v379
      %v383 = vadd.f32 %v347, %v379
      %v384 = vadd.f32 %v348, %v379
      %v385 = vadd.f32 %v349, %v379
      %v386 = vadd.f32 %v350, %v379
      %v387 = vadd.f32 %v351, %v379
      %v388 = vadd.f32 %v352, %v379
      %v389 = vadd.f32 %v353, %v379
      %v390 = vadd.f32 %v354, %v379
      %v391 = vadd.f32 %v355, %v379
      %v392 = vadd.f32 %v356, %v379
      %v393 = vadd.f32 %v357, %v379
      %v394 = vadd.f32 %v358, %v379
      %v395 = vadd.f32 %v359, %v379
      %v396 = vadd.f32 %v360, %v379
      %v397 = vadd.f32 %v361, %v379
      %v398 = vadd.f32 %v362, %v379
      %v399 = vadd.f32 %v363, %v379
      %v400 = vadd.f32 %v364, %v379
      %v401 = vadd.f32 %v365, %v379
      %v402 = vadd.f32 %v366, %v379
      %v403 = vadd.f32 %v367, %v379
      %v404 = vadd.f32 %v368, %v379
      %v405 = vadd.f32 %v369, %v379
      %v406 = vadd.f32 %v370, %v379
      %v407 = vadd.f32 %v371, %v379
      %v408 = vadd.f32 %v372, %v379
      %v409 = vadd.f32 %v373, %v379
      %v410 = vadd.f32 %v374, %v379
      %v411 = vadd.f32 %v375, %v379
      %v412 = vadd.f32 %v376, %v379
      %v413 = vmax.f32 %v381, 0.0
      %v414 = vmax.f32 %v382, 0.0
      %v415 = vmax.f32 %v383, 0.0
      %v416 = vmax.f32 %v384, 0.0
      %v417 = vmax.f32 %v385, 0.0
      %v418 = vmax.f32 %v386, 0.0
      %v419 = vmax.f32 %v387, 0.0
      %v420 = vmax.f32 %v388, 0.0
      %v421 = vmax.f32 %v389, 0.0
      %v422 = vmax.f32 %v390, 0.0
      %v423 = vmax.f32 %v391, 0.0
      %v424 = vmax.f32 %v392, 0.0
      %v425 = vmax.f32 %v393, 0.0
      %v426 = vmax.f32 %v394, 0.0
      %v427 = vmax.f32 %v395, 0.0
      %v428 = vmax.f32 %v396, 0.0
      %v429 = vmax.f32 %v397, 0.0
      %v430 = vmax.f32 %v398, 0.0
      %v431 = vmax.f32 %v399, 0.0
      %v432 = vmax.f32 %v400, 0.0
      %v433 = vmax.f32 %v401, 0.0
      %v434 = vmax.f32 %v402, 0.0
      %v435 = vmax.f32 %v403, 0.0
      %v436 = vmax.f32 %v404, 0.0
      %v437 = vmax.f32 %v405, 0.0
      %v438 = vmax.f32 %v406, 0.0
      %v439 = vmax.f32 %v407, 0.0
      %v440 = vmax.f32 %v408, 0.0
      %v441 = vmax.f32 %v409, 0.0
      %v442 = vmax.f32 %v410, 0.0
      %v443 = vmax.f32 %v411, 0.0
      %v444 = vmax.f32 %v412, 0.0
      %s445 = scalar_lea.vmem [#allocation2], 24
      %vm446 = vcmask 31744
      %447 = vst.msk [vmem:[%s445] sm:$0xff] %vm446, %v413
      %448 = vst.msk [vmem:[%s445 + $0x8] sm:$0xff] %vm446, %v414
      %449 = vst.msk [vmem:[%s445 + $0x18] sm:$0xff] %vm446, %v415
      %450 = vst.msk [vmem:[%s445 + $0x20] sm:$0xff] %vm446, %v416
      %451 = vst.msk [vmem:[%s445 + $0x30] sm:$0xff] %vm446, %v417
      %452 = vst.msk [vmem:[%s445 + $0x38] sm:$0xff] %vm446, %v418
      %453 = vst.msk [vmem:[%s445 + $0x48] sm:$0xff] %vm446, %v419
      %454 = vst.msk [vmem:[%s445 + $0x50] sm:$0xff] %vm446, %v420
      %455 = vst.msk [vmem:[%s445 + $0x60] sm:$0xff] %vm446, %v421
      %456 = vst.msk [vmem:[%s445 + $0x68] sm:$0xff] %vm446, %v422
      %457 = vst.msk [vmem:[%s445 + $0x78] sm:$0xff] %vm446, %v423
      %458 = vst.msk [vmem:[%s445 + $0x80] sm:$0xff] %vm446, %v424
      %459 = vst.msk [vmem:[%s445 + $0x90] sm:$0xff] %vm446, %v425
      %460 = vst.msk [vmem:[%s445 + $0x98] sm:$0xff] %vm446, %v426
      %461 = vst.msk [vmem:[%s445 + $0xa8] sm:$0xff] %vm446, %v427
      %462 = vst.msk [vmem:[%s445 + $0xb0] sm:$0xff] %vm446, %v428
      %463 = vst.msk [vmem:[%s445 + $0xc0] sm:$0xff] %vm446, %v429
      %464 = vst.msk [vmem:[%s445 + $0xc8] sm:$0xff] %vm446, %v430
      %465 = vst.msk [vmem:[%s445 + $0xd8] sm:$0xff] %vm446, %v431
      %466 = vst.msk [vmem:[%s445 + $0xe0] sm:$0xff] %vm446, %v432
      %467 = vst.msk [vmem:[%s445 + $0xf0] sm:$0xff] %vm446, %v433
      %468 = vst.msk [vmem:[%s445 + $0xf8] sm:$0xff] %vm446, %v434
      %469 = vst.msk [vmem:[%s445 + $0x108] sm:$0xff] %vm446, %v435
      %470 = vst.msk [vmem:[%s445 + $0x110] sm:$0xff] %vm446, %v436
      %471 = vst.msk [vmem:[%s445 + $0x120] sm:$0xff] %vm446, %v437
      %472 = vst.msk [vmem:[%s445 + $0x128] sm:$0xff] %vm446, %v438
      %473 = vst.msk [vmem:[%s445 + $0x138] sm:$0xff] %vm446, %v439
      %474 = vst.msk [vmem:[%s445 + $0x140] sm:$0xff] %vm446, %v440
      %475 = vst.msk [vmem:[%s445 + $0x150] sm:$0xff] %vm446, %v441
      %476 = vst.msk [vmem:[%s445 + $0x158] sm:$0xff] %vm446, %v442
      %477 = vst.msk [vmem:[%s445 + $0x168] sm:$0xff] %vm446, %v443
      %478 = vst.msk [vmem:[%s445 + $0x170] sm:$0xff] %vm446, %v444
      %v479 = vld [vmem:[#allocation2] sm:$0xff]
      %v480 = vld [vmem:[#allocation2 + $0x8] sm:$0xff]
      %v481 = vld [vmem:[#allocation2 + $0x10] sm:$0xff]
      %v482 = vld [vmem:[#allocation2 + $0x18] sm:$0xff]
      %v483 = vld [vmem:[#allocation2 + $0x20] sm:$0xff]
      %v484 = vld [vmem:[#allocation2 + $0x28] sm:$0xff]
      %v485 = vld [vmem:[#allocation2 + $0x30] sm:$0xff]
      %v486 = vld [vmem:[#allocation2 + $0x38] sm:$0xff]
      %v487 = vld [vmem:[#allocation2 + $0x40] sm:$0xff]
      %v488 = vld [vmem:[#allocation2 + $0x48] sm:$0xff]
      %v489 = vld [vmem:[#allocation2 + $0x50] sm:$0xff]
      %v490 = vld [vmem:[#allocation2 + $0x58] sm:$0xff]
      %v491 = vld [vmem:[#allocation2 + $0x60] sm:$0xff]
      %v492 = vld [vmem:[#allocation2 + $0x68] sm:$0xff]
      %v493 = vld [vmem:[#allocation2 + $0x70] sm:$0xff]
      %v494 = vld [vmem:[#allocation2 + $0x78] sm:$0xff]
      %v495 = vld [vmem:[#allocation2 + $0x80] sm:$0xff]
      %v496 = vld [vmem:[#allocation2 + $0x88] sm:$0xff]
      %v497 = vld [vmem:[#allocation2 + $0x90] sm:$0xff]
      %v498 = vld [vmem:[#allocation2 + $0x98] sm:$0xff]
      %v499 = vld [vmem:[#allocation2 + $0xa0] sm:$0xff]
      %v500 = vld [vmem:[#allocation2 + $0xa8] sm:$0xff]
      %v501 = vld [vmem:[#allocation2 + $0xb0] sm:$0xff]
      %v502 = vld [vmem:[#allocation2 + $0xb8] sm:$0xff]
      %v503 = vld [vmem:[#allocation2 + $0xc0] sm:$0xff]
      %v504 = vld [vmem:[#allocation2 + $0xc8] sm:$0xff]
      %v505 = vld [vmem:[#allocation2 + $0xd0] sm:$0xff]
      %v506 = vld [vmem:[#allocation2 + $0xd8] sm:$0xff]
      %v507 = vld [vmem:[#allocation2 + $0xe0] sm:$0xff]
      %v508 = vld [vmem:[#allocation2 + $0xe8] sm:$0xff]
      %v509 = vld [vmem:[#allocation2 + $0xf0] sm:$0xff]
      %v510 = vld [vmem:[#allocation2 + $0xf8] sm:$0xff]
      %v511 = vld [vmem:[#allocation2 + $0x100] sm:$0xff]
      %v512 = vld [vmem:[#allocation2 + $0x108] sm:$0xff]
      %v513 = vld [vmem:[#allocation2 + $0x110] sm:$0xff]
      %v514 = vld [vmem:[#allocation2 + $0x118] sm:$0xff]
      %v515 = vld [vmem:[#allocation2 + $0x120] sm:$0xff]
      %v516 = vld [vmem:[#allocation2 + $0x128] sm:$0xff]
      %v517 = vld [vmem:[#allocation2 + $0x130] sm:$0xff]
      %v518 = vld [vmem:[#allocation2 + $0x138] sm:$0xff]
      %v519 = vld [vmem:[#allocation2 + $0x140] sm:$0xff]
      %v520 = vld [vmem:[#allocation2 + $0x148] sm:$0xff]
      %v521 = vld [vmem:[#allocation2 + $0x150] sm:$0xff]
      %v522 = vld [vmem:[#allocation2 + $0x158] sm:$0xff]
      %v523 = vld [vmem:[#allocation2 + $0x160] sm:$0xff]
      %v524 = vld [vmem:[#allocation2 + $0x168] sm:$0xff]
      %v525 = vld [vmem:[#allocation2 + $0x170] sm:$0xff]
      %v526 = vld [vmem:[#allocation2 + $0x178] sm:$0xff]
      %v527 = vld [vmem:[%s3] sm:$0xf]
      %v528 = vld [vmem:[%s445] sm:$0xff]
      %v529 = vld [vmem:[%s445 + $0x8] sm:$0xff]
      %v530 = vld [vmem:[%s445 + $0x10] sm:$0xff]
      %v531 = vld [vmem:[%s445 + $0x18] sm:$0xff]
      %v532 = vld [vmem:[%s445 + $0x20] sm:$0xff]
      %v533 = vld [vmem:[%s445 + $0x28] sm:$0xff]
      %v534 = vld [vmem:[%s445 + $0x30] sm:$0xff]
      %v535 = vld [vmem:[%s445 + $0x38] sm:$0xff]
      %v536 = vld [vmem:[%s445 + $0x40] sm:$0xff]
      %v537 = vld [vmem:[%s445 + $0x48] sm:$0xff]
      %v538 = vld [vmem:[%s445 + $0x50] sm:$0xff]
      %v539 = vld [vmem:[%s445 + $0x58] sm:$0xff]
      %v540 = vld [vmem:[%s445 + $0x60] sm:$0xff]
      %v541 = vld [vmem:[%s445 + $0x68] sm:$0xff]
      %v542 = vld [vmem:[%s445 + $0x70] sm:$0xff]
      %v543 = vld [vmem:[%s445 + $0x78] sm:$0xff]
      %v544 = vld [vmem:[%s445 + $0x80] sm:$0xff]
      %v545 = vld [vmem:[%s445 + $0x88] sm:$0xff]
      %v546 = vld [vmem:[%s445 + $0x90] sm:$0xff]
      %v547 = vld [vmem:[%s445 + $0x98] sm:$0xff]
      %v548 = vld [vmem:[%s445 + $0xa0] sm:$0xff]
      %v549 = vld [vmem:[%s445 + $0xa8] sm:$0xff]
      %v550 = vld [vmem:[%s445 + $0xb0] sm:$0xff]
      %v551 = vld [vmem:[%s445 + $0xb8] sm:$0xff]
      %v552 = vld [vmem:[%s445 + $0xc0] sm:$0xff]
      %v553 = vld [vmem:[%s445 + $0xc8] sm:$0xff]
      %v554 = vld [vmem:[%s445 + $0xd0] sm:$0xff]
      %v555 = vld [vmem:[%s445 + $0xd8] sm:$0xff]
      %v556 = vld [vmem:[%s445 + $0xe0] sm:$0xff]
      %v557 = vld [vmem:[%s445 + $0xe8] sm:$0xff]
      %v558 = vld [vmem:[%s445 + $0xf0] sm:$0xff]
      %v559 = vld [vmem:[%s445 + $0xf8] sm:$0xff]
      %v560 = vld [vmem:[%s445 + $0x100] sm:$0xff]
      %v561 = vld [vmem:[%s445 + $0x108] sm:$0xff]
      %v562 = vld [vmem:[%s445 + $0x110] sm:$0xff]
      %v563 = vld [vmem:[%s445 + $0x118] sm:$0xff]
      %v564 = vld [vmem:[%s445 + $0x120] sm:$0xff]
      %v565 = vld [vmem:[%s445 + $0x128] sm:$0xff]
      %v566 = vld [vmem:[%s445 + $0x130] sm:$0xff]
      %v567 = vld [vmem:[%s445 + $0x138] sm:$0xff]
      %v568 = vld [vmem:[%s445 + $0x140] sm:$0xff]
      %v569 = vld [vmem:[%s445 + $0x148] sm:$0xff]
      %v570 = vld [vmem:[%s445 + $0x150] sm:$0xff]
      %v571 = vld [vmem:[%s445 + $0x158] sm:$0xff]
      %v572 = vld [vmem:[%s445 + $0x160] sm:$0xff]
      %v573 = vld [vmem:[%s445 + $0x168] sm:$0xff]
      %v574 = vld [vmem:[%s445 + $0x170] sm:$0xff]
      %v575 = vld [vmem:[%s445 + $0x178] sm:$0xff]
      %s576 = scalar_lea.vmem %s3, 4
      %v577 = vld [vmem:[%s576] sm:$0xf]
      %v579 = vsel %vm446, %v528, 0
      %v582 = vsel %vm446, %v529, 0
      %v585 = vsel %vm446, %v530, 0
      %v588 = vsel %vm446, %v531, 0
      %v591 = vsel %vm446, %v532, 0
      %v594 = vsel %vm446, %v533, 0
      %v597 = vsel %vm446, %v534, 0
      %v600 = vsel %vm446, %v535, 0
      %v603 = vsel %vm446, %v536, 0
      %v606 = vsel %vm446, %v537, 0
      %v609 = vsel %vm446, %v538, 0
      %v612 = vsel %vm446, %v539, 0
      %v615 = vsel %vm446, %v540, 0
      %v618 = vsel %vm446, %v541, 0
      %v621 = vsel %vm446, %v542, 0
      %v624 = vsel %vm446, %v543, 0
      %v627 = vsel %vm446, %v544, 0
      %v630 = vsel %vm446, %v545, 0
      %v633 = vsel %vm446, %v546, 0
      %v636 = vsel %vm446, %v547, 0
      %v639 = vsel %vm446, %v548, 0
      %v642 = vsel %vm446, %v549, 0
      %v645 = vsel %vm446, %v550, 0
      %v648 = vsel %vm446, %v551, 0
      %v651 = vsel %vm446, %v552, 0
      %v654 = vsel %vm446, %v553, 0
      %v657 = vsel %vm446, %v554, 0
      %v660 = vsel %vm446, %v555, 0
      %v663 = vsel %vm446, %v556, 0
      %v666 = vsel %vm446, %v557, 0
      %v669 = vsel %vm446, %v558, 0
      %v672 = vsel %vm446, %v559, 0
      %v675 = vsel %vm446, %v560, 0
      %v678 = vsel %vm446, %v561, 0
      %v681 = vsel %vm446, %v562, 0
      %v684 = vsel %vm446, %v563, 0
      %v687 = vsel %vm446, %v564, 0
      %v690 = vsel %vm446, %v565, 0
      %v693 = vsel %vm446, %v566, 0
      %v696 = vsel %vm446, %v567, 0
      %v699 = vsel %vm446, %v568, 0
      %v702 = vsel %vm446, %v569, 0
      %v705 = vsel %vm446, %v570, 0
      %v708 = vsel %vm446, %v571, 0
      %v711 = vsel %vm446, %v572, 0
      %v714 = vsel %vm446, %v573, 0
      %v717 = vsel %vm446, %v574, 0
      %v720 = vsel %vm446, %v575, 0
      %vm722 = vcmask 1043456
      %v724 = vsel %vm722, %v577, 0
      %726 = vmatpush.msra.mxu0 0.0
      %727 = vmatpush.msra.mxu0 0.0
      %728 = vmatpush.msra.mxu0 0.0
      %729 = vmatpush.msra.mxu0 0.0
      %730 = vmatpush.msra.mxu0 0.0
      %731 = vmatpush.msra.mxu0 0.0
      %732 = vmatpush.msra.mxu0 0.0
      %733 = vmatpush.msra.mxu0 0.0
      %734 = vmatpush.msra.mxu0 0.0
      %735 = vmatpush.msra.mxu0 0.0
      %736 = vmatpush.msra.mxu0 0.0
      %737 = vmatpush.msra.mxu0 0.0
      %738 = vmatpush.msra.mxu0 0.0
      %739 = vmatpush.msra.mxu0 0.0
      %740 = vmatpush.msra.mxu0 0.0
      %741 = vmatpush.msra.mxu0 %v724
      %742 = vmatmul.f32.gmra.mxu0 %v579
      %v743 = vpop.f32.mrf.mxu0
      %v744 = vadd.f32 0.0, %v743
      %745 = vmatmul.f32.gmra.mxu0 %v582
      %v746 = vpop.f32.mrf.mxu0
      %v747 = vadd.f32 0.0, %v746
      %748 = vmatmul.f32.gmra.mxu0 %v585
      %v749 = vpop.f32.mrf.mxu0
      %v750 = vadd.f32 0.0, %v749
      %751 = vmatmul.f32.gmra.mxu0 %v588
      %v752 = vpop.f32.mrf.mxu0
      %v753 = vadd.f32 0.0, %v752
      %754 = vmatmul.f32.gmra.mxu0 %v591
      %v755 = vpop.f32.mrf.mxu0
      %v756 = vadd.f32 0.0, %v755
      %757 = vmatmul.f32.gmra.mxu0 %v594
      %v758 = vpop.f32.mrf.mxu0
      %v759 = vadd.f32 0.0, %v758
      %760 = vmatmul.f32.gmra.mxu0 %v597
      %v761 = vpop.f32.mrf.mxu0
      %v762 = vadd.f32 0.0, %v761
      %763 = vmatmul.f32.gmra.mxu0 %v600
      %v764 = vpop.f32.mrf.mxu0
      %v765 = vadd.f32 0.0, %v764
      %766 = vmatmul.f32.gmra.mxu0 %v603
      %v767 = vpop.f32.mrf.mxu0
      %v768 = vadd.f32 0.0, %v767
      %769 = vmatmul.f32.gmra.mxu0 %v606
      %v770 = vpop.f32.mrf.mxu0
      %v771 = vadd.f32 0.0, %v770
      %772 = vmatmul.f32.gmra.mxu0 %v609
      %v773 = vpop.f32.mrf.mxu0
      %v774 = vadd.f32 0.0, %v773
      %775 = vmatmul.f32.gmra.mxu0 %v612
      %v776 = vpop.f32.mrf.mxu0
      %v777 = vadd.f32 0.0, %v776
      %778 = vmatmul.f32.gmra.mxu0 %v615
      %v779 = vpop.f32.mrf.mxu0
      %v780 = vadd.f32 0.0, %v779
      %781 = vmatmul.f32.gmra.mxu0 %v618
      %v782 = vpop.f32.mrf.mxu0
      %v783 = vadd.f32 0.0, %v782
      %784 = vmatmul.f32.gmra.mxu0 %v621
      %v785 = vpop.f32.mrf.mxu0
      %v786 = vadd.f32 0.0, %v785
      %787 = vmatmul.f32.gmra.mxu0 %v624
      %v788 = vpop.f32.mrf.mxu0
      %v789 = vadd.f32 0.0, %v788
      %790 = vmatmul.f32.gmra.mxu0 %v627
      %v791 = vpop.f32.mrf.mxu0
      %v792 = vadd.f32 0.0, %v791
      %793 = vmatmul.f32.gmra.mxu0 %v630
      %v794 = vpop.f32.mrf.mxu0
      %v795 = vadd.f32 0.0, %v794
      %796 = vmatmul.f32.gmra.mxu0 %v633
      %v797 = vpop.f32.mrf.mxu0
      %v798 = vadd.f32 0.0, %v797
      %799 = vmatmul.f32.gmra.mxu0 %v636
      %v800 = vpop.f32.mrf.mxu0
      %v801 = vadd.f32 0.0, %v800
      %802 = vmatmul.f32.gmra.mxu0 %v639
      %v803 = vpop.f32.mrf.mxu0
      %v804 = vadd.f32 0.0, %v803
      %805 = vmatmul.f32.gmra.mxu0 %v642
      %v806 = vpop.f32.mrf.mxu0
      %v807 = vadd.f32 0.0, %v806
      %808 = vmatmul.f32.gmra.mxu0 %v645
      %v809 = vpop.f32.mrf.mxu0
      %v810 = vadd.f32 0.0, %v809
      %811 = vmatmul.f32.gmra.mxu0 %v648
      %v812 = vpop.f32.mrf.mxu0
      %v813 = vadd.f32 0.0, %v812
      %814 = vmatmul.f32.gmra.mxu0 %v651
      %v815 = vpop.f32.mrf.mxu0
      %v816 = vadd.f32 0.0, %v815
      %817 = vmatmul.f32.gmra.mxu0 %v654
      %v818 = vpop.f32.mrf.mxu0
      %v819 = vadd.f32 0.0, %v818
      %820 = vmatmul.f32.gmra.mxu0 %v657
      %v821 = vpop.f32.mrf.mxu0
      %v822 = vadd.f32 0.0, %v821
      %823 = vmatmul.f32.gmra.mxu0 %v660
      %v824 = vpop.f32.mrf.mxu0
      %v825 = vadd.f32 0.0, %v824
      %826 = vmatmul.f32.gmra.mxu0 %v663
      %v827 = vpop.f32.mrf.mxu0
      %v828 = vadd.f32 0.0, %v827
      %829 = vmatmul.f32.gmra.mxu0 %v666
      %v830 = vpop.f32.mrf.mxu0
      %v831 = vadd.f32 0.0, %v830
      %832 = vmatmul.f32.gmra.mxu0 %v669
      %v833 = vpop.f32.mrf.mxu0
      %v834 = vadd.f32 0.0, %v833
      %835 = vmatmul.f32.gmra.mxu0 %v672
      %v836 = vpop.f32.mrf.mxu0
      %v837 = vadd.f32 0.0, %v836
      %838 = vmatmul.f32.gmra.mxu0 %v675
      %v839 = vpop.f32.mrf.mxu0
      %v840 = vadd.f32 0.0, %v839
      %841 = vmatmul.f32.gmra.mxu0 %v678
      %v842 = vpop.f32.mrf.mxu0
      %v843 = vadd.f32 0.0, %v842
      %844 = vmatmul.f32.gmra.mxu0 %v681
      %v845 = vpop.f32.mrf.mxu0
      %v846 = vadd.f32 0.0, %v845
      %847 = vmatmul.f32.gmra.mxu0 %v684
      %v848 = vpop.f32.mrf.mxu0
      %v849 = vadd.f32 0.0, %v848
      %850 = vmatmul.f32.gmra.mxu0 %v687
      %v851 = vpop.f32.mrf.mxu0
      %v852 = vadd.f32 0.0, %v851
      %853 = vmatmul.f32.gmra.mxu0 %v690
      %v854 = vpop.f32.mrf.mxu0
      %v855 = vadd.f32 0.0, %v854
      %856 = vmatmul.f32.gmra.mxu0 %v693
      %v857 = vpop.f32.mrf.mxu0
      %v858 = vadd.f32 0.0, %v857
      %859 = vmatmul.f32.gmra.mxu0 %v696
      %v860 = vpop.f32.mrf.mxu0
      %v861 = vadd.f32 0.0, %v860
      %862 = vmatmul.f32.gmra.mxu0 %v699
      %v863 = vpop.f32.mrf.mxu0
      %v864 = vadd.f32 0.0, %v863
      %865 = vmatmul.f32.gmra.mxu0 %v702
      %v866 = vpop.f32.mrf.mxu0
      %v867 = vadd.f32 0.0, %v866
      %868 = vmatmul.f32.gmra.mxu0 %v705
      %v869 = vpop.f32.mrf.mxu0
      %v870 = vadd.f32 0.0, %v869
      %871 = vmatmul.f32.gmra.mxu0 %v708
      %v872 = vpop.f32.mrf.mxu0
      %v873 = vadd.f32 0.0, %v872
      %874 = vmatmul.f32.gmra.mxu0 %v711
      %v875 = vpop.f32.mrf.mxu0
      %v876 = vadd.f32 0.0, %v875
      %877 = vmatmul.f32.gmra.mxu0 %v714
      %v878 = vpop.f32.mrf.mxu0
      %v879 = vadd.f32 0.0, %v878
      %880 = vmatmul.f32.gmra.mxu0 %v717
      %v881 = vpop.f32.mrf.mxu0
      %v882 = vadd.f32 0.0, %v881
      %883 = vmatmul.f32.gmra.mxu0 %v720
      %v884 = vpop.f32.mrf.mxu0
      %v885 = vadd.f32 0.0, %v884
      %886 = vdwg.mxu0
      %v888 = vsel %vm446, %v479, 0
      %v891 = vsel %vm446, %v480, 0
      %v894 = vsel %vm446, %v481, 0
      %v897 = vsel %vm446, %v482, 0
      %v900 = vsel %vm446, %v483, 0
      %v903 = vsel %vm446, %v484, 0
      %v906 = vsel %vm446, %v485, 0
      %v909 = vsel %vm446, %v486, 0
      %v912 = vsel %vm446, %v487, 0
      %v915 = vsel %vm446, %v488, 0
      %v918 = vsel %vm446, %v489, 0
      %v921 = vsel %vm446, %v490, 0
      %v924 = vsel %vm446, %v491, 0
      %v927 = vsel %vm446, %v492, 0
      %v930 = vsel %vm446, %v493, 0
      %v933 = vsel %vm446, %v494, 0
      %v936 = vsel %vm446, %v495, 0
      %v939 = vsel %vm446, %v496, 0
      %v942 = vsel %vm446, %v497, 0
      %v945 = vsel %vm446, %v498, 0
      %v948 = vsel %vm446, %v499, 0
      %v951 = vsel %vm446, %v500, 0
      %v954 = vsel %vm446, %v501, 0
      %v957 = vsel %vm446, %v502, 0
      %v960 = vsel %vm446, %v503, 0
      %v963 = vsel %vm446, %v504, 0
      %v966 = vsel %vm446, %v505, 0
      %v969 = vsel %vm446, %v506, 0
      %v972 = vsel %vm446, %v507, 0
      %v975 = vsel %vm446, %v508, 0
      %v978 = vsel %vm446, %v509, 0
      %v981 = vsel %vm446, %v510, 0
      %v984 = vsel %vm446, %v511, 0
      %v987 = vsel %vm446, %v512, 0
      %v990 = vsel %vm446, %v513, 0
      %v993 = vsel %vm446, %v514, 0
      %v996 = vsel %vm446, %v515, 0
      %v999 = vsel %vm446, %v516, 0
      %v1002 = vsel %vm446, %v517, 0
      %v1005 = vsel %vm446, %v518, 0
      %v1008 = vsel %vm446, %v519, 0
      %v1011 = vsel %vm446, %v520, 0
      %v1014 = vsel %vm446, %v521, 0
      %v1017 = vsel %vm446, %v522, 0
      %v1020 = vsel %vm446, %v523, 0
      %v1023 = vsel %vm446, %v524, 0
      %v1026 = vsel %vm446, %v525, 0
      %v1029 = vsel %vm446, %v526, 0
      %v1032 = vsel %vm722, %v527, 0
      %1034 = vmatpush.msra.mxu0 0.0
      %1035 = vmatpush.msra.mxu0 0.0
      %1036 = vmatpush.msra.mxu0 0.0
      %1037 = vmatpush.msra.mxu0 0.0
      %1038 = vmatpush.msra.mxu0 0.0
      %1039 = vmatpush.msra.mxu0 0.0
      %1040 = vmatpush.msra.mxu0 0.0
      %1041 = vmatpush.msra.mxu0 0.0
      %1042 = vmatpush.msra.mxu0 0.0
      %1043 = vmatpush.msra.mxu0 0.0
      %1044 = vmatpush.msra.mxu0 0.0
      %1045 = vmatpush.msra.mxu0 0.0
      %1046 = vmatpush.msra.mxu0 0.0
      %1047 = vmatpush.msra.mxu0 0.0
      %1048 = vmatpush.msra.mxu0 0.0
      %1049 = vmatpush.msra.mxu0 %v1032
      %1050 = vmatmul.f32.gmra.mxu0 %v888
      %v1051 = vpop.f32.mrf.mxu0
      %v1052 = vadd.f32 %v744, %v1051
      %1053 = vmatmul.f32.gmra.mxu0 %v891
      %v1054 = vpop.f32.mrf.mxu0
      %v1055 = vadd.f32 %v747, %v1054
      %1056 = vmatmul.f32.gmra.mxu0 %v894
      %v1057 = vpop.f32.mrf.mxu0
      %v1058 = vadd.f32 %v750, %v1057
      %1059 = vmatmul.f32.gmra.mxu0 %v897
      %v1060 = vpop.f32.mrf.mxu0
      %v1061 = vadd.f32 %v753, %v1060
      %1062 = vmatmul.f32.gmra.mxu0 %v900
      %v1063 = vpop.f32.mrf.mxu0
      %v1064 = vadd.f32 %v756, %v1063
      %1065 = vmatmul.f32.gmra.mxu0 %v903
      %v1066 = vpop.f32.mrf.mxu0
      %v1067 = vadd.f32 %v759, %v1066
      %1068 = vmatmul.f32.gmra.mxu0 %v906
      %v1069 = vpop.f32.mrf.mxu0
      %v1070 = vadd.f32 %v762, %v1069
      %1071 = vmatmul.f32.gmra.mxu0 %v909
      %v1072 = vpop.f32.mrf.mxu0
      %v1073 = vadd.f32 %v765, %v1072
      %1074 = vmatmul.f32.gmra.mxu0 %v912
      %v1075 = vpop.f32.mrf.mxu0
      %v1076 = vadd.f32 %v768, %v1075
      %1077 = vmatmul.f32.gmra.mxu0 %v915
      %v1078 = vpop.f32.mrf.mxu0
      %v1079 = vadd.f32 %v771, %v1078
      %1080 = vmatmul.f32.gmra.mxu0 %v918
      %v1081 = vpop.f32.mrf.mxu0
      %v1082 = vadd.f32 %v774, %v1081
      %1083 = vmatmul.f32.gmra.mxu0 %v921
      %v1084 = vpop.f32.mrf.mxu0
      %v1085 = vadd.f32 %v777, %v1084
      %1086 = vmatmul.f32.gmra.mxu0 %v924
      %v1087 = vpop.f32.mrf.mxu0
      %v1088 = vadd.f32 %v780, %v1087
      %1089 = vmatmul.f32.gmra.mxu0 %v927
      %v1090 = vpop.f32.mrf.mxu0
      %v1091 = vadd.f32 %v783, %v1090
      %1092 = vmatmul.f32.gmra.mxu0 %v930
      %v1093 = vpop.f32.mrf.mxu0
      %v1094 = vadd.f32 %v786, %v1093
      %1095 = vmatmul.f32.gmra.mxu0 %v933
      %v1096 = vpop.f32.mrf.mxu0
      %v1097 = vadd.f32 %v789, %v1096
      %1098 = vmatmul.f32.gmra.mxu0 %v936
      %v1099 = vpop.f32.mrf.mxu0
      %v1100 = vadd.f32 %v792, %v1099
      %1101 = vmatmul.f32.gmra.mxu0 %v939
      %v1102 = vpop.f32.mrf.mxu0
      %v1103 = vadd.f32 %v795, %v1102
      %1104 = vmatmul.f32.gmra.mxu0 %v942
      %v1105 = vpop.f32.mrf.mxu0
      %v1106 = vadd.f32 %v798, %v1105
      %1107 = vmatmul.f32.gmra.mxu0 %v945
      %v1108 = vpop.f32.mrf.mxu0
      %v1109 = vadd.f32 %v801, %v1108
      %1110 = vmatmul.f32.gmra.mxu0 %v948
      %v1111 = vpop.f32.mrf.mxu0
      %v1112 = vadd.f32 %v804, %v1111
      %1113 = vmatmul.f32.gmra.mxu0 %v951
      %v1114 = vpop.f32.mrf.mxu0
      %v1115 = vadd.f32 %v807, %v1114
      %1116 = vmatmul.f32.gmra.mxu0 %v954
      %v1117 = vpop.f32.mrf.mxu0
      %v1118 = vadd.f32 %v810, %v1117
      %1119 = vmatmul.f32.gmra.mxu0 %v957
      %v1120 = vpop.f32.mrf.mxu0
      %v1121 = vadd.f32 %v813, %v1120
      %1122 = vmatmul.f32.gmra.mxu0 %v960
      %v1123 = vpop.f32.mrf.mxu0
      %v1124 = vadd.f32 %v816, %v1123
      %1125 = vmatmul.f32.gmra.mxu0 %v963
      %v1126 = vpop.f32.mrf.mxu0
      %v1127 = vadd.f32 %v819, %v1126
      %1128 = vmatmul.f32.gmra.mxu0 %v966
      %v1129 = vpop.f32.mrf.mxu0
      %v1130 = vadd.f32 %v822, %v1129
      %1131 = vmatmul.f32.gmra.mxu0 %v969
      %v1132 = vpop.f32.mrf.mxu0
      %v1133 = vadd.f32 %v825, %v1132
      %1134 = vmatmul.f32.gmra.mxu0 %v972
      %v1135 = vpop.f32.mrf.mxu0
      %v1136 = vadd.f32 %v828, %v1135
      %1137 = vmatmul.f32.gmra.mxu0 %v975
      %v1138 = vpop.f32.mrf.mxu0
      %v1139 = vadd.f32 %v831, %v1138
      %1140 = vmatmul.f32.gmra.mxu0 %v978
      %v1141 = vpop.f32.mrf.mxu0
      %v1142 = vadd.f32 %v834, %v1141
      %1143 = vmatmul.f32.gmra.mxu0 %v981
      %v1144 = vpop.f32.mrf.mxu0
      %v1145 = vadd.f32 %v837, %v1144
      %1146 = vmatmul.f32.gmra.mxu0 %v984
      %v1147 = vpop.f32.mrf.mxu0
      %v1148 = vadd.f32 %v840, %v1147
      %1149 = vmatmul.f32.gmra.mxu0 %v987
      %v1150 = vpop.f32.mrf.mxu0
      %v1151 = vadd.f32 %v843, %v1150
      %1152 = vmatmul.f32.gmra.mxu0 %v990
      %v1153 = vpop.f32.mrf.mxu0
      %v1154 = vadd.f32 %v846, %v1153
      %1155 = vmatmul.f32.gmra.mxu0 %v993
      %v1156 = vpop.f32.mrf.mxu0
      %v1157 = vadd.f32 %v849, %v1156
      %1158 = vmatmul.f32.gmra.mxu0 %v996
      %v1159 = vpop.f32.mrf.mxu0
      %v1160 = vadd.f32 %v852, %v1159
      %1161 = vmatmul.f32.gmra.mxu0 %v999
      %v1162 = vpop.f32.mrf.mxu0
      %v1163 = vadd.f32 %v855, %v1162
      %1164 = vmatmul.f32.gmra.mxu0 %v1002
      %v1165 = vpop.f32.mrf.mxu0
      %v1166 = vadd.f32 %v858, %v1165
      %1167 = vmatmul.f32.gmra.mxu0 %v1005
      %v1168 = vpop.f32.mrf.mxu0
      %v1169 = vadd.f32 %v861, %v1168
      %1170 = vmatmul.f32.gmra.mxu0 %v1008
      %v1171 = vpop.f32.mrf.mxu0
      %v1172 = vadd.f32 %v864, %v1171
      %1173 = vmatmul.f32.gmra.mxu0 %v1011
      %v1174 = vpop.f32.mrf.mxu0
      %v1175 = vadd.f32 %v867, %v1174
      %1176 = vmatmul.f32.gmra.mxu0 %v1014
      %v1177 = vpop.f32.mrf.mxu0
      %v1178 = vadd.f32 %v870, %v1177
      %1179 = vmatmul.f32.gmra.mxu0 %v1017
      %v1180 = vpop.f32.mrf.mxu0
      %v1181 = vadd.f32 %v873, %v1180
      %1182 = vmatmul.f32.gmra.mxu0 %v1020
      %v1183 = vpop.f32.mrf.mxu0
      %v1184 = vadd.f32 %v876, %v1183
      %1185 = vmatmul.f32.gmra.mxu0 %v1023
      %v1186 = vpop.f32.mrf.mxu0
      %v1187 = vadd.f32 %v879, %v1186
      %1188 = vmatmul.f32.gmra.mxu0 %v1026
      %v1189 = vpop.f32.mrf.mxu0
      %v1190 = vadd.f32 %v882, %v1189
      %1191 = vmatmul.f32.gmra.mxu0 %v1029
      %v1192 = vpop.f32.mrf.mxu0
      %v1193 = vadd.f32 %v885, %v1192
      %1194 = vdwg.mxu0
      %s1195 = scalar_lea.vmem [#allocation2], 48
      %v1196 = vld [vmem:[%s1195] sm:$0xff]
      %v1197 = vld [vmem:[%s1195 + $0x8] sm:$0xff]
      %v1198 = vld [vmem:[%s1195 + $0x10] sm:$0xff]
      %v1199 = vld [vmem:[%s1195 + $0x18] sm:$0xff]
      %v1200 = vld [vmem:[%s1195 + $0x20] sm:$0xff]
      %v1201 = vld [vmem:[%s1195 + $0x28] sm:$0xff]
      %v1202 = vld [vmem:[%s1195 + $0x30] sm:$0xff]
      %v1203 = vld [vmem:[%s1195 + $0x38] sm:$0xff]
      %v1204 = vld [vmem:[%s1195 + $0x40] sm:$0xff]
      %v1205 = vld [vmem:[%s1195 + $0x48] sm:$0xff]
      %v1206 = vld [vmem:[%s1195 + $0x50] sm:$0xff]
      %v1207 = vld [vmem:[%s1195 + $0x58] sm:$0xff]
      %v1208 = vld [vmem:[%s1195 + $0x60] sm:$0xff]
      %v1209 = vld [vmem:[%s1195 + $0x68] sm:$0xff]
      %v1210 = vld [vmem:[%s1195 + $0x70] sm:$0xff]
      %v1211 = vld [vmem:[%s1195 + $0x78] sm:$0xff]
      %v1212 = vld [vmem:[%s1195 + $0x80] sm:$0xff]
      %v1213 = vld [vmem:[%s1195 + $0x88] sm:$0xff]
      %v1214 = vld [vmem:[%s1195 + $0x90] sm:$0xff]
      %v1215 = vld [vmem:[%s1195 + $0x98] sm:$0xff]
      %v1216 = vld [vmem:[%s1195 + $0xa0] sm:$0xff]
      %v1217 = vld [vmem:[%s1195 + $0xa8] sm:$0xff]
      %v1218 = vld [vmem:[%s1195 + $0xb0] sm:$0xff]
      %v1219 = vld [vmem:[%s1195 + $0xb8] sm:$0xff]
      %v1220 = vld [vmem:[%s1195 + $0xc0] sm:$0xff]
      %v1221 = vld [vmem:[%s1195 + $0xc8] sm:$0xff]
      %v1222 = vld [vmem:[%s1195 + $0xd0] sm:$0xff]
      %v1223 = vld [vmem:[%s1195 + $0xd8] sm:$0xff]
      %v1224 = vld [vmem:[%s1195 + $0xe0] sm:$0xff]
      %v1225 = vld [vmem:[%s1195 + $0xe8] sm:$0xff]
      %v1226 = vld [vmem:[%s1195 + $0xf0] sm:$0xff]
      %v1227 = vld [vmem:[%s1195 + $0xf8] sm:$0xff]
      %v1228 = vld [vmem:[%s1195 + $0x100] sm:$0xff]
      %v1229 = vld [vmem:[%s1195 + $0x108] sm:$0xff]
      %v1230 = vld [vmem:[%s1195 + $0x110] sm:$0xff]
      %v1231 = vld [vmem:[%s1195 + $0x118] sm:$0xff]
      %v1232 = vld [vmem:[%s1195 + $0x120] sm:$0xff]
      %v1233 = vld [vmem:[%s1195 + $0x128] sm:$0xff]
      %v1234 = vld [vmem:[%s1195 + $0x130] sm:$0xff]
      %v1235 = vld [vmem:[%s1195 + $0x138] sm:$0xff]
      %v1236 = vld [vmem:[%s1195 + $0x140] sm:$0xff]
      %v1237 = vld [vmem:[%s1195 + $0x148] sm:$0xff]
      %v1238 = vld [vmem:[%s1195 + $0x150] sm:$0xff]
      %v1239 = vld [vmem:[%s1195 + $0x158] sm:$0xff]
      %v1240 = vld [vmem:[%s1195 + $0x160] sm:$0xff]
      %v1241 = vld [vmem:[%s1195 + $0x168] sm:$0xff]
      %v1242 = vld [vmem:[%s1195 + $0x170] sm:$0xff]
      %v1243 = vld [vmem:[%s1195 + $0x178] sm:$0xff]
      %s1244 = scalar_lea.vmem %s3, 8
      %v1245 = vld [vmem:[%s1244] sm:$0xf]
      %v1247 = vsel %vm446, %v1196, 0
      %v1250 = vsel %vm446, %v1197, 0
      %v1253 = vsel %vm446, %v1198, 0
      %v1256 = vsel %vm446, %v1199, 0
      %v1259 = vsel %vm446, %v1200, 0
      %v1262 = vsel %vm446, %v1201, 0
      %v1265 = vsel %vm446, %v1202, 0
      %v1268 = vsel %vm446, %v1203, 0
      %v1271 = vsel %vm446, %v1204, 0
      %v1274 = vsel %vm446, %v1205, 0
      %v1277 = vsel %vm446, %v1206, 0
      %v1280 = vsel %vm446, %v1207, 0
      %v1283 = vsel %vm446, %v1208, 0
      %v1286 = vsel %vm446, %v1209, 0
      %v1289 = vsel %vm446, %v1210, 0
      %v1292 = vsel %vm446, %v1211, 0
      %v1295 = vsel %vm446, %v1212, 0
      %v1298 = vsel %vm446, %v1213, 0
      %v1301 = vsel %vm446, %v1214, 0
      %v1304 = vsel %vm446, %v1215, 0
      %v1307 = vsel %vm446, %v1216, 0
      %v1310 = vsel %vm446, %v1217, 0
      %v1313 = vsel %vm446, %v1218, 0
      %v1316 = vsel %vm446, %v1219, 0
      %v1319 = vsel %vm446, %v1220, 0
      %v1322 = vsel %vm446, %v1221, 0
      %v1325 = vsel %vm446, %v1222, 0
      %v1328 = vsel %vm446, %v1223, 0
      %v1331 = vsel %vm446, %v1224, 0
      %v1334 = vsel %vm446, %v1225, 0
      %v1337 = vsel %vm446, %v1226, 0
      %v1340 = vsel %vm446, %v1227, 0
      %v1343 = vsel %vm446, %v1228, 0
      %v1346 = vsel %vm446, %v1229, 0
      %v1349 = vsel %vm446, %v1230, 0
      %v1352 = vsel %vm446, %v1231, 0
      %v1355 = vsel %vm446, %v1232, 0
      %v1358 = vsel %vm446, %v1233, 0
      %v1361 = vsel %vm446, %v1234, 0
      %v1364 = vsel %vm446, %v1235, 0
      %v1367 = vsel %vm446, %v1236, 0
      %v1370 = vsel %vm446, %v1237, 0
      %v1373 = vsel %vm446, %v1238, 0
      %v1376 = vsel %vm446, %v1239, 0
      %v1379 = vsel %vm446, %v1240, 0
      %v1382 = vsel %vm446, %v1241, 0
      %v1385 = vsel %vm446, %v1242, 0
      %v1388 = vsel %vm446, %v1243, 0
      %v1391 = vsel %vm722, %v1245, 0
      %1393 = vmatpush.msra.mxu0 0.0
      %1394 = vmatpush.msra.mxu0 0.0
      %1395 = vmatpush.msra.mxu0 0.0
      %1396 = vmatpush.msra.mxu0 0.0
      %1397 = vmatpush.msra.mxu0 0.0
      %1398 = vmatpush.msra.mxu0 0.0
      %1399 = vmatpush.msra.mxu0 0.0
      %1400 = vmatpush.msra.mxu0 0.0
      %1401 = vmatpush.msra.mxu0 0.0
      %1402 = vmatpush.msra.mxu0 0.0
      %1403 = vmatpush.msra.mxu0 0.0
      %1404 = vmatpush.msra.mxu0 0.0
      %1405 = vmatpush.msra.mxu0 0.0
      %1406 = vmatpush.msra.mxu0 0.0
      %1407 = vmatpush.msra.mxu0 0.0
      %1408 = vmatpush.msra.mxu0 %v1391
      %1409 = vmatmul.f32.gmra.mxu0 %v1247
      %v1410 = vpop.f32.mrf.mxu0
      %v1411 = vadd.f32 0.0, %v1410
      %1412 = vmatmul.f32.gmra.mxu0 %v1250
      %v1413 = vpop.f32.mrf.mxu0
      %v1414 = vadd.f32 0.0, %v1413
      %1415 = vmatmul.f32.gmra.mxu0 %v1253
      %v1416 = vpop.f32.mrf.mxu0
      %v1417 = vadd.f32 0.0, %v1416
      %1418 = vmatmul.f32.gmra.mxu0 %v1256
      %v1419 = vpop.f32.mrf.mxu0
      %v1420 = vadd.f32 0.0, %v1419
      %1421 = vmatmul.f32.gmra.mxu0 %v1259
      %v1422 = vpop.f32.mrf.mxu0
      %v1423 = vadd.f32 0.0, %v1422
      %1424 = vmatmul.f32.gmra.mxu0 %v1262
      %v1425 = vpop.f32.mrf.mxu0
      %v1426 = vadd.f32 0.0, %v1425
      %1427 = vmatmul.f32.gmra.mxu0 %v1265
      %v1428 = vpop.f32.mrf.mxu0
      %v1429 = vadd.f32 0.0, %v1428
      %1430 = vmatmul.f32.gmra.mxu0 %v1268
      %v1431 = vpop.f32.mrf.mxu0
      %v1432 = vadd.f32 0.0, %v1431
      %1433 = vmatmul.f32.gmra.mxu0 %v1271
      %v1434 = vpop.f32.mrf.mxu0
      %v1435 = vadd.f32 0.0, %v1434
      %1436 = vmatmul.f32.gmra.mxu0 %v1274
      %v1437 = vpop.f32.mrf.mxu0
      %v1438 = vadd.f32 0.0, %v1437
      %1439 = vmatmul.f32.gmra.mxu0 %v1277
      %v1440 = vpop.f32.mrf.mxu0
      %v1441 = vadd.f32 0.0, %v1440
      %1442 = vmatmul.f32.gmra.mxu0 %v1280
      %v1443 = vpop.f32.mrf.mxu0
      %v1444 = vadd.f32 0.0, %v1443
      %1445 = vmatmul.f32.gmra.mxu0 %v1283
      %v1446 = vpop.f32.mrf.mxu0
      %v1447 = vadd.f32 0.0, %v1446
      %1448 = vmatmul.f32.gmra.mxu0 %v1286
      %v1449 = vpop.f32.mrf.mxu0
      %v1450 = vadd.f32 0.0, %v1449
      %1451 = vmatmul.f32.gmra.mxu0 %v1289
      %v1452 = vpop.f32.mrf.mxu0
      %v1453 = vadd.f32 0.0, %v1452
      %1454 = vmatmul.f32.gmra.mxu0 %v1292
      %v1455 = vpop.f32.mrf.mxu0
      %v1456 = vadd.f32 0.0, %v1455
      %1457 = vmatmul.f32.gmra.mxu0 %v1295
      %v1458 = vpop.f32.mrf.mxu0
      %v1459 = vadd.f32 0.0, %v1458
      %1460 = vmatmul.f32.gmra.mxu0 %v1298
      %v1461 = vpop.f32.mrf.mxu0
      %v1462 = vadd.f32 0.0, %v1461
      %1463 = vmatmul.f32.gmra.mxu0 %v1301
      %v1464 = vpop.f32.mrf.mxu0
      %v1465 = vadd.f32 0.0, %v1464
      %1466 = vmatmul.f32.gmra.mxu0 %v1304
      %v1467 = vpop.f32.mrf.mxu0
      %v1468 = vadd.f32 0.0, %v1467
      %1469 = vmatmul.f32.gmra.mxu0 %v1307
      %v1470 = vpop.f32.mrf.mxu0
      %v1471 = vadd.f32 0.0, %v1470
      %1472 = vmatmul.f32.gmra.mxu0 %v1310
      %v1473 = vpop.f32.mrf.mxu0
      %v1474 = vadd.f32 0.0, %v1473
      %1475 = vmatmul.f32.gmra.mxu0 %v1313
      %v1476 = vpop.f32.mrf.mxu0
      %v1477 = vadd.f32 0.0, %v1476
      %1478 = vmatmul.f32.gmra.mxu0 %v1316
      %v1479 = vpop.f32.mrf.mxu0
      %v1480 = vadd.f32 0.0, %v1479
      %1481 = vmatmul.f32.gmra.mxu0 %v1319
      %v1482 = vpop.f32.mrf.mxu0
      %v1483 = vadd.f32 0.0, %v1482
      %1484 = vmatmul.f32.gmra.mxu0 %v1322
      %v1485 = vpop.f32.mrf.mxu0
      %v1486 = vadd.f32 0.0, %v1485
      %1487 = vmatmul.f32.gmra.mxu0 %v1325
      %v1488 = vpop.f32.mrf.mxu0
      %v1489 = vadd.f32 0.0, %v1488
      %1490 = vmatmul.f32.gmra.mxu0 %v1328
      %v1491 = vpop.f32.mrf.mxu0
      %v1492 = vadd.f32 0.0, %v1491
      %1493 = vmatmul.f32.gmra.mxu0 %v1331
      %v1494 = vpop.f32.mrf.mxu0
      %v1495 = vadd.f32 0.0, %v1494
      %1496 = vmatmul.f32.gmra.mxu0 %v1334
      %v1497 = vpop.f32.mrf.mxu0
      %v1498 = vadd.f32 0.0, %v1497
      %1499 = vmatmul.f32.gmra.mxu0 %v1337
      %v1500 = vpop.f32.mrf.mxu0
      %v1501 = vadd.f32 0.0, %v1500
      %1502 = vmatmul.f32.gmra.mxu0 %v1340
      %v1503 = vpop.f32.mrf.mxu0
      %v1504 = vadd.f32 0.0, %v1503
      %1505 = vmatmul.f32.gmra.mxu0 %v1343
      %v1506 = vpop.f32.mrf.mxu0
      %v1507 = vadd.f32 0.0, %v1506
      %1508 = vmatmul.f32.gmra.mxu0 %v1346
      %v1509 = vpop.f32.mrf.mxu0
      %v1510 = vadd.f32 0.0, %v1509
      %1511 = vmatmul.f32.gmra.mxu0 %v1349
      %v1512 = vpop.f32.mrf.mxu0
      %v1513 = vadd.f32 0.0, %v1512
      %1514 = vmatmul.f32.gmra.mxu0 %v1352
      %v1515 = vpop.f32.mrf.mxu0
      %v1516 = vadd.f32 0.0, %v1515
      %1517 = vmatmul.f32.gmra.mxu0 %v1355
      %v1518 = vpop.f32.mrf.mxu0
      %v1519 = vadd.f32 0.0, %v1518
      %1520 = vmatmul.f32.gmra.mxu0 %v1358
      %v1521 = vpop.f32.mrf.mxu0
      %v1522 = vadd.f32 0.0, %v1521
      %1523 = vmatmul.f32.gmra.mxu0 %v1361
      %v1524 = vpop.f32.mrf.mxu0
      %v1525 = vadd.f32 0.0, %v1524
      %1526 = vmatmul.f32.gmra.mxu0 %v1364
      %v1527 = vpop.f32.mrf.mxu0
      %v1528 = vadd.f32 0.0, %v1527
      %1529 = vmatmul.f32.gmra.mxu0 %v1367
      %v1530 = vpop.f32.mrf.mxu0
      %v1531 = vadd.f32 0.0, %v1530
      %1532 = vmatmul.f32.gmra.mxu0 %v1370
      %v1533 = vpop.f32.mrf.mxu0
      %v1534 = vadd.f32 0.0, %v1533
      %1535 = vmatmul.f32.gmra.mxu0 %v1373
      %v1536 = vpop.f32.mrf.mxu0
      %v1537 = vadd.f32 0.0, %v1536
      %1538 = vmatmul.f32.gmra.mxu0 %v1376
      %v1539 = vpop.f32.mrf.mxu0
      %v1540 = vadd.f32 0.0, %v1539
      %1541 = vmatmul.f32.gmra.mxu0 %v1379
      %v1542 = vpop.f32.mrf.mxu0
      %v1543 = vadd.f32 0.0, %v1542
      %1544 = vmatmul.f32.gmra.mxu0 %v1382
      %v1545 = vpop.f32.mrf.mxu0
      %v1546 = vadd.f32 0.0, %v1545
      %1547 = vmatmul.f32.gmra.mxu0 %v1385
      %v1548 = vpop.f32.mrf.mxu0
      %v1549 = vadd.f32 0.0, %v1548
      %1550 = vmatmul.f32.gmra.mxu0 %v1388
      %v1551 = vpop.f32.mrf.mxu0
      %v1552 = vadd.f32 0.0, %v1551
      %1553 = vdwg.mxu0
      %v1554 = vadd.f32 %v1052, %v1411
      %v1555 = vadd.f32 %v1055, %v1414
      %v1556 = vadd.f32 %v1058, %v1417
      %v1557 = vadd.f32 %v1061, %v1420
      %v1558 = vadd.f32 %v1064, %v1423
      %v1559 = vadd.f32 %v1067, %v1426
      %v1560 = vadd.f32 %v1070, %v1429
      %v1561 = vadd.f32 %v1073, %v1432
      %v1562 = vadd.f32 %v1076, %v1435
      %v1563 = vadd.f32 %v1079, %v1438
      %v1564 = vadd.f32 %v1082, %v1441
      %v1565 = vadd.f32 %v1085, %v1444
      %v1566 = vadd.f32 %v1088, %v1447
      %v1567 = vadd.f32 %v1091, %v1450
      %v1568 = vadd.f32 %v1094, %v1453
      %v1569 = vadd.f32 %v1097, %v1456
      %v1570 = vadd.f32 %v1100, %v1459
      %v1571 = vadd.f32 %v1103, %v1462
      %v1572 = vadd.f32 %v1106, %v1465
      %v1573 = vadd.f32 %v1109, %v1468
      %v1574 = vadd.f32 %v1112, %v1471
      %v1575 = vadd.f32 %v1115, %v1474
      %v1576 = vadd.f32 %v1118, %v1477
      %v1577 = vadd.f32 %v1121, %v1480
      %v1578 = vadd.f32 %v1124, %v1483
      %v1579 = vadd.f32 %v1127, %v1486
      %v1580 = vadd.f32 %v1130, %v1489
      %v1581 = vadd.f32 %v1133, %v1492
      %v1582 = vadd.f32 %v1136, %v1495
      %v1583 = vadd.f32 %v1139, %v1498
      %v1584 = vadd.f32 %v1142, %v1501
      %v1585 = vadd.f32 %v1145, %v1504
      %v1586 = vadd.f32 %v1148, %v1507
      %v1587 = vadd.f32 %v1151, %v1510
      %v1588 = vadd.f32 %v1154, %v1513
      %v1589 = vadd.f32 %v1157, %v1516
      %v1590 = vadd.f32 %v1160, %v1519
      %v1591 = vadd.f32 %v1163, %v1522
      %v1592 = vadd.f32 %v1166, %v1525
      %v1593 = vadd.f32 %v1169, %v1528
      %v1594 = vadd.f32 %v1172, %v1531
      %v1595 = vadd.f32 %v1175, %v1534
      %v1596 = vadd.f32 %v1178, %v1537
      %v1597 = vadd.f32 %v1181, %v1540
      %v1598 = vadd.f32 %v1184, %v1543
      %v1599 = vadd.f32 %v1187, %v1546
      %v1600 = vadd.f32 %v1190, %v1549
      %v1601 = vadd.f32 %v1193, %v1552
      %v1603 = vrot.slane %v1601, 7
      %vm1652 = vcmask 1040384
      %v1653 = vrot.slane %v1554, 7
      %v1654 = vrot.slane %v1555, 7
      %v1655 = vsel %vm1652, %v1653, %v1654
      %v1656 = vrot.slane %v1556, 7
      %v1657 = vrot.slane %v1557, 7
      %v1658 = vsel %vm1652, %v1656, %v1657
      %v1659 = vrot.slane %v1558, 7
      %v1660 = vsel %vm1652, %v1657, %v1659
      %v1661 = vrot.slane %v1559, 7
      %v1662 = vrot.slane %v1560, 7
      %v1663 = vsel %vm1652, %v1661, %v1662
      %v1664 = vrot.slane %v1561, 7
      %v1665 = vsel %vm1652, %v1662, %v1664
      %v1666 = vrot.slane %v1562, 7
      %v1667 = vrot.slane %v1563, 7
      %v1668 = vsel %vm1652, %v1666, %v1667
      %v1669 = vrot.slane %v1564, 7
      %v1670 = vsel %vm1652, %v1667, %v1669
      %v1671 = vrot.slane %v1565, 7
      %v1672 = vrot.slane %v1566, 7
      %v1673 = vsel %vm1652, %v1671, %v1672
      %v1674 = vrot.slane %v1567, 7
      %v1675 = vsel %vm1652, %v1672, %v1674
      %v1676 = vrot.slane %v1568, 7
      %v1677 = vrot.slane %v1569, 7
      %v1678 = vsel %vm1652, %v1676, %v1677
      %v1679 = vrot.slane %v1570, 7
      %v1680 = vsel %vm1652, %v1677, %v1679
      %v1681 = vrot.slane %v1571, 7
      %v1682 = vrot.slane %v1572, 7
      %v1683 = vsel %vm1652, %v1681, %v1682
      %v1684 = vrot.slane %v1573, 7
      %v1685 = vsel %vm1652, %v1682, %v1684
      %v1686 = vrot.slane %v1574, 7
      %v1687 = vrot.slane %v1575, 7
      %v1688 = vsel %vm1652, %v1686, %v1687
      %v1689 = vrot.slane %v1576, 7
      %v1690 = vsel %vm1652, %v1687, %v1689
      %v1691 = vrot.slane %v1577, 7
      %v1692 = vrot.slane %v1578, 7
      %v1693 = vsel %vm1652, %v1691, %v1692
      %v1694 = vrot.slane %v1579, 7
      %v1695 = vsel %vm1652, %v1692, %v1694
      %v1696 = vrot.slane %v1580, 7
      %v1697 = vrot.slane %v1581, 7
      %v1698 = vsel %vm1652, %v1696, %v1697
      %v1699 = vrot.slane %v1582, 7
      %v1700 = vsel %vm1652, %v1697, %v1699
      %v1701 = vrot.slane %v1583, 7
      %v1702 = vrot.slane %v1584, 7
      %v1703 = vsel %vm1652, %v1701, %v1702
      %v1704 = vrot.slane %v1585, 7
      %v1705 = vsel %vm1652, %v1702, %v1704
      %v1706 = vrot.slane %v1586, 7
      %v1707 = vrot.slane %v1587, 7
      %v1708 = vsel %vm1652, %v1706, %v1707
      %v1709 = vrot.slane %v1588, 7
      %v1710 = vsel %vm1652, %v1707, %v1709
      %v1711 = vrot.slane %v1589, 7
      %v1712 = vrot.slane %v1590, 7
      %v1713 = vsel %vm1652, %v1711, %v1712
      %v1714 = vrot.slane %v1591, 7
      %v1715 = vsel %vm1652, %v1712, %v1714
      %v1716 = vrot.slane %v1592, 7
      %v1717 = vrot.slane %v1593, 7
      %v1718 = vsel %vm1652, %v1716, %v1717
      %v1719 = vrot.slane %v1594, 7
      %v1720 = vsel %vm1652, %v1717, %v1719
      %v1721 = vrot.slane %v1595, 7
      %v1722 = vrot.slane %v1596, 7
      %v1723 = vsel %vm1652, %v1721, %v1722
      %v1724 = vrot.slane %v1597, 7
      %v1725 = vsel %vm1652, %v1722, %v1724
      %v1726 = vrot.slane %v1598, 7
      %v1727 = vrot.slane %v1599, 7
      %v1728 = vsel %vm1652, %v1726, %v1727
      %v1729 = vrot.slane %v1600, 7
      %v1730 = vsel %vm1652, %v1727, %v1729
      %v1732 = vsel %vm1652, %v1603, %v1653
      %1734 = vrot.lane.b32.xlu0 %v1732, 4
      %v1735 = vpop.permute.xlu0 %1734
      %1736 = vrot.lane.b32.xlu0 %v1655, 4
      %v1737 = vpop.permute.xlu0 %1736
      %1738 = vrot.lane.b32.xlu0 %v1658, 4
      %v1739 = vpop.permute.xlu0 %1738
      %1740 = vrot.lane.b32.xlu0 %v1660, 4
      %v1741 = vpop.permute.xlu0 %1740
      %1742 = vrot.lane.b32.xlu0 %v1663, 4
      %v1743 = vpop.permute.xlu0 %1742
      %1744 = vrot.lane.b32.xlu0 %v1665, 4
      %v1745 = vpop.permute.xlu0 %1744
      %1746 = vrot.lane.b32.xlu0 %v1668, 4
      %v1747 = vpop.permute.xlu0 %1746
      %1748 = vrot.lane.b32.xlu0 %v1670, 4
      %v1749 = vpop.permute.xlu0 %1748
      %1750 = vrot.lane.b32.xlu0 %v1673, 4
      %v1751 = vpop.permute.xlu0 %1750
      %1752 = vrot.lane.b32.xlu0 %v1675, 4
      %v1753 = vpop.permute.xlu0 %1752
      %1754 = vrot.lane.b32.xlu0 %v1678, 4
      %v1755 = vpop.permute.xlu0 %1754
      %1756 = vrot.lane.b32.xlu0 %v1680, 4
      %v1757 = vpop.permute.xlu0 %1756
      %1758 = vrot.lane.b32.xlu0 %v1683, 4
      %v1759 = vpop.permute.xlu0 %1758
      %1760 = vrot.lane.b32.xlu0 %v1685, 4
      %v1761 = vpop.permute.xlu0 %1760
      %1762 = vrot.lane.b32.xlu0 %v1688, 4
      %v1763 = vpop.permute.xlu0 %1762
      %1764 = vrot.lane.b32.xlu0 %v1690, 4
      %v1765 = vpop.permute.xlu0 %1764
      %1766 = vrot.lane.b32.xlu0 %v1693, 4
      %v1767 = vpop.permute.xlu0 %1766
      %1768 = vrot.lane.b32.xlu0 %v1695, 4
      %v1769 = vpop.permute.xlu0 %1768
      %1770 = vrot.lane.b32.xlu0 %v1698, 4
      %v1771 = vpop.permute.xlu0 %1770
      %1772 = vrot.lane.b32.xlu0 %v1700, 4
      %v1773 = vpop.permute.xlu0 %1772
      %1774 = vrot.lane.b32.xlu0 %v1703, 4
      %v1775 = vpop.permute.xlu0 %1774
      %1776 = vrot.lane.b32.xlu0 %v1705, 4
      %v1777 = vpop.permute.xlu0 %1776
      %1778 = vrot.lane.b32.xlu0 %v1708, 4
      %v1779 = vpop.permute.xlu0 %1778
      %1780 = vrot.lane.b32.xlu0 %v1710, 4
      %v1781 = vpop.permute.xlu0 %1780
      %1782 = vrot.lane.b32.xlu0 %v1713, 4
      %v1783 = vpop.permute.xlu0 %1782
      %1784 = vrot.lane.b32.xlu0 %v1715, 4
      %v1785 = vpop.permute.xlu0 %1784
      %1786 = vrot.lane.b32.xlu0 %v1718, 4
      %v1787 = vpop.permute.xlu0 %1786
      %1788 = vrot.lane.b32.xlu0 %v1720, 4
      %v1789 = vpop.permute.xlu0 %1788
      %1790 = vrot.lane.b32.xlu0 %v1723, 4
      %v1791 = vpop.permute.xlu0 %1790
      %1792 = vrot.lane.b32.xlu0 %v1725, 4
      %v1793 = vpop.permute.xlu0 %1792
      %1794 = vrot.lane.b32.xlu0 %v1728, 4
      %v1795 = vpop.permute.xlu0 %1794
      %1796 = vrot.lane.b32.xlu0 %v1730, 4
      %v1797 = vpop.permute.xlu0 %1796
      %v1830 = vadd.f32 %v1554, %v1735
      %v1831 = vadd.f32 %v1555, %v1737
      %v1832 = vadd.f32 %v1557, %v1739
      %v1833 = vadd.f32 %v1558, %v1741
      %v1834 = vadd.f32 %v1560, %v1743
      %v1835 = vadd.f32 %v1561, %v1745
      %v1836 = vadd.f32 %v1563, %v1747
      %v1837 = vadd.f32 %v1564, %v1749
      %v1838 = vadd.f32 %v1566, %v1751
      %v1839 = vadd.f32 %v1567, %v1753
      %v1840 = vadd.f32 %v1569, %v1755
      %v1841 = vadd.f32 %v1570, %v1757
      %v1842 = vadd.f32 %v1572, %v1759
      %v1843 = vadd.f32 %v1573, %v1761
      %v1844 = vadd.f32 %v1575, %v1763
      %v1845 = vadd.f32 %v1576, %v1765
      %v1846 = vadd.f32 %v1578, %v1767
      %v1847 = vadd.f32 %v1579, %v1769
      %v1848 = vadd.f32 %v1581, %v1771
      %v1849 = vadd.f32 %v1582, %v1773
      %v1850 = vadd.f32 %v1584, %v1775
      %v1851 = vadd.f32 %v1585, %v1777
      %v1852 = vadd.f32 %v1587, %v1779
      %v1853 = vadd.f32 %v1588, %v1781
      %v1854 = vadd.f32 %v1590, %v1783
      %v1855 = vadd.f32 %v1591, %v1785
      %v1856 = vadd.f32 %v1593, %v1787
      %v1857 = vadd.f32 %v1594, %v1789
      %v1858 = vadd.f32 %v1596, %v1791
      %v1859 = vadd.f32 %v1597, %v1793
      %v1860 = vadd.f32 %v1599, %v1795
      %v1861 = vadd.f32 %v1600, %v1797
      %vm1862 = vcmask 1046528
      %v1863 = vrot.slane %v1554, 1
      %v1864 = vrot.slane %v1555, 1
      %v1865 = vsel %vm1862, %v1863, %v1864
      %v1866 = vrot.slane %v1556, 1
      %v1867 = vsel %vm1862, %v1864, %v1866
      %v1868 = vrot.slane %v1557, 1
      %v1869 = vrot.slane %v1558, 1
      %v1870 = vsel %vm1862, %v1868, %v1869
      %v1871 = vrot.slane %v1559, 1
      %v1872 = vsel %vm1862, %v1869, %v1871
      %v1873 = vrot.slane %v1560, 1
      %v1874 = vrot.slane %v1561, 1
      %v1875 = vsel %vm1862, %v1873, %v1874
      %v1876 = vrot.slane %v1562, 1
      %v1877 = vsel %vm1862, %v1874, %v1876
      %v1878 = vrot.slane %v1563, 1
      %v1879 = vrot.slane %v1564, 1
      %v1880 = vsel %vm1862, %v1878, %v1879
      %v1881 = vrot.slane %v1565, 1
      %v1882 = vsel %vm1862, %v1879, %v1881
      %v1883 = vrot.slane %v1566, 1
      %v1884 = vrot.slane %v1567, 1
      %v1885 = vsel %vm1862, %v1883, %v1884
      %v1886 = vrot.slane %v1568, 1
      %v1887 = vsel %vm1862, %v1884, %v1886
      %v1888 = vrot.slane %v1569, 1
      %v1889 = vrot.slane %v1570, 1
      %v1890 = vsel %vm1862, %v1888, %v1889
      %v1891 = vrot.slane %v1571, 1
      %v1892 = vsel %vm1862, %v1889, %v1891
      %v1893 = vrot.slane %v1572, 1
      %v1894 = vrot.slane %v1573, 1
      %v1895 = vsel %vm1862, %v1893, %v1894
      %v1896 = vrot.slane %v1574, 1
      %v1897 = vsel %vm1862, %v1894, %v1896
      %v1898 = vrot.slane %v1575, 1
      %v1899 = vrot.slane %v1576, 1
      %v1900 = vsel %vm1862, %v1898, %v1899
      %v1901 = vrot.slane %v1577, 1
      %v1902 = vsel %vm1862, %v1899, %v1901
      %v1903 = vrot.slane %v1578, 1
      %v1904 = vrot.slane %v1579, 1
      %v1905 = vsel %vm1862, %v1903, %v1904
      %v1906 = vrot.slane %v1580, 1
      %v1907 = vsel %vm1862, %v1904, %v1906
      %v1908 = vrot.slane %v1581, 1
      %v1909 = vrot.slane %v1582, 1
      %v1910 = vsel %vm1862, %v1908, %v1909
      %v1911 = vrot.slane %v1583, 1
      %v1912 = vsel %vm1862, %v1909, %v1911
      %v1913 = vrot.slane %v1584, 1
      %v1914 = vrot.slane %v1585, 1
      %v1915 = vsel %vm1862, %v1913, %v1914
      %v1916 = vrot.slane %v1586, 1
      %v1917 = vsel %vm1862, %v1914, %v1916
      %v1918 = vrot.slane %v1587, 1
      %v1919 = vrot.slane %v1588, 1
      %v1920 = vsel %vm1862, %v1918, %v1919
      %v1921 = vrot.slane %v1589, 1
      %v1922 = vsel %vm1862, %v1919, %v1921
      %v1923 = vrot.slane %v1590, 1
      %v1924 = vrot.slane %v1591, 1
      %v1925 = vsel %vm1862, %v1923, %v1924
      %v1926 = vrot.slane %v1592, 1
      %v1927 = vsel %vm1862, %v1924, %v1926
      %v1928 = vrot.slane %v1593, 1
      %v1929 = vrot.slane %v1594, 1
      %v1930 = vsel %vm1862, %v1928, %v1929
      %v1931 = vrot.slane %v1595, 1
      %v1932 = vsel %vm1862, %v1929, %v1931
      %v1933 = vrot.slane %v1596, 1
      %v1934 = vrot.slane %v1597, 1
      %v1935 = vsel %vm1862, %v1933, %v1934
      %v1936 = vrot.slane %v1598, 1
      %v1937 = vsel %vm1862, %v1934, %v1936
      %v1938 = vrot.slane %v1599, 1
      %v1939 = vrot.slane %v1600, 1
      %v1940 = vsel %vm1862, %v1938, %v1939
      %v1941 = vrot.slane %v1601, 1
      %v1942 = vsel %vm1862, %v1939, %v1941
      %1943 = vrot.lane.b32.xlu0 %v1865, 124
      %v1944 = vpop.permute.xlu0 %1943
      %1945 = vrot.lane.b32.xlu0 %v1867, 124
      %v1946 = vpop.permute.xlu0 %1945
      %1947 = vrot.lane.b32.xlu0 %v1870, 124
      %v1948 = vpop.permute.xlu0 %1947
      %1949 = vrot.lane.b32.xlu0 %v1872, 124
      %v1950 = vpop.permute.xlu0 %1949
      %1951 = vrot.lane.b32.xlu0 %v1875, 124
      %v1952 = vpop.permute.xlu0 %1951
      %1953 = vrot.lane.b32.xlu0 %v1877, 124
      %v1954 = vpop.permute.xlu0 %1953
      %1955 = vrot.lane.b32.xlu0 %v1880, 124
      %v1956 = vpop.permute.xlu0 %1955
      %1957 = vrot.lane.b32.xlu0 %v1882, 124
      %v1958 = vpop.permute.xlu0 %1957
      %1959 = vrot.lane.b32.xlu0 %v1885, 124
      %v1960 = vpop.permute.xlu0 %1959
      %1961 = vrot.lane.b32.xlu0 %v1887, 124
      %v1962 = vpop.permute.xlu0 %1961
      %1963 = vrot.lane.b32.xlu0 %v1890, 124
      %v1964 = vpop.permute.xlu0 %1963
      %1965 = vrot.lane.b32.xlu0 %v1892, 124
      %v1966 = vpop.permute.xlu0 %1965
      %1967 = vrot.lane.b32.xlu0 %v1895, 124
      %v1968 = vpop.permute.xlu0 %1967
      %1969 = vrot.lane.b32.xlu0 %v1897, 124
      %v1970 = vpop.permute.xlu0 %1969
      %1971 = vrot.lane.b32.xlu0 %v1900, 124
      %v1972 = vpop.permute.xlu0 %1971
      %1973 = vrot.lane.b32.xlu0 %v1902, 124
      %v1974 = vpop.permute.xlu0 %1973
      %1975 = vrot.lane.b32.xlu0 %v1905, 124
      %v1976 = vpop.permute.xlu0 %1975
      %1977 = vrot.lane.b32.xlu0 %v1907, 124
      %v1978 = vpop.permute.xlu0 %1977
      %1979 = vrot.lane.b32.xlu0 %v1910, 124
      %v1980 = vpop.permute.xlu0 %1979
      %1981 = vrot.lane.b32.xlu0 %v1912, 124
      %v1982 = vpop.permute.xlu0 %1981
      %1983 = vrot.lane.b32.xlu0 %v1915, 124
      %v1984 = vpop.permute.xlu0 %1983
      %1985 = vrot.lane.b32.xlu0 %v1917, 124
      %v1986 = vpop.permute.xlu0 %1985
      %1987 = vrot.lane.b32.xlu0 %v1920, 124
      %v1988 = vpop.permute.xlu0 %1987
      %1989 = vrot.lane.b32.xlu0 %v1922, 124
      %v1990 = vpop.permute.xlu0 %1989
      %1991 = vrot.lane.b32.xlu0 %v1925, 124
      %v1992 = vpop.permute.xlu0 %1991
      %1993 = vrot.lane.b32.xlu0 %v1927, 124
      %v1994 = vpop.permute.xlu0 %1993
      %1995 = vrot.lane.b32.xlu0 %v1930, 124
      %v1996 = vpop.permute.xlu0 %1995
      %1997 = vrot.lane.b32.xlu0 %v1932, 124
      %v1998 = vpop.permute.xlu0 %1997
      %1999 = vrot.lane.b32.xlu0 %v1935, 124
      %v2000 = vpop.permute.xlu0 %1999
      %2001 = vrot.lane.b32.xlu0 %v1937, 124
      %v2002 = vpop.permute.xlu0 %2001
      %2003 = vrot.lane.b32.xlu0 %v1940, 124
      %v2004 = vpop.permute.xlu0 %2003
      %2005 = vrot.lane.b32.xlu0 %v1942, 124
      %v2006 = vpop.permute.xlu0 %2005
      %v2039 = vadd.f32 %v1830, %v1944
      %v2040 = vadd.f32 %v1831, %v1946
      %v2041 = vadd.f32 %v1832, %v1948
      %v2042 = vadd.f32 %v1833, %v1950
      %v2043 = vadd.f32 %v1834, %v1952
      %v2044 = vadd.f32 %v1835, %v1954
      %v2045 = vadd.f32 %v1836, %v1956
      %v2046 = vadd.f32 %v1837, %v1958
      %v2047 = vadd.f32 %v1838, %v1960
      %v2048 = vadd.f32 %v1839, %v1962
      %v2049 = vadd.f32 %v1840, %v1964
      %v2050 = vadd.f32 %v1841, %v1966
      %v2051 = vadd.f32 %v1842, %v1968
      %v2052 = vadd.f32 %v1843, %v1970
      %v2053 = vadd.f32 %v1844, %v1972
      %v2054 = vadd.f32 %v1845, %v1974
      %v2055 = vadd.f32 %v1846, %v1976
      %v2056 = vadd.f32 %v1847, %v1978
      %v2057 = vadd.f32 %v1848, %v1980
      %v2058 = vadd.f32 %v1849, %v1982
      %v2059 = vadd.f32 %v1850, %v1984
      %v2060 = vadd.f32 %v1851, %v1986
      %v2061 = vadd.f32 %v1852, %v1988
      %v2062 = vadd.f32 %v1853, %v1990
      %v2063 = vadd.f32 %v1854, %v1992
      %v2064 = vadd.f32 %v1855, %v1994
      %v2065 = vadd.f32 %v1856, %v1996
      %v2066 = vadd.f32 %v1857, %v1998
      %v2067 = vadd.f32 %v1858, %v2000
      %v2068 = vadd.f32 %v1859, %v2002
      %v2069 = vadd.f32 %v1860, %v2004
      %v2070 = vadd.f32 %v1861, %v2006
      %2103 = vrot.lane.b32.xlu0 %v2039, 124
      %v2104 = vpop.permute.xlu0 %2103
      %2105 = vrot.lane.b32.xlu0 %v2040, 124
      %v2106 = vpop.permute.xlu0 %2105
      %2107 = vrot.lane.b32.xlu0 %v2041, 124
      %v2108 = vpop.permute.xlu0 %2107
      %2109 = vrot.lane.b32.xlu0 %v2042, 124
      %v2110 = vpop.permute.xlu0 %2109
      %2111 = vrot.lane.b32.xlu0 %v2043, 124
      %v2112 = vpop.permute.xlu0 %2111
      %2113 = vrot.lane.b32.xlu0 %v2044, 124
      %v2114 = vpop.permute.xlu0 %2113
      %2115 = vrot.lane.b32.xlu0 %v2045, 124
      %v2116 = vpop.permute.xlu0 %2115
      %2117 = vrot.lane.b32.xlu0 %v2046, 124
      %v2118 = vpop.permute.xlu0 %2117
      %2119 = vrot.lane.b32.xlu0 %v2047, 124
      %v2120 = vpop.permute.xlu0 %2119
      %2121 = vrot.lane.b32.xlu0 %v2048, 124
      %v2122 = vpop.permute.xlu0 %2121
      %2123 = vrot.lane.b32.xlu0 %v2049, 124
      %v2124 = vpop.permute.xlu0 %2123
      %2125 = vrot.lane.b32.xlu0 %v2050, 124
      %v2126 = vpop.permute.xlu0 %2125
      %2127 = vrot.lane.b32.xlu0 %v2051, 124
      %v2128 = vpop.permute.xlu0 %2127
      %2129 = vrot.lane.b32.xlu0 %v2052, 124
      %v2130 = vpop.permute.xlu0 %2129
      %2131 = vrot.lane.b32.xlu0 %v2053, 124
      %v2132 = vpop.permute.xlu0 %2131
      %2133 = vrot.lane.b32.xlu0 %v2054, 124
      %v2134 = vpop.permute.xlu0 %2133
      %2135 = vrot.lane.b32.xlu0 %v2055, 124
      %v2136 = vpop.permute.xlu0 %2135
      %2137 = vrot.lane.b32.xlu0 %v2056, 124
      %v2138 = vpop.permute.xlu0 %2137
      %2139 = vrot.lane.b32.xlu0 %v2057, 124
      %v2140 = vpop.permute.xlu0 %2139
      %2141 = vrot.lane.b32.xlu0 %v2058, 124
      %v2142 = vpop.permute.xlu0 %2141
      %2143 = vrot.lane.b32.xlu0 %v2059, 124
      %v2144 = vpop.permute.xlu0 %2143
      %2145 = vrot.lane.b32.xlu0 %v2060, 124
      %v2146 = vpop.permute.xlu0 %2145
      %2147 = vrot.lane.b32.xlu0 %v2061, 124
      %v2148 = vpop.permute.xlu0 %2147
      %2149 = vrot.lane.b32.xlu0 %v2062, 124
      %v2150 = vpop.permute.xlu0 %2149
      %2151 = vrot.lane.b32.xlu0 %v2063, 124
      %v2152 = vpop.permute.xlu0 %2151
      %2153 = vrot.lane.b32.xlu0 %v2064, 124
      %v2154 = vpop.permute.xlu0 %2153
      %2155 = vrot.lane.b32.xlu0 %v2065, 124
      %v2156 = vpop.permute.xlu0 %2155
      %2157 = vrot.lane.b32.xlu0 %v2066, 124
      %v2158 = vpop.permute.xlu0 %2157
      %2159 = vrot.lane.b32.xlu0 %v2067, 124
      %v2160 = vpop.permute.xlu0 %2159
      %2161 = vrot.lane.b32.xlu0 %v2068, 124
      %v2162 = vpop.permute.xlu0 %2161
      %2163 = vrot.lane.b32.xlu0 %v2069, 124
      %v2164 = vpop.permute.xlu0 %2163
      %2165 = vrot.lane.b32.xlu0 %v2070, 124
      %v2166 = vpop.permute.xlu0 %2165
      %2199 = vst.msk [vmem:[%s246] sm:$0xff] %vm446, %v2104
      %2200 = vst.msk [vmem:[%s246 + $0x8] sm:$0xff] %vm446, %v2106
      %2201 = vst.msk [vmem:[%s246 + $0x10] sm:$0xff] %vm446, %v2108
      %2202 = vst.msk [vmem:[%s246 + $0x18] sm:$0xff] %vm446, %v2110
      %2203 = vst.msk [vmem:[%s246 + $0x20] sm:$0xff] %vm446, %v2112
      %2204 = vst.msk [vmem:[%s246 + $0x28] sm:$0xff] %vm446, %v2114
      %2205 = vst.msk [vmem:[%s246 + $0x30] sm:$0xff] %vm446, %v2116
      %2206 = vst.msk [vmem:[%s246 + $0x38] sm:$0xff] %vm446, %v2118
      %2207 = vst.msk [vmem:[%s246 + $0x40] sm:$0xff] %vm446, %v2120
      %2208 = vst.msk [vmem:[%s246 + $0x48] sm:$0xff] %vm446, %v2122
      %2209 = vst.msk [vmem:[%s246 + $0x50] sm:$0xff] %vm446, %v2124
      %2210 = vst.msk [vmem:[%s246 + $0x58] sm:$0xff] %vm446, %v2126
      %2211 = vst.msk [vmem:[%s246 + $0x60] sm:$0xff] %vm446, %v2128
      %2212 = vst.msk [vmem:[%s246 + $0x68] sm:$0xff] %vm446, %v2130
      %2213 = vst.msk [vmem:[%s246 + $0x70] sm:$0xff] %vm446, %v2132
      %2214 = vst.msk [vmem:[%s246 + $0x78] sm:$0xff] %vm446, %v2134
      %2215 = vst.msk [vmem:[%s246 + $0x80] sm:$0xff] %vm446, %v2136
      %2216 = vst.msk [vmem:[%s246 + $0x88] sm:$0xff] %vm446, %v2138
      %2217 = vst.msk [vmem:[%s246 + $0x90] sm:$0xff] %vm446, %v2140
      %2218 = vst.msk [vmem:[%s246 + $0x98] sm:$0xff] %vm446, %v2142
      %2219 = vst.msk [vmem:[%s246 + $0xa0] sm:$0xff] %vm446, %v2144
      %2220 = vst.msk [vmem:[%s246 + $0xa8] sm:$0xff] %vm446, %v2146
      %2221 = vst.msk [vmem:[%s246 + $0xb0] sm:$0xff] %vm446, %v2148
      %2222 = vst.msk [vmem:[%s246 + $0xb8] sm:$0xff] %vm446, %v2150
      %2223 = vst.msk [vmem:[%s246 + $0xc0] sm:$0xff] %vm446, %v2152
      %2224 = vst.msk [vmem:[%s246 + $0xc8] sm:$0xff] %vm446, %v2154
      %2225 = vst.msk [vmem:[%s246 + $0xd0] sm:$0xff] %vm446, %v2156
      %2226 = vst.msk [vmem:[%s246 + $0xd8] sm:$0xff] %vm446, %v2158
      %2227 = vst.msk [vmem:[%s246 + $0xe0] sm:$0xff] %vm446, %v2160
      %2228 = vst.msk [vmem:[%s246 + $0xe8] sm:$0xff] %vm446, %v2162
      %2229 = vst.msk [vmem:[%s246 + $0xf0] sm:$0xff] %vm446, %v2164
      %2230 = vst.msk [vmem:[%s246 + $0xf8] sm:$0xff] %vm446, %v2166
      %v2231 = vld [vmem:[%s5] sm:$0x1]
      %vm2232 = vcmask 64544
      %v2233 = vsel %vm2232, %v2039, 0.0
      %v2234 = vsel %vm2232, %v2041, 0.0
      %v2235 = vadd.f32 %v2233, %v2234
      %v2236 = vsel %vm2232, %v2043, 0.0
      %v2237 = vadd.f32 %v2235, %v2236
      %v2238 = vsel %vm2232, %v2045, 0.0
      %v2239 = vadd.f32 %v2237, %v2238
      %v2240 = vsel %vm2232, %v2047, 0.0
      %v2241 = vadd.f32 %v2239, %v2240
      %v2242 = vsel %vm2232, %v2049, 0.0
      %v2243 = vadd.f32 %v2241, %v2242
      %v2244 = vsel %vm2232, %v2051, 0.0
      %v2245 = vadd.f32 %v2243, %v2244
      %v2246 = vsel %vm2232, %v2053, 0.0
      %v2247 = vadd.f32 %v2245, %v2246
      %v2248 = vsel %vm2232, %v2055, 0.0
      %v2249 = vadd.f32 %v2247, %v2248
      %v2250 = vsel %vm2232, %v2057, 0.0
      %v2251 = vadd.f32 %v2249, %v2250
      %v2252 = vsel %vm2232, %v2059, 0.0
      %v2253 = vadd.f32 %v2251, %v2252
      %v2254 = vsel %vm2232, %v2061, 0.0
      %v2255 = vadd.f32 %v2253, %v2254
      %v2256 = vsel %vm2232, %v2063, 0.0
      %v2257 = vadd.f32 %v2255, %v2256
      %v2258 = vsel %vm2232, %v2065, 0.0
      %v2259 = vadd.f32 %v2257, %v2258
      %v2260 = vsel %vm2232, %v2067, 0.0
      %v2261 = vadd.f32 %v2259, %v2260
      %v2262 = vsel %vm2232, %v2069, 0.0
      %v2263 = vadd.f32 %v2261, %v2262
      %v2264 = vsel %vm2232, %v2040, 0.0
      %v2265 = vsel %vm2232, %v2042, 0.0
      %v2266 = vadd.f32 %v2264, %v2265
      %v2267 = vsel %vm2232, %v2044, 0.0
      %v2268 = vadd.f32 %v2266, %v2267
      %v2269 = vsel %vm2232, %v2046, 0.0
      %v2270 = vadd.f32 %v2268, %v2269
      %v2271 = vsel %vm2232, %v2048, 0.0
      %v2272 = vadd.f32 %v2270, %v2271
      %v2273 = vsel %vm2232, %v2050, 0.0
      %v2274 = vadd.f32 %v2272, %v2273
      %v2275 = vsel %vm2232, %v2052, 0.0
      %v2276 = vadd.f32 %v2274, %v2275
      %v2277 = vsel %vm2232, %v2054, 0.0
      %v2278 = vadd.f32 %v2276, %v2277
      %v2279 = vsel %vm2232, %v2056, 0.0
      %v2280 = vadd.f32 %v2278, %v2279
      %v2281 = vsel %vm2232, %v2058, 0.0
      %v2282 = vadd.f32 %v2280, %v2281
      %v2283 = vsel %vm2232, %v2060, 0.0
      %v2284 = vadd.f32 %v2282, %v2283
      %v2285 = vsel %vm2232, %v2062, 0.0
      %v2286 = vadd.f32 %v2284, %v2285
      %v2287 = vsel %vm2232, %v2064, 0.0
      %v2288 = vadd.f32 %v2286, %v2287
      %v2289 = vsel %vm2232, %v2066, 0.0
      %v2290 = vadd.f32 %v2288, %v2289
      %v2291 = vsel %vm2232, %v2068, 0.0
      %v2292 = vadd.f32 %v2290, %v2291
      %v2293 = vsel %vm2232, %v2070, 0.0
      %v2294 = vadd.f32 %v2292, %v2293
      %v2295 = vsel %vm2232, %v2263, 0.0
      %v2296 = vsel %vm2232, %v2294, 0.0
      %v2297 = vadd.f32 %v2295, %v2296
      %v2298 = vrot.slane %v2297, 4
      %v2299 = vadd.f32 %v2297, %v2298
      %v2300 = vrot.slane %v2299, 2
      %v2301 = vadd.f32 %v2299, %v2300
      %v2302 = vrot.slane %v2301, 1
      %v2303 = vadd.f32 %v2301, %v2302
      %2305 = vrot.lane.b32.xlu0 %v2303, 124
      %v2306 = vpop.permute.xlu0 %2305
      %v2308 = vadd.f32 %v2231, %v2306
      %vm2309 = vcmask 24576
      %2310 = vst.msk [vmem:[%s5] sm:$0x1] %vm2309, %v2308
      %v2311 = vld [vmem:[%s6] sm:$0x1]
      %v2312 = vmul.f32 %v2039, %v2039
      %v2313 = vmul.f32 %v2040, %v2040
      %v2314 = vmul.f32 %v2041, %v2041
      %v2315 = vmul.f32 %v2042, %v2042
      %v2316 = vmul.f32 %v2043, %v2043
      %v2317 = vmul.f32 %v2044, %v2044
      %v2318 = vmul.f32 %v2045, %v2045
      %v2319 = vmul.f32 %v2046, %v2046
      %v2320 = vmul.f32 %v2047, %v2047
      %v2321 = vmul.f32 %v2048, %v2048
      %v2322 = vmul.f32 %v2049, %v2049
      %v2323 = vmul.f32 %v2050, %v2050
      %v2324 = vmul.f32 %v2051, %v2051
      %v2325 = vmul.f32 %v2052, %v2052
      %v2326 = vmul.f32 %v2053, %v2053
      %v2327 = vmul.f32 %v2054, %v2054
      %v2328 = vmul.f32 %v2055, %v2055
      %v2329 = vmul.f32 %v2056, %v2056
      %v2330 = vmul.f32 %v2057, %v2057
      %v2331 = vmul.f32 %v2058, %v2058
      %v2332 = vmul.f32 %v2059, %v2059
      %v2333 = vmul.f32 %v2060, %v2060
      %v2334 = vmul.f32 %v2061, %v2061
      %v2335 = vmul.f32 %v2062, %v2062
      %v2336 = vmul.f32 %v2063, %v2063
      %v2337 = vmul.f32 %v2064, %v2064
      %v2338 = vmul.f32 %v2065, %v2065
      %v2339 = vmul.f32 %v2066, %v2066
      %v2340 = vmul.f32 %v2067, %v2067
      %v2341 = vmul.f32 %v2068, %v2068
      %v2342 = vmul.f32 %v2069, %v2069
      %v2343 = vmul.f32 %v2070, %v2070
      %v2344 = vsel %vm2232, %v2312, 0.0
      %v2345 = vsel %vm2232, %v2314, 0.0
      %v2346 = vadd.f32 %v2344, %v2345
      %v2347 = vsel %vm2232, %v2316, 0.0
      %v2348 = vadd.f32 %v2346, %v2347
      %v2349 = vsel %vm2232, %v2318, 0.0
      %v2350 = vadd.f32 %v2348, %v2349
      %v2351 = vsel %vm2232, %v2320, 0.0
      %v2352 = vadd.f32 %v2350, %v2351
      %v2353 = vsel %vm2232, %v2322, 0.0
      %v2354 = vadd.f32 %v2352, %v2353
      %v2355 = vsel %vm2232, %v2324, 0.0
      %v2356 = vadd.f32 %v2354, %v2355
      %v2357 = vsel %vm2232, %v2326, 0.0
      %v2358 = vadd.f32 %v2356, %v2357
      %v2359 = vsel %vm2232, %v2328, 0.0
      %v2360 = vadd.f32 %v2358, %v2359
      %v2361 = vsel %vm2232, %v2330, 0.0
      %v2362 = vadd.f32 %v2360, %v2361
      %v2363 = vsel %vm2232, %v2332, 0.0
      %v2364 = vadd.f32 %v2362, %v2363
      %v2365 = vsel %vm2232, %v2334, 0.0
      %v2366 = vadd.f32 %v2364, %v2365
      %v2367 = vsel %vm2232, %v2336, 0.0
      %v2368 = vadd.f32 %v2366, %v2367
      %v2369 = vsel %vm2232, %v2338, 0.0
      %v2370 = vadd.f32 %v2368, %v2369
      %v2371 = vsel %vm2232, %v2340, 0.0
      %v2372 = vadd.f32 %v2370, %v2371
      %v2373 = vsel %vm2232, %v2342, 0.0
      %v2374 = vadd.f32 %v2372, %v2373
      %v2375 = vsel %vm2232, %v2313, 0.0
      %v2376 = vsel %vm2232, %v2315, 0.0
      %v2377 = vadd.f32 %v2375, %v2376
      %v2378 = vsel %vm2232, %v2317, 0.0
      %v2379 = vadd.f32 %v2377, %v2378
      %v2380 = vsel %vm2232, %v2319, 0.0
      %v2381 = vadd.f32 %v2379, %v2380
      %v2382 = vsel %vm2232, %v2321, 0.0
      %v2383 = vadd.f32 %v2381, %v2382
      %v2384 = vsel %vm2232, %v2323, 0.0
      %v2385 = vadd.f32 %v2383, %v2384
      %v2386 = vsel %vm2232, %v2325, 0.0
      %v2387 = vadd.f32 %v2385, %v2386
      %v2388 = vsel %vm2232, %v2327, 0.0
      %v2389 = vadd.f32 %v2387, %v2388
      %v2390 = vsel %vm2232, %v2329, 0.0
      %v2391 = vadd.f32 %v2389, %v2390
      %v2392 = vsel %vm2232, %v2331, 0.0
      %v2393 = vadd.f32 %v2391, %v2392
      %v2394 = vsel %vm2232, %v2333, 0.0
      %v2395 = vadd.f32 %v2393, %v2394
      %v2396 = vsel %vm2232, %v2335, 0.0
      %v2397 = vadd.f32 %v2395, %v2396
      %v2398 = vsel %vm2232, %v2337, 0.0
      %v2399 = vadd.f32 %v2397, %v2398
      %v2400 = vsel %vm2232, %v2339, 0.0
      %v2401 = vadd.f32 %v2399, %v2400
      %v2402 = vsel %vm2232, %v2341, 0.0
      %v2403 = vadd.f32 %v2401, %v2402
      %v2404 = vsel %vm2232, %v2343, 0.0
      %v2405 = vadd.f32 %v2403, %v2404
      %v2406 = vsel %vm2232, %v2374, 0.0
      %v2407 = vsel %vm2232, %v2405, 0.0
      %v2408 = vadd.f32 %v2406, %v2407
      %v2409 = vrot.slane %v2408, 4
      %v2410 = vadd.f32 %v2408, %v2409
      %v2411 = vrot.slane %v2410, 2
      %v2412 = vadd.f32 %v2410, %v2411
      %v2413 = vrot.slane %v2412, 1
      %v2414 = vadd.f32 %v2412, %v2413
      %2416 = vrot.lane.b32.xlu0 %v2414, 124
      %v2417 = vpop.permute.xlu0 %2416
      %v2419 = vadd.f32 %v2311, %v2417
      %2420 = vst.msk [vmem:[%s6] sm:$0x1] %vm2309, %v2419
      %p2421 = scmp.lt.s32.totalorder %s18, 1
      %s2422 = scalar_select %p2421, %s18, 1
      %s2423 = smul.addr %s2422, 32
      %s2424 = smul.addr %s2423, 8
      %s2425 = scalar_lea.vmem %s4, %s2424
      // Predicated region
      $region41: #{block_forward.5} parent=35 // pred_check
        %p2426 = pneg %p125
      $region42: #{block_forward.5} parent=35 // pred_check_branch
        %2428 = sbr.rel (%p2426) target = $region44
      $region43: #{block_forward.5} parent=35 // pred_region
        _
      $region44: #{block_forward.5} parent=35 // pred_fallthru
        _
      // Predicated region
      $region45: #{block_forward.5} parent=35 // pred_check
        %p2429 = pneg %p146
      $region46: #{block_forward.5} parent=35 // pred_check_branch
        %2431 = sbr.rel (%p2429) target = $region48
      $region47: #{block_forward.5} parent=35 // pred_region
        _
      $region48: #{block_forward.5} parent=35 // pred_fallthru
        _
      // Predicated region
      $region49: #{block_forward.5} parent=35 // pred_check
        %p2432 = pneg %p167
      $region50: #{block_forward.5} parent=35 // pred_check_branch
        %2434 = sbr.rel (%p2432) target = $region52
      $region51: #{block_forward.5} parent=35 // pred_region
        _
      $region52: #{block_forward.5} parent=35 // pred_fallthru
        _
      // Predicated region
      $region53: #{block_forward.5} parent=35 // pred_check
        %p2435 = pneg %p146
      $region54: #{block_forward.5} parent=35 // pred_check_branch
        %2437 = sbr.rel (%p2435) target = $region56
      $region55: #{block_forward.5} parent=35 // pred_region
        _
      $region56: #{block_forward.5} parent=35 // pred_fallthru
        _
      // Predicated region
      $region57: #{block_forward.5} parent=35 // pred_check
        %p2438 = pneg %p167
      $region58: #{block_forward.5} parent=35 // pred_check_branch
        %2440 = sbr.rel (%p2438) target = $region60
      $region59: #{block_forward.5} parent=35 // pred_region
        _
      $region60: #{block_forward.5} parent=35 // pred_fallthru
        _
    $region36: #{block_forward.5} parent=5 // pred_fallthru
      _
    %p2441 = scmp.le.s32.totalorder 2, %s13
    // Predicated region
    $region61: #{block_forward.5} parent=5 // pred_check
      %p2442 = pneg %p2441
    $region62: #{block_forward.5} parent=5 // pred_check_branch
      %2444 = sbr.rel (%p2442) target = $region64
    $region63: #{block_forward.5} parent=5 // pred_region
      %s2445 = ssub.s32 %s13, 2
      // Predicated region
      $region65: #{block_forward.5} parent=63 // pred_check
        %p2446 = pneg %p131
      $region66: #{block_forward.5} parent=63 // pred_check_branch
        %2448 = sbr.rel (%p2446) target = $region68
      $region67: #{block_forward.5} parent=63 // pred_region
        %p2449 = scmp.lt.s32.totalorder %s19, 1
        %s2450 = scalar_select %p2449, %s19, 1
        %s2451 = smul.addr %s2450, 32
        %s2452 = smul.addr %s2451, 8
        %s2453 = scalar_lea.vmem %s4, %s2452
      $region68: #{block_forward.5} parent=63 // pred_fallthru
        _
    $region64: #{block_forward.5} parent=5 // pred_fallthru
      _
  $region6: #{block_forward.5} parent=0 // loop_footer
    %s17 = sadd.s32 1, %s13
  $region7: #{block_forward.5} parent=0 // loop_footer_branch
    %12 = sbr.rel target = $region3
  $region8: #{block_forward.5} parent=0 // loop_exit
    _

</llo_original>
